<compile_context>
chip_gen: v7x
topology: tpu7x:2x2x1
jax: 0.10.0
libtpu: 0.0.40
codegen_flags: <defaults>
</compile_context>

<pallas_src>
import math

import jax
import jax.numpy as jnp
from jax import lax
from jax.experimental import pallas as pl
from jax.experimental.pallas import tpu as pltpu

DIM_HEAD = 64
SCALE = DIM_HEAD ** (-0.5)
BN_EPS = 1e-5


# ---------------------------------------------------------------------------
# Fused kernel: attention + dwconv3x3 + ghost(1x1 conv, cheap dwconv3x3)
# per grid step: one batch element, all channels resident in VMEM.
# ---------------------------------------------------------------------------
def _mosa_fused_kernel(v_ref, dw_w_ref, dw_b_ref, pw_w_ref, pw_b_ref,
                       ch_w_ref, ch_b_ref, pr_ref, pc_ref, out_ref):
    C, H, W = v_ref.shape
    init_ch = pw_b_ref.shape[0]
    oup = out_ref.shape[0]

    v = v_ref[...].astype(jnp.float32)            # (C, H, W)
    pr = pr_ref[...].astype(jnp.float32)          # (H+2, H)  zero-pad rows
    pc = pc_ref[...].astype(jnp.float32)          # (W+2, W)  zero-pad cols

    def pad_hw(x):
        """Zero-pad last two dims by 1, in VMEM, via tiny padding-matrix matmuls."""
        nc = x.shape[0]
        prb = jnp.broadcast_to(pr, (nc, H + 2, H))
        pcb = jnp.broadcast_to(pc, (nc, W + 2, W))
        xp = lax.dot_general(prb, x, (((2,), (1,)), ((0,), (0,))),
                             preferred_element_type=jnp.float32)      # (nc, H+2, W)
        return lax.dot_general(xp, pcb, (((2,), (2,)), ((0,), (0,))),
                               preferred_element_type=jnp.float32)    # (nc, H+2, W+2)

    def dwconv3x3(x, w_ref):
        """Depthwise 3x3, stride 1, zero pad 1; weights w_ref: (nc, 1, 9), BN-folded."""
        nc = x.shape[0]
        xp = pad_hw(x)
        acc = jnp.zeros((nc, H, W), jnp.float32)
        for t in range(9):                         # unrolled: 9 vector FMAs over all channels
            di, dj = divmod(t, 3)
            acc = acc + xp[:, di:di + H, dj:dj + W] * w_ref[:, :, t:t + 1]
        return acc

    # ---- mobile self-attention: softmax((v v^T) * scale) v, batched over C ----
    s = lax.dot_general(v * SCALE, v, (((2,), (2,)), ((0,), (0,))),
                        preferred_element_type=jnp.float32)           # (C, H, H)
    s = s - jnp.max(s, axis=-1, keepdims=True)
    p = jnp.exp(s)
    p = p * pl.reciprocal(jnp.sum(p, axis=-1, keepdims=True), approx=True)
    attn = lax.dot_general(p, v, (((2,), (1,)), ((0,), (0,))),
                           preferred_element_type=jnp.float32)        # (C, H, W)

    # ---- + depthwise 3x3 conv of v (BN folded into weights/bias) ----
    stage1 = attn + dwconv3x3(v, dw_w_ref) + dw_b_ref[...]

    # ---- ghost primary 1x1 conv + BN + ReLU: C broadcast-FMAs (no tiny MXU call) ----
    acc1 = jnp.zeros((init_ch, H, W), jnp.float32)
    for cin in range(C):
        acc1 = acc1 + stage1[cin:cin + 1] * pw_w_ref[:, :, cin:cin + 1]
    x1 = jnp.maximum(acc1 + pw_b_ref[...], 0.0)

    # ---- ghost cheap depthwise 3x3 conv + BN + ReLU ----
    x2 = jnp.maximum(dwconv3x3(x1, ch_w_ref) + ch_b_ref[...], 0.0)

    # ---- concat([x1, x2], dim=1)[:, :oup] written directly at channel offsets ----
    out_ref[0:init_ch] = x1.astype(out_ref.dtype)
    out_ref[init_ch:oup] = x2[: oup - init_ch].astype(out_ref.dtype)


# ---------------------------------------------------------------------------
# Host-side glue
# ---------------------------------------------------------------------------
def _fold_bn(gamma, beta, mean, var):
    s = gamma / jnp.sqrt(var + BN_EPS)
    return s, beta - mean * s


def mosa_forward(v, params):
    N, C, H, W = v.shape
    init_ch = params["primary_w"].shape[0]
    oup = params["oup"]

    # Fold BNs into per-channel scale/bias; lay weights out so each tap / input
    # channel is a (channels, 1, 1) VMEM slice (single vector FMA per tap).
    s1, t1 = _fold_bn(params["dw_bn_gamma"], params["dw_bn_beta"],
                      params["dw_bn_mean"], params["dw_bn_var"])
    dw_w = (params["dw_w"] * s1[:, None, None]).reshape(C, 1, 9)
    dw_b = t1.reshape(C, 1, 1)

    s2, t2 = _fold_bn(params["primary_bn_gamma"], params["primary_bn_beta"],
                      params["primary_bn_mean"], params["primary_bn_var"])
    pw_w = (params["primary_w"] * s2[:, None]).reshape(init_ch, 1, C)
    pw_b = t2.reshape(init_ch, 1, 1)

    s3, t3 = _fold_bn(params["cheap_bn_gamma"], params["cheap_bn_beta"],
                      params["cheap_bn_mean"], params["cheap_bn_var"])
    ch_w = (params["cheap_w"] * s3[:, None, None]).reshape(init_ch, 1, 9)
    ch_b = t3.reshape(init_ch, 1, 1)

    # Constant matrices whose matmul zero-pads rows / cols by 1.
    pr = jnp.eye(H + 2, H, k=-1, dtype=jnp.float32)
    pc = jnp.eye(W + 2, W, k=-1, dtype=jnp.float32)

    def full(shape):
        return pl.BlockSpec(shape, lambda n, _s=shape: (0,) * len(_s))

    return pl.pallas_call(
        _mosa_fused_kernel,
        out_shape=jax.ShapeDtypeStruct((N, oup, H, W), v.dtype),
        grid_spec=pl.GridSpec(
            grid=(N,),
            in_specs=[
                pl.BlockSpec((None, C, H, W), lambda n: (n, 0, 0, 0)),   # v
                full((C, 1, 9)), full((C, 1, 1)),                        # dw conv w, b
                full((init_ch, 1, C)), full((init_ch, 1, 1)),            # 1x1 conv w, b
                full((init_ch, 1, 9)), full((init_ch, 1, 1)),            # cheap conv w, b
                full((H + 2, H)), full((W + 2, W)),                      # pad matrices
            ],
            out_specs=pl.BlockSpec((None, oup, H, W), lambda n: (n, 0, 0, 0)),
        ),
        compiler_params=pltpu.CompilerParams(
            dimension_semantics=("parallel",)),
    )(v, dw_w, dw_b, pw_w, pw_b, ch_w, ch_b, pr, pc)


# ---------------------------------------------------------------------------
# Pure-JAX reference (independent path: XLA convs / einsum / softmax)
# ---------------------------------------------------------------------------
def mosa_reference(v, params):
    def bn(x, g, b, m, var):
        return ((x - m[None, :, None, None]) /
                jnp.sqrt(var[None, :, None, None] + BN_EPS) *
                g[None, :, None, None] + b[None, :, None, None])

    C = v.shape[1]
    init_ch = params["primary_w"].shape[0]
    dn = ('NCHW', 'OIHW', 'NCHW')

    s = jnp.einsum('nchw,ncxw->nchx', v, v) * SCALE
    p = jax.nn.softmax(s, axis=-1)
    attn = jnp.einsum('nchx,ncxw->nchw', p, v)

    dw = lax.conv_general_dilated(
        v, params["dw_w"][:, None, :, :], window_strides=(1, 1),
        padding=((1, 1), (1, 1)), feature_group_count=C, dimension_numbers=dn)
    out = attn + bn(dw, params["dw_bn_gamma"], params["dw_bn_beta"],
                    params["dw_bn_mean"], params["dw_bn_var"])

    x1 = lax.conv_general_dilated(
        out, params["primary_w"][:, :, None, None], window_strides=(1, 1),
        padding='VALID', dimension_numbers=dn)
    x1 = jax.nn.relu(bn(x1, params["primary_bn_gamma"], params["primary_bn_beta"],
                        params["primary_bn_mean"], params["primary_bn_var"]))

    x2 = lax.conv_general_dilated(
        x1, params["cheap_w"][:, None, :, :], window_strides=(1, 1),
        padding=((1, 1), (1, 1)), feature_group_count=init_ch, dimension_numbers=dn)
    x2 = jax.nn.relu(bn(x2, params["cheap_bn_gamma"], params["cheap_bn_beta"],
                        params["cheap_bn_mean"], params["cheap_bn_var"]))

    return jnp.concatenate([x1, x2], axis=1)[:, :params["oup"]]


def init_params(key, inp, oup, ratio=2):
    init_ch = math.ceil(oup / ratio)
    new_ch = init_ch * (ratio - 1)
    assert new_ch == init_ch  # ratio == 2
    ks = jax.random.split(key, 16)
    f32 = jnp.float32

    def bn(k0, k1, k2, k3, n):
        return dict(
            gamma=1.0 + 0.1 * jax.random.normal(k0, (n,), f32),
            beta=0.1 * jax.random.normal(k1, (n,), f32),
            mean=0.05 * jax.random.normal(k2, (n,), f32),
            var=0.9 + 0.2 * jnp.abs(jax.random.normal(k3, (n,), f32)),
        )

    dw_bn = bn(ks[1], ks[2], ks[3], ks[4], inp)
    p_bn = bn(ks[6], ks[7], ks[8], ks[9], init_ch)
    c_bn = bn(ks[11], ks[12], ks[13], ks[14], new_ch)
    return {
        "oup": oup,
        # depthwise_conv(inp, inp): Conv2d(inp, inp, 3, 1, 1, groups=inp, bias=False) + BN
        "dw_w": 0.1 * jax.random.normal(ks[0], (inp, 3, 3), f32),
        "dw_bn_gamma": dw_bn["gamma"], "dw_bn_beta": dw_bn["beta"],
        "dw_bn_mean": dw_bn["mean"], "dw_bn_var": dw_bn["var"],
        # GhostModule primary: Conv2d(inp, init_ch, 1, bias=False) + BN + ReLU
        "primary_w": 0.1 * jax.random.normal(ks[5], (init_ch, inp), f32),
        "primary_bn_gamma": p_bn["gamma"], "primary_bn_beta": p_bn["beta"],
        "primary_bn_mean": p_bn["mean"], "primary_bn_var": p_bn["var"],
        # GhostModule cheap: Conv2d(init_ch, new_ch, 3, 1, 1, groups=init_ch, bias=False) + BN + ReLU
        "cheap_w": 0.1 * jax.random.normal(ks[10], (new_ch, 3, 3), f32),
        "cheap_bn_gamma": c_bn["gamma"], "cheap_bn_beta": c_bn["beta"],
        "cheap_bn_mean": c_bn["mean"], "cheap_bn_var": c_bn["var"],
    }


if __name__ == "__main__":
    key = jax.random.PRNGKey(0)
    k_params, k_v = jax.random.split(key)

    N, inp, oup, H, W = 2, 4, 8, 16, 16
    params = init_params(k_params, inp, oup)
    v = jax.random.normal(k_v, (N, inp, H, W), jnp.float32)

    out = jax.block_until_ready(mosa_forward(v, params))
    assert out.shape == (N, oup, H, W), out.shape
    assert jnp.all(jnp.isfinite(out))

    ref = jax.block_until_ready(mosa_reference(v, params))
    max_err = float(jnp.max(jnp.abs(out - ref)))
    assert jnp.allclose(out, ref, rtol=5e-2, atol=5e-2), max_err

    print("KERNEL_OK")
</pallas_src>

<mosaic_0001>
module attributes {stable_mosaic.version = 11 : i64} {
  func.func @_mosa_fused_kernel(%arg0: i32, %arg1: memref<1x4x16x16xf32, #tpu.memory_space<vmem>>, %arg2: memref<4x1x9xf32, #tpu.memory_space<vmem>>, %arg3: memref<4x1x1xf32, #tpu.memory_space<vmem>>, %arg4: memref<4x1x4xf32, #tpu.memory_space<vmem>>, %arg5: memref<4x1x1xf32, #tpu.memory_space<vmem>>, %arg6: memref<4x1x9xf32, #tpu.memory_space<vmem>>, %arg7: memref<4x1x1xf32, #tpu.memory_space<vmem>>, %arg8: memref<18x16xf32, #tpu.memory_space<vmem>>, %arg9: memref<18x16xf32, #tpu.memory_space<vmem>>, %arg10: memref<1x8x16x16xf32, #tpu.memory_space<vmem>>) attributes {dimension_semantics = [#tpu.dimension_semantics<parallel>], iteration_bounds = array<i64: 2>, scalar_prefetch = 0 : i64, scratch_operands = 0 : i64, tpu.core_type = #tpu.core_type<tc>, window_params = [{transform_indices = @transform_0, window_bounds = array<i64: 1, 4, 16, 16>}, {pipeline_mode = #tpu.pipeline_mode<synchronous>, transform_indices = @transform_1, window_bounds = array<i64: 4, 1, 9>}, {pipeline_mode = #tpu.pipeline_mode<synchronous>, transform_indices = @transform_2, window_bounds = array<i64: 4, 1, 1>}, {pipeline_mode = #tpu.pipeline_mode<synchronous>, transform_indices = @transform_3, window_bounds = array<i64: 4, 1, 4>}, {pipeline_mode = #tpu.pipeline_mode<synchronous>, transform_indices = @transform_4, window_bounds = array<i64: 4, 1, 1>}, {pipeline_mode = #tpu.pipeline_mode<synchronous>, transform_indices = @transform_5, window_bounds = array<i64: 4, 1, 9>}, {pipeline_mode = #tpu.pipeline_mode<synchronous>, transform_indices = @transform_6, window_bounds = array<i64: 4, 1, 1>}, {pipeline_mode = #tpu.pipeline_mode<synchronous>, transform_indices = @transform_7, window_bounds = array<i64: 18, 16>}, {pipeline_mode = #tpu.pipeline_mode<synchronous>, transform_indices = @transform_8, window_bounds = array<i64: 18, 16>}, {transform_indices = @transform_9, window_bounds = array<i64: 1, 8, 16, 16>}]} {
    %c0 = arith.constant 0 : index
    %c0_0 = arith.constant 0 : index
    %c0_1 = arith.constant 0 : index
    %c0_2 = arith.constant 0 : index
    %0 = vector.load %arg1[%c0, %c0_0, %c0_1, %c0_2] : memref<1x4x16x16xf32, #tpu.memory_space<vmem>>, vector<1x4x16x16xf32>
    %1 = vector.shape_cast %0 : vector<1x4x16x16xf32> to vector<4x16x16xf32>
    %c0_3 = arith.constant 0 : index
    %c0_4 = arith.constant 0 : index
    %2 = vector.load %arg8[%c0_3, %c0_4] : memref<18x16xf32, #tpu.memory_space<vmem>>, vector<18x16xf32>
    %c0_5 = arith.constant 0 : index
    %c0_6 = arith.constant 0 : index
    %3 = vector.load %arg9[%c0_5, %c0_6] : memref<18x16xf32, #tpu.memory_space<vmem>>, vector<18x16xf32>
    %cst = arith.constant 1.250000e-01 : f32
    %4 = vector.broadcast %cst : f32 to vector<4x16x16xf32>
    %5 = arith.mulf %1, %4 : vector<4x16x16xf32>
    %cst_7 = arith.constant dense<0.000000e+00> : vector<4x16x16xf32>
    %6 = tpu.matmul %5, %1, %cst_7 {dimension_numbers = #tpu.dot_dimension_numbers<[2], [2], [1], [1], [0, 0, 0, 1, 1, 1], [0], [0]>} : vector<4x16x16xf32>, vector<4x16x16xf32>, vector<4x16x16xf32> -> vector<4x16x16xf32>
    %cst_8 = arith.constant dense<0xFF800000> : vector<4x16xf32>
    %7 = vector.multi_reduction <maximumf>, %6, %cst_8 [2] : vector<4x16x16xf32> to vector<4x16xf32>
    %8 = vector.shape_cast %7 : vector<4x16xf32> to vector<4x16x1xf32>
    %9 = vector.broadcast %8 : vector<4x16x1xf32> to vector<4x16x16xf32>
    %10 = arith.subf %6, %9 : vector<4x16x16xf32>
    %11 = math.exp %10 : vector<4x16x16xf32>
    %cst_9 = arith.constant dense<0.000000e+00> : vector<4x16xf32>
    %12 = vector.multi_reduction <add>, %11, %cst_9 [2] : vector<4x16x16xf32> to vector<4x16xf32>
    %13 = vector.shape_cast %12 : vector<4x16xf32> to vector<4x16x1xf32>
    %14 = tpu.reciprocal %13 {approx = true} : vector<4x16x1xf32> -> vector<4x16x1xf32>
    %15 = vector.broadcast %14 : vector<4x16x1xf32> to vector<4x16x16xf32>
    %16 = arith.mulf %11, %15 : vector<4x16x16xf32>
    %cst_10 = arith.constant dense<0.000000e+00> : vector<4x16x16xf32>
    %17 = tpu.matmul %16, %1, %cst_10 {dimension_numbers = #tpu.dot_dimension_numbers<[2], [1], [1], [2], [0, 0, 0, 1, 1, 2], [0], [0]>} : vector<4x16x16xf32>, vector<4x16x16xf32>, vector<4x16x16xf32> -> vector<4x16x16xf32>
    %18 = vector.shape_cast %2 : vector<18x16xf32> to vector<1x18x16xf32>
    %19 = vector.broadcast %18 : vector<1x18x16xf32> to vector<4x18x16xf32>
    %20 = vector.shape_cast %3 : vector<18x16xf32> to vector<1x18x16xf32>
    %21 = vector.broadcast %20 : vector<1x18x16xf32> to vector<4x18x16xf32>
    %cst_11 = arith.constant dense<0.000000e+00> : vector<4x18x16xf32>
    %22 = tpu.matmul %19, %1, %cst_11 {dimension_numbers = #tpu.dot_dimension_numbers<[2], [1], [1], [2], [0, 0, 0, 1, 1, 2], [0], [0]>} : vector<4x18x16xf32>, vector<4x16x16xf32>, vector<4x18x16xf32> -> vector<4x18x16xf32>
    %cst_12 = arith.constant dense<0.000000e+00> : vector<4x18x18xf32>
    %23 = tpu.matmul %22, %21, %cst_12 {dimension_numbers = #tpu.dot_dimension_numbers<[2], [2], [1], [1], [0, 0, 0, 1, 1, 1], [0], [0]>} : vector<4x18x16xf32>, vector<4x18x16xf32>, vector<4x18x18xf32> -> vector<4x18x18xf32>
    %cst_13 = arith.constant 0.000000e+00 : f32
    %24 = vector.broadcast %cst_13 : f32 to vector<4x16x16xf32>
    %25 = vector.extract_strided_slice %23 {offsets = [0, 0, 0], sizes = [4, 16, 16], strides = [1, 1, 1]} : vector<4x18x18xf32> to vector<4x16x16xf32>
    %c0_14 = arith.constant 0 : index
    %c0_15 = arith.constant 0 : index
    %c0_16 = arith.constant 0 : index
    %26 = vector.load %arg2[%c0_14, %c0_15, %c0_16] : memref<4x1x9xf32, #tpu.memory_space<vmem>>, vector<4x1x1xf32>
    %27 = vector.broadcast %26 : vector<4x1x1xf32> to vector<4x16x16xf32>
    %28 = arith.mulf %25, %27 : vector<4x16x16xf32>
    %29 = arith.addf %24, %28 : vector<4x16x16xf32>
    %30 = vector.extract_strided_slice %23 {offsets = [0, 0, 1], sizes = [4, 16, 16], strides = [1, 1, 1]} : vector<4x18x18xf32> to vector<4x16x16xf32>
    %c0_17 = arith.constant 0 : index
    %c0_18 = arith.constant 0 : index
    %c1 = arith.constant 1 : index
    %31 = vector.load %arg2[%c0_17, %c0_18, %c1] : memref<4x1x9xf32, #tpu.memory_space<vmem>>, vector<4x1x1xf32>
    %32 = vector.broadcast %31 : vector<4x1x1xf32> to vector<4x16x16xf32>
    %33 = arith.mulf %30, %32 : vector<4x16x16xf32>
    %34 = arith.addf %29, %33 : vector<4x16x16xf32>
    %35 = vector.extract_strided_slice %23 {offsets = [0, 0, 2], sizes = [4, 16, 16], strides = [1, 1, 1]} : vector<4x18x18xf32> to vector<4x16x16xf32>
    %c0_19 = arith.constant 0 : index
    %c0_20 = arith.constant 0 : index
    %c2 = arith.constant 2 : index
    %36 = vector.load %arg2[%c0_19, %c0_20, %c2] : memref<4x1x9xf32, #tpu.memory_space<vmem>>, vector<4x1x1xf32>
    %37 = vector.broadcast %36 : vector<4x1x1xf32> to vector<4x16x16xf32>
    %38 = arith.mulf %35, %37 : vector<4x16x16xf32>
    %39 = arith.addf %34, %38 : vector<4x16x16xf32>
    %40 = vector.extract_strided_slice %23 {offsets = [0, 1, 0], sizes = [4, 16, 16], strides = [1, 1, 1]} : vector<4x18x18xf32> to vector<4x16x16xf32>
    %c0_21 = arith.constant 0 : index
    %c0_22 = arith.constant 0 : index
    %c3 = arith.constant 3 : index
    %41 = vector.load %arg2[%c0_21, %c0_22, %c3] : memref<4x1x9xf32, #tpu.memory_space<vmem>>, vector<4x1x1xf32>
    %42 = vector.broadcast %41 : vector<4x1x1xf32> to vector<4x16x16xf32>
    %43 = arith.mulf %40, %42 : vector<4x16x16xf32>
    %44 = arith.addf %39, %43 : vector<4x16x16xf32>
    %45 = vector.extract_strided_slice %23 {offsets = [0, 1, 1], sizes = [4, 16, 16], strides = [1, 1, 1]} : vector<4x18x18xf32> to vector<4x16x16xf32>
    %c0_23 = arith.constant 0 : index
    %c0_24 = arith.constant 0 : index
    %c4 = arith.constant 4 : index
    %46 = vector.load %arg2[%c0_23, %c0_24, %c4] : memref<4x1x9xf32, #tpu.memory_space<vmem>>, vector<4x1x1xf32>
    %47 = vector.broadcast %46 : vector<4x1x1xf32> to vector<4x16x16xf32>
    %48 = arith.mulf %45, %47 : vector<4x16x16xf32>
    %49 = arith.addf %44, %48 : vector<4x16x16xf32>
    %50 = vector.extract_strided_slice %23 {offsets = [0, 1, 2], sizes = [4, 16, 16], strides = [1, 1, 1]} : vector<4x18x18xf32> to vector<4x16x16xf32>
    %c0_25 = arith.constant 0 : index
    %c0_26 = arith.constant 0 : index
    %c5 = arith.constant 5 : index
    %51 = vector.load %arg2[%c0_25, %c0_26, %c5] : memref<4x1x9xf32, #tpu.memory_space<vmem>>, vector<4x1x1xf32>
    %52 = vector.broadcast %51 : vector<4x1x1xf32> to vector<4x16x16xf32>
    %53 = arith.mulf %50, %52 : vector<4x16x16xf32>
    %54 = arith.addf %49, %53 : vector<4x16x16xf32>
    %55 = vector.extract_strided_slice %23 {offsets = [0, 2, 0], sizes = [4, 16, 16], strides = [1, 1, 1]} : vector<4x18x18xf32> to vector<4x16x16xf32>
    %c0_27 = arith.constant 0 : index
    %c0_28 = arith.constant 0 : index
    %c6 = arith.constant 6 : index
    %56 = vector.load %arg2[%c0_27, %c0_28, %c6] : memref<4x1x9xf32, #tpu.memory_space<vmem>>, vector<4x1x1xf32>
    %57 = vector.broadcast %56 : vector<4x1x1xf32> to vector<4x16x16xf32>
    %58 = arith.mulf %55, %57 : vector<4x16x16xf32>
    %59 = arith.addf %54, %58 : vector<4x16x16xf32>
    %60 = vector.extract_strided_slice %23 {offsets = [0, 2, 1], sizes = [4, 16, 16], strides = [1, 1, 1]} : vector<4x18x18xf32> to vector<4x16x16xf32>
    %c0_29 = arith.constant 0 : index
    %c0_30 = arith.constant 0 : index
    %c7 = arith.constant 7 : index
    %61 = vector.load %arg2[%c0_29, %c0_30, %c7] : memref<4x1x9xf32, #tpu.memory_space<vmem>>, vector<4x1x1xf32>
    %62 = vector.broadcast %61 : vector<4x1x1xf32> to vector<4x16x16xf32>
    %63 = arith.mulf %60, %62 : vector<4x16x16xf32>
    %64 = arith.addf %59, %63 : vector<4x16x16xf32>
    %65 = vector.extract_strided_slice %23 {offsets = [0, 2, 2], sizes = [4, 16, 16], strides = [1, 1, 1]} : vector<4x18x18xf32> to vector<4x16x16xf32>
    %c0_31 = arith.constant 0 : index
    %c0_32 = arith.constant 0 : index
    %c8 = arith.constant 8 : index
    %66 = vector.load %arg2[%c0_31, %c0_32, %c8] : memref<4x1x9xf32, #tpu.memory_space<vmem>>, vector<4x1x1xf32>
    %67 = vector.broadcast %66 : vector<4x1x1xf32> to vector<4x16x16xf32>
    %68 = arith.mulf %65, %67 : vector<4x16x16xf32>
    %69 = arith.addf %64, %68 : vector<4x16x16xf32>
    %70 = arith.addf %17, %69 : vector<4x16x16xf32>
    %c0_33 = arith.constant 0 : index
    %c0_34 = arith.constant 0 : index
    %c0_35 = arith.constant 0 : index
    %71 = vector.load %arg3[%c0_33, %c0_34, %c0_35] : memref<4x1x1xf32, #tpu.memory_space<vmem>>, vector<4x1x1xf32>
    %72 = vector.broadcast %71 : vector<4x1x1xf32> to vector<4x16x16xf32>
    %73 = arith.addf %70, %72 : vector<4x16x16xf32>
    %cst_36 = arith.constant 0.000000e+00 : f32
    %74 = vector.broadcast %cst_36 : f32 to vector<4x16x16xf32>
    %75 = vector.extract_strided_slice %73 {offsets = [0, 0, 0], sizes = [1, 16, 16], strides = [1, 1, 1]} : vector<4x16x16xf32> to vector<1x16x16xf32>
    %c0_37 = arith.constant 0 : index
    %c0_38 = arith.constant 0 : index
    %c0_39 = arith.constant 0 : index
    %76 = vector.load %arg4[%c0_37, %c0_38, %c0_39] : memref<4x1x4xf32, #tpu.memory_space<vmem>>, vector<4x1x1xf32>
    %77 = vector.broadcast %75 : vector<1x16x16xf32> to vector<4x16x16xf32>
    %78 = vector.broadcast %76 : vector<4x1x1xf32> to vector<4x16x16xf32>
    %79 = arith.mulf %77, %78 : vector<4x16x16xf32>
    %80 = arith.addf %74, %79 : vector<4x16x16xf32>
    %81 = vector.extract_strided_slice %73 {offsets = [1, 0, 0], sizes = [1, 16, 16], strides = [1, 1, 1]} : vector<4x16x16xf32> to vector<1x16x16xf32>
    %c0_40 = arith.constant 0 : index
    %c0_41 = arith.constant 0 : index
    %c1_42 = arith.constant 1 : index
    %82 = vector.load %arg4[%c0_40, %c0_41, %c1_42] : memref<4x1x4xf32, #tpu.memory_space<vmem>>, vector<4x1x1xf32>
    %83 = vector.broadcast %81 : vector<1x16x16xf32> to vector<4x16x16xf32>
    %84 = vector.broadcast %82 : vector<4x1x1xf32> to vector<4x16x16xf32>
    %85 = arith.mulf %83, %84 : vector<4x16x16xf32>
    %86 = arith.addf %80, %85 : vector<4x16x16xf32>
    %87 = vector.extract_strided_slice %73 {offsets = [2, 0, 0], sizes = [1, 16, 16], strides = [1, 1, 1]} : vector<4x16x16xf32> to vector<1x16x16xf32>
    %c0_43 = arith.constant 0 : index
    %c0_44 = arith.constant 0 : index
    %c2_45 = arith.constant 2 : index
    %88 = vector.load %arg4[%c0_43, %c0_44, %c2_45] : memref<4x1x4xf32, #tpu.memory_space<vmem>>, vector<4x1x1xf32>
    %89 = vector.broadcast %87 : vector<1x16x16xf32> to vector<4x16x16xf32>
    %90 = vector.broadcast %88 : vector<4x1x1xf32> to vector<4x16x16xf32>
    %91 = arith.mulf %89, %90 : vector<4x16x16xf32>
    %92 = arith.addf %86, %91 : vector<4x16x16xf32>
    %93 = vector.extract_strided_slice %73 {offsets = [3, 0, 0], sizes = [1, 16, 16], strides = [1, 1, 1]} : vector<4x16x16xf32> to vector<1x16x16xf32>
    %c0_46 = arith.constant 0 : index
    %c0_47 = arith.constant 0 : index
    %c3_48 = arith.constant 3 : index
    %94 = vector.load %arg4[%c0_46, %c0_47, %c3_48] : memref<4x1x4xf32, #tpu.memory_space<vmem>>, vector<4x1x1xf32>
    %95 = vector.broadcast %93 : vector<1x16x16xf32> to vector<4x16x16xf32>
    %96 = vector.broadcast %94 : vector<4x1x1xf32> to vector<4x16x16xf32>
    %97 = arith.mulf %95, %96 : vector<4x16x16xf32>
    %98 = arith.addf %92, %97 : vector<4x16x16xf32>
    %c0_49 = arith.constant 0 : index
    %c0_50 = arith.constant 0 : index
    %c0_51 = arith.constant 0 : index
    %99 = vector.load %arg5[%c0_49, %c0_50, %c0_51] : memref<4x1x1xf32, #tpu.memory_space<vmem>>, vector<4x1x1xf32>
    %100 = vector.broadcast %99 : vector<4x1x1xf32> to vector<4x16x16xf32>
    %101 = arith.addf %98, %100 : vector<4x16x16xf32>
    %cst_52 = arith.constant 0.000000e+00 : f32
    %102 = vector.broadcast %cst_52 : f32 to vector<4x16x16xf32>
    %103 = arith.maximumf %101, %102 : vector<4x16x16xf32>
    %104 = vector.shape_cast %2 : vector<18x16xf32> to vector<1x18x16xf32>
    %105 = vector.broadcast %104 : vector<1x18x16xf32> to vector<4x18x16xf32>
    %106 = vector.shape_cast %3 : vector<18x16xf32> to vector<1x18x16xf32>
    %107 = vector.broadcast %106 : vector<1x18x16xf32> to vector<4x18x16xf32>
    %cst_53 = arith.constant dense<0.000000e+00> : vector<4x18x16xf32>
    %108 = tpu.matmul %105, %103, %cst_53 {dimension_numbers = #tpu.dot_dimension_numbers<[2], [1], [1], [2], [0, 0, 0, 1, 1, 2], [0], [0]>} : vector<4x18x16xf32>, vector<4x16x16xf32>, vector<4x18x16xf32> -> vector<4x18x16xf32>
    %cst_54 = arith.constant dense<0.000000e+00> : vector<4x18x18xf32>
    %109 = tpu.matmul %108, %107, %cst_54 {dimension_numbers = #tpu.dot_dimension_numbers<[2], [2], [1], [1], [0, 0, 0, 1, 1, 1], [0], [0]>} : vector<4x18x16xf32>, vector<4x18x16xf32>, vector<4x18x18xf32> -> vector<4x18x18xf32>
    %cst_55 = arith.constant 0.000000e+00 : f32
    %110 = vector.broadcast %cst_55 : f32 to vector<4x16x16xf32>
    %111 = vector.extract_strided_slice %109 {offsets = [0, 0, 0], sizes = [4, 16, 16], strides = [1, 1, 1]} : vector<4x18x18xf32> to vector<4x16x16xf32>
    %c0_56 = arith.constant 0 : index
    %c0_57 = arith.constant 0 : index
    %c0_58 = arith.constant 0 : index
    %112 = vector.load %arg6[%c0_56, %c0_57, %c0_58] : memref<4x1x9xf32, #tpu.memory_space<vmem>>, vector<4x1x1xf32>
    %113 = vector.broadcast %112 : vector<4x1x1xf32> to vector<4x16x16xf32>
    %114 = arith.mulf %111, %113 : vector<4x16x16xf32>
    %115 = arith.addf %110, %114 : vector<4x16x16xf32>
    %116 = vector.extract_strided_slice %109 {offsets = [0, 0, 1], sizes = [4, 16, 16], strides = [1, 1, 1]} : vector<4x18x18xf32> to vector<4x16x16xf32>
    %c0_59 = arith.constant 0 : index
    %c0_60 = arith.constant 0 : index
    %c1_61 = arith.constant 1 : index
    %117 = vector.load %arg6[%c0_59, %c0_60, %c1_61] : memref<4x1x9xf32, #tpu.memory_space<vmem>>, vector<4x1x1xf32>
    %118 = vector.broadcast %117 : vector<4x1x1xf32> to vector<4x16x16xf32>
    %119 = arith.mulf %116, %118 : vector<4x16x16xf32>
    %120 = arith.addf %115, %119 : vector<4x16x16xf32>
    %121 = vector.extract_strided_slice %109 {offsets = [0, 0, 2], sizes = [4, 16, 16], strides = [1, 1, 1]} : vector<4x18x18xf32> to vector<4x16x16xf32>
    %c0_62 = arith.constant 0 : index
    %c0_63 = arith.constant 0 : index
    %c2_64 = arith.constant 2 : index
    %122 = vector.load %arg6[%c0_62, %c0_63, %c2_64] : memref<4x1x9xf32, #tpu.memory_space<vmem>>, vector<4x1x1xf32>
    %123 = vector.broadcast %122 : vector<4x1x1xf32> to vector<4x16x16xf32>
    %124 = arith.mulf %121, %123 : vector<4x16x16xf32>
    %125 = arith.addf %120, %124 : vector<4x16x16xf32>
    %126 = vector.extract_strided_slice %109 {offsets = [0, 1, 0], sizes = [4, 16, 16], strides = [1, 1, 1]} : vector<4x18x18xf32> to vector<4x16x16xf32>
    %c0_65 = arith.constant 0 : index
    %c0_66 = arith.constant 0 : index
    %c3_67 = arith.constant 3 : index
    %127 = vector.load %arg6[%c0_65, %c0_66, %c3_67] : memref<4x1x9xf32, #tpu.memory_space<vmem>>, vector<4x1x1xf32>
    %128 = vector.broadcast %127 : vector<4x1x1xf32> to vector<4x16x16xf32>
    %129 = arith.mulf %126, %128 : vector<4x16x16xf32>
    %130 = arith.addf %125, %129 : vector<4x16x16xf32>
    %131 = vector.extract_strided_slice %109 {offsets = [0, 1, 1], sizes = [4, 16, 16], strides = [1, 1, 1]} : vector<4x18x18xf32> to vector<4x16x16xf32>
    %c0_68 = arith.constant 0 : index
    %c0_69 = arith.constant 0 : index
    %c4_70 = arith.constant 4 : index
    %132 = vector.load %arg6[%c0_68, %c0_69, %c4_70] : memref<4x1x9xf32, #tpu.memory_space<vmem>>, vector<4x1x1xf32>
    %133 = vector.broadcast %132 : vector<4x1x1xf32> to vector<4x16x16xf32>
    %134 = arith.mulf %131, %133 : vector<4x16x16xf32>
    %135 = arith.addf %130, %134 : vector<4x16x16xf32>
    %136 = vector.extract_strided_slice %109 {offsets = [0, 1, 2], sizes = [4, 16, 16], strides = [1, 1, 1]} : vector<4x18x18xf32> to vector<4x16x16xf32>
    %c0_71 = arith.constant 0 : index
    %c0_72 = arith.constant 0 : index
    %c5_73 = arith.constant 5 : index
    %137 = vector.load %arg6[%c0_71, %c0_72, %c5_73] : memref<4x1x9xf32, #tpu.memory_space<vmem>>, vector<4x1x1xf32>
    %138 = vector.broadcast %137 : vector<4x1x1xf32> to vector<4x16x16xf32>
    %139 = arith.mulf %136, %138 : vector<4x16x16xf32>
    %140 = arith.addf %135, %139 : vector<4x16x16xf32>
    %141 = vector.extract_strided_slice %109 {offsets = [0, 2, 0], sizes = [4, 16, 16], strides = [1, 1, 1]} : vector<4x18x18xf32> to vector<4x16x16xf32>
    %c0_74 = arith.constant 0 : index
    %c0_75 = arith.constant 0 : index
    %c6_76 = arith.constant 6 : index
    %142 = vector.load %arg6[%c0_74, %c0_75, %c6_76] : memref<4x1x9xf32, #tpu.memory_space<vmem>>, vector<4x1x1xf32>
    %143 = vector.broadcast %142 : vector<4x1x1xf32> to vector<4x16x16xf32>
    %144 = arith.mulf %141, %143 : vector<4x16x16xf32>
    %145 = arith.addf %140, %144 : vector<4x16x16xf32>
    %146 = vector.extract_strided_slice %109 {offsets = [0, 2, 1], sizes = [4, 16, 16], strides = [1, 1, 1]} : vector<4x18x18xf32> to vector<4x16x16xf32>
    %c0_77 = arith.constant 0 : index
    %c0_78 = arith.constant 0 : index
    %c7_79 = arith.constant 7 : index
    %147 = vector.load %arg6[%c0_77, %c0_78, %c7_79] : memref<4x1x9xf32, #tpu.memory_space<vmem>>, vector<4x1x1xf32>
    %148 = vector.broadcast %147 : vector<4x1x1xf32> to vector<4x16x16xf32>
    %149 = arith.mulf %146, %148 : vector<4x16x16xf32>
    %150 = arith.addf %145, %149 : vector<4x16x16xf32>
    %151 = vector.extract_strided_slice %109 {offsets = [0, 2, 2], sizes = [4, 16, 16], strides = [1, 1, 1]} : vector<4x18x18xf32> to vector<4x16x16xf32>
    %c0_80 = arith.constant 0 : index
    %c0_81 = arith.constant 0 : index
    %c8_82 = arith.constant 8 : index
    %152 = vector.load %arg6[%c0_80, %c0_81, %c8_82] : memref<4x1x9xf32, #tpu.memory_space<vmem>>, vector<4x1x1xf32>
    %153 = vector.broadcast %152 : vector<4x1x1xf32> to vector<4x16x16xf32>
    %154 = arith.mulf %151, %153 : vector<4x16x16xf32>
    %155 = arith.addf %150, %154 : vector<4x16x16xf32>
    %c0_83 = arith.constant 0 : index
    %c0_84 = arith.constant 0 : index
    %c0_85 = arith.constant 0 : index
    %156 = vector.load %arg7[%c0_83, %c0_84, %c0_85] : memref<4x1x1xf32, #tpu.memory_space<vmem>>, vector<4x1x1xf32>
    %157 = vector.broadcast %156 : vector<4x1x1xf32> to vector<4x16x16xf32>
    %158 = arith.addf %155, %157 : vector<4x16x16xf32>
    %cst_86 = arith.constant 0.000000e+00 : f32
    %159 = vector.broadcast %cst_86 : f32 to vector<4x16x16xf32>
    %160 = arith.maximumf %158, %159 : vector<4x16x16xf32>
    %c0_87 = arith.constant 0 : index
    %c0_88 = arith.constant 0 : index
    %c0_89 = arith.constant 0 : index
    %c0_90 = arith.constant 0 : index
    %161 = vector.load %arg10[%c0_87, %c0_88, %c0_89, %c0_90] : memref<1x8x16x16xf32, #tpu.memory_space<vmem>>, vector<1x4x16x16xf32>
    %162 = vector.shape_cast %161 : vector<1x4x16x16xf32> to vector<4x16x16xf32>
    %163 = vector.shape_cast %103 : vector<4x16x16xf32> to vector<1x4x16x16xf32>
    tpu.vector_store %arg10[%c0_87, %c0_88, %c0_89, %c0_90], %163 {strides = array<i32>} : memref<1x8x16x16xf32, #tpu.memory_space<vmem>>, vector<1x4x16x16xf32>,
    %c0_91 = arith.constant 0 : index
    %c4_92 = arith.constant 4 : index
    %c0_93 = arith.constant 0 : index
    %c0_94 = arith.constant 0 : index
    %164 = vector.load %arg10[%c0_91, %c4_92, %c0_93, %c0_94] : memref<1x8x16x16xf32, #tpu.memory_space<vmem>>, vector<1x4x16x16xf32>
    %165 = vector.shape_cast %164 : vector<1x4x16x16xf32> to vector<4x16x16xf32>
    %166 = vector.shape_cast %160 : vector<4x16x16xf32> to vector<1x4x16x16xf32>
    tpu.vector_store %arg10[%c0_91, %c4_92, %c0_93, %c0_94], %166 {strides = array<i32>} : memref<1x8x16x16xf32, #tpu.memory_space<vmem>>, vector<1x4x16x16xf32>,
    return
  }
  func.func @transform_0(%arg0: i32) -> (i32, i32, i32, i32) {
    %c0_i32 = arith.constant 0 : i32
    %c0_i32_0 = arith.constant 0 : i32
    %c0_i32_1 = arith.constant 0 : i32
    %c0_i32_2 = arith.constant 0 : i32
    return %arg0, %c0_i32, %c0_i32_0, %c0_i32_1 : i32, i32, i32, i32
  }
  func.func @transform_1(%arg0: i32) -> (i32, i32, i32) {
    %c0_i32 = arith.constant 0 : i32
    %c0_i32_0 = arith.constant 0 : i32
    %c0_i32_1 = arith.constant 0 : i32
    %c0_i32_2 = arith.constant 0 : i32
    return %c0_i32, %c0_i32_0, %c0_i32_1 : i32, i32, i32
  }
  func.func @transform_2(%arg0: i32) -> (i32, i32, i32) {
    %c0_i32 = arith.constant 0 : i32
    %c0_i32_0 = arith.constant 0 : i32
    %c0_i32_1 = arith.constant 0 : i32
    %c0_i32_2 = arith.constant 0 : i32
    return %c0_i32, %c0_i32_0, %c0_i32_1 : i32, i32, i32
  }
  func.func @transform_3(%arg0: i32) -> (i32, i32, i32) {
    %c0_i32 = arith.constant 0 : i32
    %c0_i32_0 = arith.constant 0 : i32
    %c0_i32_1 = arith.constant 0 : i32
    %c0_i32_2 = arith.constant 0 : i32
    return %c0_i32, %c0_i32_0, %c0_i32_1 : i32, i32, i32
  }
  func.func @transform_4(%arg0: i32) -> (i32, i32, i32) {
    %c0_i32 = arith.constant 0 : i32
    %c0_i32_0 = arith.constant 0 : i32
    %c0_i32_1 = arith.constant 0 : i32
    %c0_i32_2 = arith.constant 0 : i32
    return %c0_i32, %c0_i32_0, %c0_i32_1 : i32, i32, i32
  }
  func.func @transform_5(%arg0: i32) -> (i32, i32, i32) {
    %c0_i32 = arith.constant 0 : i32
    %c0_i32_0 = arith.constant 0 : i32
    %c0_i32_1 = arith.constant 0 : i32
    %c0_i32_2 = arith.constant 0 : i32
    return %c0_i32, %c0_i32_0, %c0_i32_1 : i32, i32, i32
  }
  func.func @transform_6(%arg0: i32) -> (i32, i32, i32) {
    %c0_i32 = arith.constant 0 : i32
    %c0_i32_0 = arith.constant 0 : i32
    %c0_i32_1 = arith.constant 0 : i32
    %c0_i32_2 = arith.constant 0 : i32
    return %c0_i32, %c0_i32_0, %c0_i32_1 : i32, i32, i32
  }
  func.func @transform_7(%arg0: i32) -> (i32, i32) {
    %c0_i32 = arith.constant 0 : i32
    %c0_i32_0 = arith.constant 0 : i32
    %c0_i32_1 = arith.constant 0 : i32
    return %c0_i32, %c0_i32_0 : i32, i32
  }
  func.func @transform_8(%arg0: i32) -> (i32, i32) {
    %c0_i32 = arith.constant 0 : i32
    %c0_i32_0 = arith.constant 0 : i32
    %c0_i32_1 = arith.constant 0 : i32
    return %c0_i32, %c0_i32_0 : i32, i32
  }
  func.func @transform_9(%arg0: i32) -> (i32, i32, i32, i32) {
    %c0_i32 = arith.constant 0 : i32
    %c0_i32_0 = arith.constant 0 : i32
    %c0_i32_1 = arith.constant 0 : i32
    %c0_i32_2 = arith.constant 0 : i32
    return %arg0, %c0_i32, %c0_i32_0, %c0_i32_1 : i32, i32, i32, i32
  }
}

</mosaic_0001>

<llo_original>
// kernel: tpu_custom_call.1
$region0: #{tpu_custom_call.1}
  #allocation0 [shape = 'u32[]', space=smem, size = 0x4, offset = 0x4, fixed_abs, tag = 'smem constant byte address 0x4 - core index']
  #allocation1 [shape = 'u32[144,128]{1,0:T(1,128)}', space=vmem, size = 0x12000, scoped, tag = 'internal scratch']
  %s0 = inlined_call_operand.hbm [shape: f32[2,4,16,16], index: 0, kind: input, shape index: {}]
  %s1 = inlined_call_operand.vmem [shape: f32[4,1,9], index: 1, kind: input, shape index: {}]
  %s2 = inlined_call_operand.vmem [shape: f32[4,1,1], index: 2, kind: input, shape index: {}]
  %s3 = inlined_call_operand.vmem [shape: f32[4,1,4], index: 3, kind: input, shape index: {}]
  %s4 = inlined_call_operand.vmem [shape: f32[4,1,1], index: 4, kind: input, shape index: {}]
  %s5 = inlined_call_operand.vmem [shape: f32[4,1,9], index: 5, kind: input, shape index: {}]
  %s6 = inlined_call_operand.vmem [shape: f32[4,1,1], index: 6, kind: input, shape index: {}]
  %s7 = inlined_call_operand.vmem [shape: f32[18,16], index: 7, kind: input, shape index: {}]
  %s8 = inlined_call_operand.vmem [shape: f32[18,16], index: 8, kind: input, shape index: {}]
  %s9 = inlined_call_operand.hbm [shape: f32[2,8,16,16], index: 9, kind: output, shape index: {}]
  %s10 = sld [smem:[#allocation0]]
  $region73: #{tpu_custom_call.1} parent=0
    _
  %s12 = ssub.s32 1, %s10
  %s13 = scalar_select 0, %s12, %s10
  $region1: #{tpu_custom_call.1} parent=0
    #allocation2 [shape = 'u8[65536]{0}', space=vmem, size = 0x10000, scoped, tag = 'input window, operand 0']
    #allocation3 [shape = 's32[2]{0}', space=sflag, size = 0x8, scoped, tag = 'scoped memory for tpu_custom_call.1']
    #allocation4 [shape = 's32[2]{0}', space=sflag, size = 0x8, scoped, tag = 'scoped memory for tpu_custom_call.1']
    #allocation5 [shape = 'u8[131072]{0}', space=vmem, size = 0x20000, scoped, tag = 'output window, operand 0']
    %14 = vsyncpa [#allocation3], 0
    %s15 = scalar_lea.sflag [#allocation3], 1
    %16 = vsyncpa %s15, 0
    %17 = vsyncpa [#allocation4], 0
    %s18 = scalar_lea.sflag [#allocation4], 1
    %19 = vsyncpa %s18, 0
    loop: start=0, step=1, limit=4
    $region2: #{tpu_custom_call.1} parent=1 // loop_pre_header
      _
    $region3: #{tpu_custom_call.1} parent=1 // loop_header
      %s21 = sphi 0, %s25
      %p22 = scmp.ge.s32.totalorder %s21, 4
      %s31 = sphi 0, %s33
      %s34 = sphi 0, %s31
      %s35 = sphi 0, %s34
      %s51 = sphi 0, %s35
      %s55 = sphi 0, %s55
      %s57 = sphi 0, %s55
      %s58 = sphi 0, %s57
      %s72 = sphi 0, %s58
      %s76 = sphi 0, %s76
      %s78 = sphi 0, %s76
      %s79 = sphi 0, %s78
      %s93 = sphi 0, %s79
      %s97 = sphi 0, %s97
      %s99 = sphi 0, %s97
      %s100 = sphi 0, %s99
      %s114 = sphi 0, %s100
      %s118 = sphi 0, %s118
      %s120 = sphi 0, %s118
      %s121 = sphi 0, %s120
      %s135 = sphi 0, %s121
      %s139 = sphi 0, %s139
      %s141 = sphi 0, %s139
      %s142 = sphi 0, %s141
      %s156 = sphi 0, %s142
      %s160 = sphi 0, %s160
      %s162 = sphi 0, %s160
      %s163 = sphi 0, %s162
      %s177 = sphi 0, %s163
      %s181 = sphi 0, %s181
      %s183 = sphi 0, %s181
      %s184 = sphi 0, %s183
      %s198 = sphi 0, %s184
      %s202 = sphi 0, %s202
      %s204 = sphi 0, %s202
      %s205 = sphi 0, %s204
      %s219 = sphi 0, %s205
      %s225 = sphi 0, %s227
      %s228 = sphi 0, %s225
      %s229 = sphi 0, %s228
      %s245 = sphi 0, %s229
    $region4: #{tpu_custom_call.1} parent=1 // loop_header_branch
      %24 = sbr.rel (%p22) target = $region8
    $region5: #{tpu_custom_call.1} parent=1 // loop_body
      %s26 = ssub.s32 %s21, 1
      %s27 = ssub.s32 %s21, 2
      %s28 = sadd.s32 %s21, 1
      %s29 = ssub.s32 %s21, %s28
      %p30 = scmp.eq.s32.totalorder %s29, 0
      %s32 = sadd.s32 %s31, 1
      %s33 = scalar_select %p30, %s31, %s32
      %p36 = pneg %p30
      %p37 = scmp.eq.s32.totalorder %s21, 1
      %p38 = por %p36, %p37
      %p39 = scmp.ne.s32.totalorder %s31, %s34
      %p40 = scmp.eq.s32.totalorder %s21, 0
      %p41 = por %p39, %p40
      %p42 = scmp.ne.s32.totalorder %s31, %s34
      %p43 = scmp.eq.s32.totalorder %s26, 1
      %p44 = por %p42, %p43
      %p45 = scmp.ne.s32.totalorder %s34, %s35
      %p46 = scmp.eq.s32.totalorder %s26, 0
      %p47 = por %p45, %p46
      %p48 = scmp.ne.s32.totalorder %s34, %s35
      %p49 = scmp.eq.s32.totalorder %s27, 1
      %p50 = por %p48, %p49
      %p52 = scmp.ne.s32.totalorder %s35, %s51
      %p53 = scmp.eq.s32.totalorder %s27, 0
      %p54 = por %p52, %p53
      %s56 = sadd.s32 %s55, 1
      %p59 = scmp.eq.s32.totalorder %s21, 1
      %p60 = scmp.ne.s32.totalorder %s55, %s57
      %p61 = scmp.eq.s32.totalorder %s21, 0
      %p62 = por %p60, %p61
      %p63 = scmp.ne.s32.totalorder %s55, %s57
      %p64 = scmp.eq.s32.totalorder %s26, 1
      %p65 = por %p63, %p64
      %p66 = scmp.ne.s32.totalorder %s57, %s58
      %p67 = scmp.eq.s32.totalorder %s26, 0
      %p68 = por %p66, %p67
      %p69 = scmp.ne.s32.totalorder %s57, %s58
      %p70 = scmp.eq.s32.totalorder %s27, 1
      %p71 = por %p69, %p70
      %p73 = scmp.ne.s32.totalorder %s58, %s72
      %p74 = scmp.eq.s32.totalorder %s27, 0
      %p75 = por %p73, %p74
      %s77 = sadd.s32 %s76, 1
      %p80 = scmp.eq.s32.totalorder %s21, 1
      %p81 = scmp.ne.s32.totalorder %s76, %s78
      %p82 = scmp.eq.s32.totalorder %s21, 0
      %p83 = por %p81, %p82
      %p84 = scmp.ne.s32.totalorder %s76, %s78
      %p85 = scmp.eq.s32.totalorder %s26, 1
      %p86 = por %p84, %p85
      %p87 = scmp.ne.s32.totalorder %s78, %s79
      %p88 = scmp.eq.s32.totalorder %s26, 0
      %p89 = por %p87, %p88
      %p90 = scmp.ne.s32.totalorder %s78, %s79
      %p91 = scmp.eq.s32.totalorder %s27, 1
      %p92 = por %p90, %p91
      %p94 = scmp.ne.s32.totalorder %s79, %s93
      %p95 = scmp.eq.s32.totalorder %s27, 0
      %p96 = por %p94, %p95
      %s98 = sadd.s32 %s97, 1
      %p101 = scmp.eq.s32.totalorder %s21, 1
      %p102 = scmp.ne.s32.totalorder %s97, %s99
      %p103 = scmp.eq.s32.totalorder %s21, 0
      %p104 = por %p102, %p103
      %p105 = scmp.ne.s32.totalorder %s97, %s99
      %p106 = scmp.eq.s32.totalorder %s26, 1
      %p107 = por %p105, %p106
      %p108 = scmp.ne.s32.totalorder %s99, %s100
      %p109 = scmp.eq.s32.totalorder %s26, 0
      %p110 = por %p108, %p109
      %p111 = scmp.ne.s32.totalorder %s99, %s100
      %p112 = scmp.eq.s32.totalorder %s27, 1
      %p113 = por %p111, %p112
      %p115 = scmp.ne.s32.totalorder %s100, %s114
      %p116 = scmp.eq.s32.totalorder %s27, 0
      %p117 = por %p115, %p116
      %s119 = sadd.s32 %s118, 1
      %p122 = scmp.eq.s32.totalorder %s21, 1
      %p123 = scmp.ne.s32.totalorder %s118, %s120
      %p124 = scmp.eq.s32.totalorder %s21, 0
      %p125 = por %p123, %p124
      %p126 = scmp.ne.s32.totalorder %s118, %s120
      %p127 = scmp.eq.s32.totalorder %s26, 1
      %p128 = por %p126, %p127
      %p129 = scmp.ne.s32.totalorder %s120, %s121
      %p130 = scmp.eq.s32.totalorder %s26, 0
      %p131 = por %p129, %p130
      %p132 = scmp.ne.s32.totalorder %s120, %s121
      %p133 = scmp.eq.s32.totalorder %s27, 1
      %p134 = por %p132, %p133
      %p136 = scmp.ne.s32.totalorder %s121, %s135
      %p137 = scmp.eq.s32.totalorder %s27, 0
      %p138 = por %p136, %p137
      %s140 = sadd.s32 %s139, 1
      %p143 = scmp.eq.s32.totalorder %s21, 1
      %p144 = scmp.ne.s32.totalorder %s139, %s141
      %p145 = scmp.eq.s32.totalorder %s21, 0
      %p146 = por %p144, %p145
      %p147 = scmp.ne.s32.totalorder %s139, %s141
      %p148 = scmp.eq.s32.totalorder %s26, 1
      %p149 = por %p147, %p148
      %p150 = scmp.ne.s32.totalorder %s141, %s142
      %p151 = scmp.eq.s32.totalorder %s26, 0
      %p152 = por %p150, %p151
      %p153 = scmp.ne.s32.totalorder %s141, %s142
      %p154 = scmp.eq.s32.totalorder %s27, 1
      %p155 = por %p153, %p154
      %p157 = scmp.ne.s32.totalorder %s142, %s156
      %p158 = scmp.eq.s32.totalorder %s27, 0
      %p159 = por %p157, %p158
      %s161 = sadd.s32 %s160, 1
      %p164 = scmp.eq.s32.totalorder %s21, 1
      %p165 = scmp.ne.s32.totalorder %s160, %s162
      %p166 = scmp.eq.s32.totalorder %s21, 0
      %p167 = por %p165, %p166
      %p168 = scmp.ne.s32.totalorder %s160, %s162
      %p169 = scmp.eq.s32.totalorder %s26, 1
      %p170 = por %p168, %p169
      %p171 = scmp.ne.s32.totalorder %s162, %s163
      %p172 = scmp.eq.s32.totalorder %s26, 0
      %p173 = por %p171, %p172
      %p174 = scmp.ne.s32.totalorder %s162, %s163
      %p175 = scmp.eq.s32.totalorder %s27, 1
      %p176 = por %p174, %p175
      %p178 = scmp.ne.s32.totalorder %s163, %s177
      %p179 = scmp.eq.s32.totalorder %s27, 0
      %p180 = por %p178, %p179
      %s182 = sadd.s32 %s181, 1
      %p185 = scmp.eq.s32.totalorder %s21, 1
      %p186 = scmp.ne.s32.totalorder %s181, %s183
      %p187 = scmp.eq.s32.totalorder %s21, 0
      %p188 = por %p186, %p187
      %p189 = scmp.ne.s32.totalorder %s181, %s183
      %p190 = scmp.eq.s32.totalorder %s26, 1
      %p191 = por %p189, %p190
      %p192 = scmp.ne.s32.totalorder %s183, %s184
      %p193 = scmp.eq.s32.totalorder %s26, 0
      %p194 = por %p192, %p193
      %p195 = scmp.ne.s32.totalorder %s183, %s184
      %p196 = scmp.eq.s32.totalorder %s27, 1
      %p197 = por %p195, %p196
      %p199 = scmp.ne.s32.totalorder %s184, %s198
      %p200 = scmp.eq.s32.totalorder %s27, 0
      %p201 = por %p199, %p200
      %s203 = sadd.s32 %s202, 1
      %p206 = scmp.eq.s32.totalorder %s21, 1
      %p207 = scmp.ne.s32.totalorder %s202, %s204
      %p208 = scmp.eq.s32.totalorder %s21, 0
      %p209 = por %p207, %p208
      %p210 = scmp.ne.s32.totalorder %s202, %s204
      %p211 = scmp.eq.s32.totalorder %s26, 1
      %p212 = por %p210, %p211
      %p213 = scmp.ne.s32.totalorder %s204, %s205
      %p214 = scmp.eq.s32.totalorder %s26, 0
      %p215 = por %p213, %p214
      %p216 = scmp.ne.s32.totalorder %s204, %s205
      %p217 = scmp.eq.s32.totalorder %s27, 1
      %p218 = por %p216, %p217
      %p220 = scmp.ne.s32.totalorder %s205, %s219
      %p221 = scmp.eq.s32.totalorder %s27, 0
      %p222 = por %p220, %p221
      %s223 = ssub.s32 %s21, %s28
      %p224 = scmp.eq.s32.totalorder %s223, 0
      %s226 = sadd.s32 %s225, 1
      %s227 = scalar_select %p224, %s225, %s226
      %p230 = pneg %p224
      %p231 = scmp.eq.s32.totalorder %s21, 1
      %p232 = por %p230, %p231
      %p233 = scmp.ne.s32.totalorder %s225, %s228
      %p234 = scmp.eq.s32.totalorder %s21, 0
      %p235 = por %p233, %p234
      %p236 = scmp.ne.s32.totalorder %s225, %s228
      %p237 = scmp.eq.s32.totalorder %s26, 1
      %p238 = por %p236, %p237
      %p239 = scmp.ne.s32.totalorder %s228, %s229
      %p240 = scmp.eq.s32.totalorder %s26, 0
      %p241 = por %p239, %p240
      %p242 = scmp.ne.s32.totalorder %s228, %s229
      %p243 = scmp.eq.s32.totalorder %s27, 1
      %p244 = por %p242, %p243
      %p246 = scmp.ne.s32.totalorder %s229, %s245
      %p247 = scmp.eq.s32.totalorder %s27, 0
      %p248 = por %p246, %p247
      %p249 = scmp.le.s32.totalorder 1, %s21
      %p250 = scmp.lt.s32.totalorder %s21, 3
      %p251 = pnand %p249, %p250
      %p252 = pneg %p251
      // Predicated region
      $region9: #{tpu_custom_call.1} parent=5 // pred_check
        _
      $region10: #{tpu_custom_call.1} parent=5 // pred_check_branch
        %254 = sbr.rel (%p251) target = $region12
      $region11: #{tpu_custom_call.1} parent=5 // pred_region
        %s255 = ssub.s32 %s21, 1
        // Predicated region
        $region13: #{tpu_custom_call.1} parent=11 // pred_check
          %p256 = pneg %p68
        $region14: #{tpu_custom_call.1} parent=11 // pred_check_branch
          %258 = sbr.rel (%p256) target = $region16
        $region15: #{tpu_custom_call.1} parent=11 // pred_region
          _
        $region16: #{tpu_custom_call.1} parent=11 // pred_fallthru
          _
        // Predicated region
        $region17: #{tpu_custom_call.1} parent=11 // pred_check
          %p259 = pneg %p89
        $region18: #{tpu_custom_call.1} parent=11 // pred_check_branch
          %261 = sbr.rel (%p259) target = $region20
        $region19: #{tpu_custom_call.1} parent=11 // pred_region
          _
        $region20: #{tpu_custom_call.1} parent=11 // pred_fallthru
          _
        // Predicated region
        $region21: #{tpu_custom_call.1} parent=11 // pred_check
          %p262 = pneg %p110
        $region22: #{tpu_custom_call.1} parent=11 // pred_check_branch
          %264 = sbr.rel (%p262) target = $region24
        $region23: #{tpu_custom_call.1} parent=11 // pred_region
          _
        $region24: #{tpu_custom_call.1} parent=11 // pred_fallthru
          _
        // Predicated region
        $region25: #{tpu_custom_call.1} parent=11 // pred_check
          %p265 = pneg %p131
        $region26: #{tpu_custom_call.1} parent=11 // pred_check_branch
          %267 = sbr.rel (%p265) target = $region28
        $region27: #{tpu_custom_call.1} parent=11 // pred_region
          _
        $region28: #{tpu_custom_call.1} parent=11 // pred_fallthru
          _
        // Predicated region
        $region29: #{tpu_custom_call.1} parent=11 // pred_check
          %p268 = pneg %p152
        $region30: #{tpu_custom_call.1} parent=11 // pred_check_branch
          %270 = sbr.rel (%p268) target = $region32
        $region31: #{tpu_custom_call.1} parent=11 // pred_region
          _
        $region32: #{tpu_custom_call.1} parent=11 // pred_fallthru
          _
        // Predicated region
        $region33: #{tpu_custom_call.1} parent=11 // pred_check
          %p271 = pneg %p173
        $region34: #{tpu_custom_call.1} parent=11 // pred_check_branch
          %273 = sbr.rel (%p271) target = $region36
        $region35: #{tpu_custom_call.1} parent=11 // pred_region
          _
        $region36: #{tpu_custom_call.1} parent=11 // pred_fallthru
          _
        // Predicated region
        $region37: #{tpu_custom_call.1} parent=11 // pred_check
          %p274 = pneg %p194
        $region38: #{tpu_custom_call.1} parent=11 // pred_check_branch
          %276 = sbr.rel (%p274) target = $region40
        $region39: #{tpu_custom_call.1} parent=11 // pred_region
          _
        $region40: #{tpu_custom_call.1} parent=11 // pred_fallthru
          _
        // Predicated region
        $region41: #{tpu_custom_call.1} parent=11 // pred_check
          %p277 = pneg %p215
        $region42: #{tpu_custom_call.1} parent=11 // pred_check_branch
          %279 = sbr.rel (%p277) target = $region44
        $region43: #{tpu_custom_call.1} parent=11 // pred_region
          _
        $region44: #{tpu_custom_call.1} parent=11 // pred_fallthru
          _
      $region12: #{tpu_custom_call.1} parent=5 // pred_fallthru
        _
      %p280 = scmp.lt.s32.totalorder %s21, 2
      // Predicated region
      $region45: #{tpu_custom_call.1} parent=5 // pred_check
        %p281 = pneg %p280
      $region46: #{tpu_custom_call.1} parent=5 // pred_check_branch
        %283 = sbr.rel (%p281) target = $region48
      $region47: #{tpu_custom_call.1} parent=5 // pred_region
        // Predicated region
        $region49: #{tpu_custom_call.1} parent=47 // pred_check
          %p284 = pneg %p41
        $region50: #{tpu_custom_call.1} parent=47 // pred_check_branch
          %286 = sbr.rel (%p284) target = $region52
        $region51: #{tpu_custom_call.1} parent=47 // pred_region
          %s287 = sand.u32 %s31, 1
          %s288 = scalar_lea.sflag [#allocation3], %s287
          %s289 = sand.u32 %s31, 1
          %s290 = smul.addr %s289, 64
          %s291 = scalar_lea.vmem [#allocation2], %s290
          %s293 = ssub.s32 1024, 1024
          %294 = vsyncadd %s288, %s293
          %s295 = smul.addr %s21, 8
          %s296 = smul.addr %s295, 128
          %s297 = scalar_lea.hbm %s0, %s296
          %s298 = sshll.u32 %s291, 4
          %s299 = int_to_ptr.vmem [resolvable:$true] %s298
          %304 = dma.hbm_to_vmem [thread:$0]  %s297, 1024, %s299, %s288, 128, 128, 8
        $region52: #{tpu_custom_call.1} parent=47 // pred_fallthru
          _
      $region48: #{tpu_custom_call.1} parent=5 // pred_fallthru
        _
      %p305 = scmp.le.s32.totalorder 1, %s21
      %p306 = scmp.lt.s32.totalorder %s21, 3
      %p307 = pnand %p305, %p306
      %p308 = pneg %p307
      // Predicated region
      $region53: #{tpu_custom_call.1} parent=5 // pred_check
        _
      $region54: #{tpu_custom_call.1} parent=5 // pred_check_branch
        %310 = sbr.rel (%p307) target = $region56
      $region55: #{tpu_custom_call.1} parent=5 // pred_region
        %s311 = ssub.s32 %s21, 1
        %s312 = sand.u32 %s34, 1
        %s313 = scalar_lea.sflag [#allocation3], %s312
        %s314 = sand.u32 %s34, 1
        %s315 = smul.addr %s314, 64
        %s316 = scalar_lea.vmem [#allocation2], %s315
        // Predicated region
        $region57: #{tpu_custom_call.1} parent=55 // pred_check
          %p317 = pneg %p47
        $region58: #{tpu_custom_call.1} parent=55 // pred_check_branch
          %319 = sbr.rel (%p317) target = $region60
        $region59: #{tpu_custom_call.1} parent=55 // pred_region
          %320 = dma.done %s313, 1024
        $region60: #{tpu_custom_call.1} parent=55 // pred_fallthru
          _
        %s321 = sand.u32 %s34, 1
        %s322 = scalar_lea.sflag [#allocation3], %s321
        %s323 = sand.u32 %s34, 1
        %s324 = smul.addr %s323, 64
        %s325 = scalar_lea.vmem [#allocation2], %s324
        %p326 = pneg %p47
        %p327 = pneg %p44
        %p328 = pneg %p68
        %p329 = pneg %p65
        %p330 = pneg %p89
        %p331 = pneg %p86
        %p332 = pneg %p110
        %p333 = pneg %p107
        %p334 = pneg %p131
        %p335 = pneg %p128
        %p336 = pneg %p152
        %p337 = pneg %p149
        %p338 = pneg %p173
        %p339 = pneg %p170
        %p340 = pneg %p194
        %p341 = pneg %p191
        %p342 = pneg %p215
        %p343 = pneg %p212
        %p344 = pneg %p241
        %p345 = pneg %p238
        %s346 = sand.u32 %s228, 1
        %s347 = scalar_lea.sflag [#allocation4], %s346
        %s348 = sand.u32 %s228, 1
        %s349 = smul.addr %s348, 128
        %s350 = scalar_lea.vmem [#allocation5], %s349
        %v351 = vld [vmem:[%s316] sm:$0xff]
        %v352 = vld [vmem:[%s316 + $0x8] sm:$0xff]
        %v353 = vld [vmem:[%s316 + $0x10] sm:$0xff]
        %v354 = vld [vmem:[%s316 + $0x18] sm:$0xff]
        %v355 = vld [vmem:[%s316 + $0x20] sm:$0xff]
        %v356 = vld [vmem:[%s316 + $0x28] sm:$0xff]
        %v357 = vld [vmem:[%s316 + $0x30] sm:$0xff]
        %v358 = vld [vmem:[%s316 + $0x38] sm:$0xff]
        %v359 = vld [vmem:[%s7] sm:$0xff]
        %v360 = vld [vmem:[%s7 + $0x8] sm:$0xff]
        %v361 = vld [vmem:[%s7 + $0x10] sm:$0x3]
        %v362 = vld [vmem:[%s8] sm:$0xff]
        %v363 = vld [vmem:[%s8 + $0x8] sm:$0xff]
        %v364 = vld [vmem:[%s8 + $0x10] sm:$0x3]
        %v365 = vmul.f32 %v351, 0.125
        %v366 = vmul.f32 %v352, 0.125
        %v367 = vmul.f32 %v353, 0.125
        %v368 = vmul.f32 %v354, 0.125
        %v369 = vmul.f32 %v355, 0.125
        %v370 = vmul.f32 %v356, 0.125
        %v371 = vmul.f32 %v357, 0.125
        %v372 = vmul.f32 %v358, 0.125
        %vm373 = vcmask 130048
        %v375 = vsel %vm373, %v365, 0
        %v378 = vsel %vm373, %v366, 0
        %v381 = vsel %vm373, %v351, 0
        %v384 = vsel %vm373, %v352, 0
        %386 = vmatprep.subr.mxu0 0.0
        %387 = vmatpush1.xpose.msra.mxu0 %v381
        %388 = vmatprep.subr.mxu0 0.0
        %389 = vmatpush1.xpose.msra.mxu0 %v384
        %390 = vmatprep.subr.mxu0 0.0
        %391 = vmatpush1.xpose.msra.mxu0 0.0
        %392 = vmatprep.subr.mxu0 0.0
        %393 = vmatpush1.xpose.msra.mxu0 0.0
        %394 = vmatprep.subr.mxu0 0.0
        %395 = vmatpush1.xpose.msra.mxu0 0.0
        %396 = vmatprep.subr.mxu0 0.0
        %397 = vmatpush1.xpose.msra.mxu0 0.0
        %398 = vmatprep.subr.mxu0 0.0
        %399 = vmatpush1.xpose.msra.mxu0 0.0
        %400 = vmatprep.subr.mxu0 0.0
        %401 = vmatpush1.xpose.msra.mxu0 0.0
        %402 = vmatprep.subr.mxu0 0.0
        %403 = vmatpush1.xpose.msra.mxu0 0.0
        %404 = vmatprep.subr.mxu0 0.0
        %405 = vmatpush1.xpose.msra.mxu0 0.0
        %406 = vmatprep.subr.mxu0 0.0
        %407 = vmatpush1.xpose.msra.mxu0 0.0
        %408 = vmatprep.subr.mxu0 0.0
        %409 = vmatpush1.xpose.msra.mxu0 0.0
        %410 = vmatprep.subr.mxu0 0.0
        %411 = vmatpush1.xpose.msra.mxu0 0.0
        %412 = vmatprep.subr.mxu0 0.0
        %413 = vmatpush1.xpose.msra.mxu0 0.0
        %414 = vmatprep.subr.mxu0 0.0
        %415 = vmatpush1.xpose.msra.mxu0 0.0
        %416 = vmatprep.subr.mxu0 0.0
        %417 = vmatpush1.xpose.msra.mxu0 0.0
        %418 = vmatprep.subr.mxu0 0.0
        %419 = vmatpush1.xpose.msra.mxu0 0.0
        %420 = vmatprep.subr.mxu0 0.0
        %421 = vmatpush1.xpose.msra.mxu0 0.0
        %422 = vmatprep.subr.mxu0 0.0
        %423 = vmatpush1.xpose.msra.mxu0 0.0
        %424 = vmatprep.subr.mxu0 0.0
        %425 = vmatpush1.xpose.msra.mxu0 0.0
        %426 = vmatprep.subr.mxu0 0.0
        %427 = vmatpush1.xpose.msra.mxu0 0.0
        %428 = vmatprep.subr.mxu0 0.0
        %429 = vmatpush1.xpose.msra.mxu0 0.0
        %430 = vmatprep.subr.mxu0 0.0
        %431 = vmatpush1.xpose.msra.mxu0 0.0
        %432 = vmatprep.subr.mxu0 0.0
        %433 = vmatpush1.xpose.msra.mxu0 0.0
        %434 = vmatprep.subr.mxu0 0.0
        %435 = vmatpush1.xpose.msra.mxu0 0.0
        %436 = vmatprep.subr.mxu0 0.0
        %437 = vmatpush1.xpose.msra.mxu0 0.0
        %438 = vmatprep.subr.mxu0 0.0
        %439 = vmatpush1.xpose.msra.mxu0 0.0
        %440 = vmatprep.subr.mxu0 0.0
        %441 = vmatpush1.xpose.msra.mxu0 0.0
        %442 = vmatprep.subr.mxu0 0.0
        %443 = vmatpush1.xpose.msra.mxu0 0.0
        %444 = vmatprep.subr.mxu0 0.0
        %445 = vmatpush1.xpose.msra.mxu0 0.0
        %446 = vmatprep.subr.mxu0 0.0
        %447 = vmatpush1.xpose.msra.mxu0 0.0
        %448 = vmatprep.subr.mxu0 0.0
        %449 = vmatpush1.xpose.msra.mxu0 0.0
        %450 = vmatprep.mubr.f32.mxu0 0.0
        %451 = vmatmul.mubr.f32.gmra.mrb[0].mxu0 %v375
        %v452 = vpop.f32.mrb[0].mxu0
        %v453 = vadd.f32 0.0, %v452
        %v454 = vpop.f32.mrb[0].mxu0
        %455 = vmatprep.mubr.f32.mxu0 0.0
        %456 = vmatmul.mubr.f32.gmra.mrb[0].mxu0 %v378
        %v457 = vpop.f32.mrb[0].mxu0
        %v458 = vadd.f32 0.0, %v457
        %v459 = vpop.f32.mrb[0].mxu0
        %460 = vdwg.mxu0
        %v462 = vsel %vm373, %v367, 0
        %v465 = vsel %vm373, %v368, 0
        %v468 = vsel %vm373, %v353, 0
        %v471 = vsel %vm373, %v354, 0
        %473 = vmatprep.subr.mxu0 0.0
        %474 = vmatpush1.xpose.msra.mxu0 %v468
        %475 = vmatprep.subr.mxu0 0.0
        %476 = vmatpush1.xpose.msra.mxu0 %v471
        %477 = vmatprep.subr.mxu0 0.0
        %478 = vmatpush1.xpose.msra.mxu0 0.0
        %479 = vmatprep.subr.mxu0 0.0
        %480 = vmatpush1.xpose.msra.mxu0 0.0
        %481 = vmatprep.subr.mxu0 0.0
        %482 = vmatpush1.xpose.msra.mxu0 0.0
        %483 = vmatprep.subr.mxu0 0.0
        %484 = vmatpush1.xpose.msra.mxu0 0.0
        %485 = vmatprep.subr.mxu0 0.0
        %486 = vmatpush1.xpose.msra.mxu0 0.0
        %487 = vmatprep.subr.mxu0 0.0
        %488 = vmatpush1.xpose.msra.mxu0 0.0
        %489 = vmatprep.subr.mxu0 0.0
        %490 = vmatpush1.xpose.msra.mxu0 0.0
        %491 = vmatprep.subr.mxu0 0.0
        %492 = vmatpush1.xpose.msra.mxu0 0.0
        %493 = vmatprep.subr.mxu0 0.0
        %494 = vmatpush1.xpose.msra.mxu0 0.0
        %495 = vmatprep.subr.mxu0 0.0
        %496 = vmatpush1.xpose.msra.mxu0 0.0
        %497 = vmatprep.subr.mxu0 0.0
        %498 = vmatpush1.xpose.msra.mxu0 0.0
        %499 = vmatprep.subr.mxu0 0.0
        %500 = vmatpush1.xpose.msra.mxu0 0.0
        %501 = vmatprep.subr.mxu0 0.0
        %502 = vmatpush1.xpose.msra.mxu0 0.0
        %503 = vmatprep.subr.mxu0 0.0
        %504 = vmatpush1.xpose.msra.mxu0 0.0
        %505 = vmatprep.subr.mxu0 0.0
        %506 = vmatpush1.xpose.msra.mxu0 0.0
        %507 = vmatprep.subr.mxu0 0.0
        %508 = vmatpush1.xpose.msra.mxu0 0.0
        %509 = vmatprep.subr.mxu0 0.0
        %510 = vmatpush1.xpose.msra.mxu0 0.0
        %511 = vmatprep.subr.mxu0 0.0
        %512 = vmatpush1.xpose.msra.mxu0 0.0
        %513 = vmatprep.subr.mxu0 0.0
        %514 = vmatpush1.xpose.msra.mxu0 0.0
        %515 = vmatprep.subr.mxu0 0.0
        %516 = vmatpush1.xpose.msra.mxu0 0.0
        %517 = vmatprep.subr.mxu0 0.0
        %518 = vmatpush1.xpose.msra.mxu0 0.0
        %519 = vmatprep.subr.mxu0 0.0
        %520 = vmatpush1.xpose.msra.mxu0 0.0
        %521 = vmatprep.subr.mxu0 0.0
        %522 = vmatpush1.xpose.msra.mxu0 0.0
        %523 = vmatprep.subr.mxu0 0.0
        %524 = vmatpush1.xpose.msra.mxu0 0.0
        %525 = vmatprep.subr.mxu0 0.0
        %526 = vmatpush1.xpose.msra.mxu0 0.0
        %527 = vmatprep.subr.mxu0 0.0
        %528 = vmatpush1.xpose.msra.mxu0 0.0
        %529 = vmatprep.subr.mxu0 0.0
        %530 = vmatpush1.xpose.msra.mxu0 0.0
        %531 = vmatprep.subr.mxu0 0.0
        %532 = vmatpush1.xpose.msra.mxu0 0.0
        %533 = vmatprep.subr.mxu0 0.0
        %534 = vmatpush1.xpose.msra.mxu0 0.0
        %535 = vmatprep.subr.mxu0 0.0
        %536 = vmatpush1.xpose.msra.mxu0 0.0
        %537 = vmatprep.mubr.f32.mxu0 0.0
        %538 = vmatmul.mubr.f32.gmra.mrb[0].mxu0 %v462
        %v539 = vpop.f32.mrb[0].mxu0
        %v540 = vadd.f32 0.0, %v539
        %v541 = vpop.f32.mrb[0].mxu0
        %542 = vmatprep.mubr.f32.mxu0 0.0
        %543 = vmatmul.mubr.f32.gmra.mrb[0].mxu0 %v465
        %v544 = vpop.f32.mrb[0].mxu0
        %v545 = vadd.f32 0.0, %v544
        %v546 = vpop.f32.mrb[0].mxu0
        %547 = vdwg.mxu0
        %v549 = vsel %vm373, %v369, 0
        %v552 = vsel %vm373, %v370, 0
        %v555 = vsel %vm373, %v355, 0
        %v558 = vsel %vm373, %v356, 0
        %560 = vmatprep.subr.mxu0 0.0
        %561 = vmatpush1.xpose.msra.mxu0 %v555
        %562 = vmatprep.subr.mxu0 0.0
        %563 = vmatpush1.xpose.msra.mxu0 %v558
        %564 = vmatprep.subr.mxu0 0.0
        %565 = vmatpush1.xpose.msra.mxu0 0.0
        %566 = vmatprep.subr.mxu0 0.0
        %567 = vmatpush1.xpose.msra.mxu0 0.0
        %568 = vmatprep.subr.mxu0 0.0
        %569 = vmatpush1.xpose.msra.mxu0 0.0
        %570 = vmatprep.subr.mxu0 0.0
        %571 = vmatpush1.xpose.msra.mxu0 0.0
        %572 = vmatprep.subr.mxu0 0.0
        %573 = vmatpush1.xpose.msra.mxu0 0.0
        %574 = vmatprep.subr.mxu0 0.0
        %575 = vmatpush1.xpose.msra.mxu0 0.0
        %576 = vmatprep.subr.mxu0 0.0
        %577 = vmatpush1.xpose.msra.mxu0 0.0
        %578 = vmatprep.subr.mxu0 0.0
        %579 = vmatpush1.xpose.msra.mxu0 0.0
        %580 = vmatprep.subr.mxu0 0.0
        %581 = vmatpush1.xpose.msra.mxu0 0.0
        %582 = vmatprep.subr.mxu0 0.0
        %583 = vmatpush1.xpose.msra.mxu0 0.0
        %584 = vmatprep.subr.mxu0 0.0
        %585 = vmatpush1.xpose.msra.mxu0 0.0
        %586 = vmatprep.subr.mxu0 0.0
        %587 = vmatpush1.xpose.msra.mxu0 0.0
        %588 = vmatprep.subr.mxu0 0.0
        %589 = vmatpush1.xpose.msra.mxu0 0.0
        %590 = vmatprep.subr.mxu0 0.0
        %591 = vmatpush1.xpose.msra.mxu0 0.0
        %592 = vmatprep.subr.mxu0 0.0
        %593 = vmatpush1.xpose.msra.mxu0 0.0
        %594 = vmatprep.subr.mxu0 0.0
        %595 = vmatpush1.xpose.msra.mxu0 0.0
        %596 = vmatprep.subr.mxu0 0.0
        %597 = vmatpush1.xpose.msra.mxu0 0.0
        %598 = vmatprep.subr.mxu0 0.0
        %599 = vmatpush1.xpose.msra.mxu0 0.0
        %600 = vmatprep.subr.mxu0 0.0
        %601 = vmatpush1.xpose.msra.mxu0 0.0
        %602 = vmatprep.subr.mxu0 0.0
        %603 = vmatpush1.xpose.msra.mxu0 0.0
        %604 = vmatprep.subr.mxu0 0.0
        %605 = vmatpush1.xpose.msra.mxu0 0.0
        %606 = vmatprep.subr.mxu0 0.0
        %607 = vmatpush1.xpose.msra.mxu0 0.0
        %608 = vmatprep.subr.mxu0 0.0
        %609 = vmatpush1.xpose.msra.mxu0 0.0
        %610 = vmatprep.subr.mxu0 0.0
        %611 = vmatpush1.xpose.msra.mxu0 0.0
        %612 = vmatprep.subr.mxu0 0.0
        %613 = vmatpush1.xpose.msra.mxu0 0.0
        %614 = vmatprep.subr.mxu0 0.0
        %615 = vmatpush1.xpose.msra.mxu0 0.0
        %616 = vmatprep.subr.mxu0 0.0
        %617 = vmatpush1.xpose.msra.mxu0 0.0
        %618 = vmatprep.subr.mxu0 0.0
        %619 = vmatpush1.xpose.msra.mxu0 0.0
        %620 = vmatprep.subr.mxu0 0.0
        %621 = vmatpush1.xpose.msra.mxu0 0.0
        %622 = vmatprep.subr.mxu0 0.0
        %623 = vmatpush1.xpose.msra.mxu0 0.0
        %624 = vmatprep.mubr.f32.mxu0 0.0
        %625 = vmatmul.mubr.f32.gmra.mrb[0].mxu0 %v549
        %v626 = vpop.f32.mrb[0].mxu0
        %v627 = vadd.f32 0.0, %v626
        %v628 = vpop.f32.mrb[0].mxu0
        %629 = vmatprep.mubr.f32.mxu0 0.0
        %630 = vmatmul.mubr.f32.gmra.mrb[0].mxu0 %v552
        %v631 = vpop.f32.mrb[0].mxu0
        %v632 = vadd.f32 0.0, %v631
        %v633 = vpop.f32.mrb[0].mxu0
        %634 = vdwg.mxu0
        %v636 = vsel %vm373, %v371, 0
        %v639 = vsel %vm373, %v372, 0
        %v642 = vsel %vm373, %v357, 0
        %v645 = vsel %vm373, %v358, 0
        %647 = vmatprep.subr.mxu0 0.0
        %648 = vmatpush1.xpose.msra.mxu0 %v642
        %649 = vmatprep.subr.mxu0 0.0
        %650 = vmatpush1.xpose.msra.mxu0 %v645
        %651 = vmatprep.subr.mxu0 0.0
        %652 = vmatpush1.xpose.msra.mxu0 0.0
        %653 = vmatprep.subr.mxu0 0.0
        %654 = vmatpush1.xpose.msra.mxu0 0.0
        %655 = vmatprep.subr.mxu0 0.0
        %656 = vmatpush1.xpose.msra.mxu0 0.0
        %657 = vmatprep.subr.mxu0 0.0
        %658 = vmatpush1.xpose.msra.mxu0 0.0
        %659 = vmatprep.subr.mxu0 0.0
        %660 = vmatpush1.xpose.msra.mxu0 0.0
        %661 = vmatprep.subr.mxu0 0.0
        %662 = vmatpush1.xpose.msra.mxu0 0.0
        %663 = vmatprep.subr.mxu0 0.0
        %664 = vmatpush1.xpose.msra.mxu0 0.0
        %665 = vmatprep.subr.mxu0 0.0
        %666 = vmatpush1.xpose.msra.mxu0 0.0
        %667 = vmatprep.subr.mxu0 0.0
        %668 = vmatpush1.xpose.msra.mxu0 0.0
        %669 = vmatprep.subr.mxu0 0.0
        %670 = vmatpush1.xpose.msra.mxu0 0.0
        %671 = vmatprep.subr.mxu0 0.0
        %672 = vmatpush1.xpose.msra.mxu0 0.0
        %673 = vmatprep.subr.mxu0 0.0
        %674 = vmatpush1.xpose.msra.mxu0 0.0
        %675 = vmatprep.subr.mxu0 0.0
        %676 = vmatpush1.xpose.msra.mxu0 0.0
        %677 = vmatprep.subr.mxu0 0.0
        %678 = vmatpush1.xpose.msra.mxu0 0.0
        %679 = vmatprep.subr.mxu0 0.0
        %680 = vmatpush1.xpose.msra.mxu0 0.0
        %681 = vmatprep.subr.mxu0 0.0
        %682 = vmatpush1.xpose.msra.mxu0 0.0
        %683 = vmatprep.subr.mxu0 0.0
        %684 = vmatpush1.xpose.msra.mxu0 0.0
        %685 = vmatprep.subr.mxu0 0.0
        %686 = vmatpush1.xpose.msra.mxu0 0.0
        %687 = vmatprep.subr.mxu0 0.0
        %688 = vmatpush1.xpose.msra.mxu0 0.0
        %689 = vmatprep.subr.mxu0 0.0
        %690 = vmatpush1.xpose.msra.mxu0 0.0
        %691 = vmatprep.subr.mxu0 0.0
        %692 = vmatpush1.xpose.msra.mxu0 0.0
        %693 = vmatprep.subr.mxu0 0.0
        %694 = vmatpush1.xpose.msra.mxu0 0.0
        %695 = vmatprep.subr.mxu0 0.0
        %696 = vmatpush1.xpose.msra.mxu0 0.0
        %697 = vmatprep.subr.mxu0 0.0
        %698 = vmatpush1.xpose.msra.mxu0 0.0
        %699 = vmatprep.subr.mxu0 0.0
        %700 = vmatpush1.xpose.msra.mxu0 0.0
        %701 = vmatprep.subr.mxu0 0.0
        %702 = vmatpush1.xpose.msra.mxu0 0.0
        %703 = vmatprep.subr.mxu0 0.0
        %704 = vmatpush1.xpose.msra.mxu0 0.0
        %705 = vmatprep.subr.mxu0 0.0
        %706 = vmatpush1.xpose.msra.mxu0 0.0
        %707 = vmatprep.subr.mxu0 0.0
        %708 = vmatpush1.xpose.msra.mxu0 0.0
        %709 = vmatprep.subr.mxu0 0.0
        %710 = vmatpush1.xpose.msra.mxu0 0.0
        %711 = vmatprep.mubr.f32.mxu0 0.0
        %712 = vmatmul.mubr.f32.gmra.mrb[0].mxu0 %v636
        %v713 = vpop.f32.mrb[0].mxu0
        %v714 = vadd.f32 0.0, %v713
        %v715 = vpop.f32.mrb[0].mxu0
        %716 = vmatprep.mubr.f32.mxu0 0.0
        %717 = vmatmul.mubr.f32.gmra.mrb[0].mxu0 %v639
        %v718 = vpop.f32.mrb[0].mxu0
        %v719 = vadd.f32 0.0, %v718
        %v720 = vpop.f32.mrb[0].mxu0
        %721 = vdwg.mxu0
        %v722 = vsel %vm373, %v453, -inf
        %723 = vmax.xlane.f32.xlu0 %v722
        %v724 = vpop.xlane.xlu0 %723
        %v725 = vsel %vm373, %v458, -inf
        %726 = vmax.xlane.f32.xlu0 %v725
        %v727 = vpop.xlane.xlu0 %726
        %v728 = vsel %vm373, %v540, -inf
        %729 = vmax.xlane.f32.xlu0 %v728
        %v730 = vpop.xlane.xlu0 %729
        %v731 = vsel %vm373, %v545, -inf
        %732 = vmax.xlane.f32.xlu0 %v731
        %v733 = vpop.xlane.xlu0 %732
        %v734 = vsel %vm373, %v627, -inf
        %735 = vmax.xlane.f32.xlu0 %v734
        %v736 = vpop.xlane.xlu0 %735
        %v737 = vsel %vm373, %v632, -inf
        %738 = vmax.xlane.f32.xlu0 %v737
        %v739 = vpop.xlane.xlu0 %738
        %v740 = vsel %vm373, %v714, -inf
        %741 = vmax.xlane.f32.xlu0 %v740
        %v742 = vpop.xlane.xlu0 %741
        %v743 = vsel %vm373, %v719, -inf
        %744 = vmax.xlane.f32.xlu0 %v743
        %v745 = vpop.xlane.xlu0 %744
        %v746 = vsub.f32 %v453, %v724
        %v747 = vsub.f32 %v458, %v727
        %v748 = vsub.f32 %v540, %v730
        %v749 = vsub.f32 %v545, %v733
        %v750 = vsub.f32 %v627, %v736
        %v751 = vsub.f32 %v632, %v739
        %v752 = vsub.f32 %v714, %v742
        %v753 = vsub.f32 %v719, %v745
        %v754 = vmul.f32 %v746, 1.442695
        %v755 = vpow.pop %v754
        %v756 = vmul.f32 %v747, 1.442695
        %v757 = vpow.pop %v756
        %v758 = vmul.f32 %v748, 1.442695
        %v759 = vpow.pop %v758
        %v760 = vmul.f32 %v749, 1.442695
        %v761 = vpow.pop %v760
        %v762 = vmul.f32 %v750, 1.442695
        %v763 = vpow.pop %v762
        %v764 = vmul.f32 %v751, 1.442695
        %v765 = vpow.pop %v764
        %v766 = vmul.f32 %v752, 1.442695
        %v767 = vpow.pop %v766
        %v768 = vmul.f32 %v753, 1.442695
        %v769 = vpow.pop %v768
        %v770 = vsel %vm373, %v755, 0.0
        %771 = vadd.xlane.f32.xlu0 %v770
        %v772 = vpop.xlane.xlu0 %771
        %v773 = vsel %vm373, %v757, 0.0
        %774 = vadd.xlane.f32.xlu0 %v773
        %v775 = vpop.xlane.xlu0 %774
        %v776 = vsel %vm373, %v759, 0.0
        %777 = vadd.xlane.f32.xlu0 %v776
        %v778 = vpop.xlane.xlu0 %777
        %v779 = vsel %vm373, %v761, 0.0
        %780 = vadd.xlane.f32.xlu0 %v779
        %v781 = vpop.xlane.xlu0 %780
        %v782 = vsel %vm373, %v763, 0.0
        %783 = vadd.xlane.f32.xlu0 %v782
        %v784 = vpop.xlane.xlu0 %783
        %v785 = vsel %vm373, %v765, 0.0
        %786 = vadd.xlane.f32.xlu0 %v785
        %v787 = vpop.xlane.xlu0 %786
        %v788 = vsel %vm373, %v767, 0.0
        %789 = vadd.xlane.f32.xlu0 %v788
        %v790 = vpop.xlane.xlu0 %789
        %v791 = vsel %vm373, %v769, 0.0
        %792 = vadd.xlane.f32.xlu0 %v791
        %v793 = vpop.xlane.xlu0 %792
        %v794 = vrcp.pop %v772
        %v795 = vrcp.pop %v775
        %v796 = vrcp.pop %v778
        %v797 = vrcp.pop %v781
        %v798 = vrcp.pop %v784
        %v799 = vrcp.pop %v787
        %v800 = vrcp.pop %v790
        %v801 = vrcp.pop %v793
        %v802 = vmul.f32 %v755, %v794
        %v803 = vmul.f32 %v757, %v795
        %v804 = vmul.f32 %v759, %v796
        %v805 = vmul.f32 %v761, %v797
        %v806 = vmul.f32 %v763, %v798
        %v807 = vmul.f32 %v765, %v799
        %v808 = vmul.f32 %v767, %v800
        %v809 = vmul.f32 %v769, %v801
        %v811 = vsel %vm373, %v359, 0
        %v814 = vsel %vm373, %v360, 0
        %v817 = vsel %vm373, %v361, 0
        %819 = vmatprep.subr.mxu0 0.0
        %820 = vmatpush1.msra.mxu0 %v351
        %821 = vmatprep.subr.mxu0 0.0
        %822 = vmatpush1.msra.mxu0 %v352
        %823 = vmatprep.subr.mxu0 0.0
        %824 = vmatpush1.msra.mxu0 0.0
        %825 = vmatprep.subr.mxu0 0.0
        %826 = vmatpush1.msra.mxu0 0.0
        %827 = vmatprep.subr.mxu0 0.0
        %828 = vmatpush1.msra.mxu0 0.0
        %829 = vmatprep.subr.mxu0 0.0
        %830 = vmatpush1.msra.mxu0 0.0
        %831 = vmatprep.subr.mxu0 0.0
        %832 = vmatpush1.msra.mxu0 0.0
        %833 = vmatprep.subr.mxu0 0.0
        %834 = vmatpush1.msra.mxu0 0.0
        %835 = vmatprep.subr.mxu0 0.0
        %836 = vmatpush1.msra.mxu0 0.0
        %837 = vmatprep.subr.mxu0 0.0
        %838 = vmatpush1.msra.mxu0 0.0
        %839 = vmatprep.subr.mxu0 0.0
        %840 = vmatpush1.msra.mxu0 0.0
        %841 = vmatprep.subr.mxu0 0.0
        %842 = vmatpush1.msra.mxu0 0.0
        %843 = vmatprep.subr.mxu0 0.0
        %844 = vmatpush1.msra.mxu0 0.0
        %845 = vmatprep.subr.mxu0 0.0
        %846 = vmatpush1.msra.mxu0 0.0
        %847 = vmatprep.subr.mxu0 0.0
        %848 = vmatpush1.msra.mxu0 0.0
        %849 = vmatprep.subr.mxu0 0.0
        %850 = vmatpush1.msra.mxu0 0.0
        %851 = vmatprep.subr.mxu0 0.0
        %852 = vmatpush1.msra.mxu0 0.0
        %853 = vmatprep.subr.mxu0 0.0
        %854 = vmatpush1.msra.mxu0 0.0
        %855 = vmatprep.subr.mxu0 0.0
        %856 = vmatpush1.msra.mxu0 0.0
        %857 = vmatprep.subr.mxu0 0.0
        %858 = vmatpush1.msra.mxu0 0.0
        %859 = vmatprep.subr.mxu0 0.0
        %860 = vmatpush1.msra.mxu0 0.0
        %861 = vmatprep.subr.mxu0 0.0
        %862 = vmatpush1.msra.mxu0 0.0
        %863 = vmatprep.subr.mxu0 0.0
        %864 = vmatpush1.msra.mxu0 0.0
        %865 = vmatprep.subr.mxu0 0.0
        %866 = vmatpush1.msra.mxu0 0.0
        %867 = vmatprep.subr.mxu0 0.0
        %868 = vmatpush1.msra.mxu0 0.0
        %869 = vmatprep.subr.mxu0 0.0
        %870 = vmatpush1.msra.mxu0 0.0
        %871 = vmatprep.subr.mxu0 0.0
        %872 = vmatpush1.msra.mxu0 0.0
        %873 = vmatprep.subr.mxu0 0.0
        %874 = vmatpush1.msra.mxu0 0.0
        %875 = vmatprep.subr.mxu0 0.0
        %876 = vmatpush1.msra.mxu0 0.0
        %877 = vmatprep.subr.mxu0 0.0
        %878 = vmatpush1.msra.mxu0 0.0
        %879 = vmatprep.subr.mxu0 0.0
        %880 = vmatpush1.msra.mxu0 0.0
        %881 = vmatprep.subr.mxu0 0.0
        %882 = vmatpush1.msra.mxu0 0.0
        %883 = vmatprep.mubr.f32.mxu0 0.0
        %884 = vmatmul.mubr.f32.gmra.mrb[0].mxu0 %v811
        %v885 = vpop.f32.mrb[0].mxu0
        %v886 = vadd.f32 0.0, %v885
        %v887 = vpop.f32.mrb[0].mxu0
        %888 = vmatprep.mubr.f32.mxu0 0.0
        %889 = vmatmul.mubr.f32.gmra.mrb[0].mxu0 %v814
        %v890 = vpop.f32.mrb[0].mxu0
        %v891 = vadd.f32 0.0, %v890
        %v892 = vpop.f32.mrb[0].mxu0
        %893 = vmatprep.mubr.f32.mxu0 0.0
        %894 = vmatmul.mubr.f32.gmra.mrb[0].mxu0 %v817
        %v895 = vpop.f32.mrb[0].mxu0
        %v896 = vadd.f32 0.0, %v895
        %v897 = vpop.f32.mrb[0].mxu0
        %898 = vdwg.mxu0
        %899 = vmatprep.subr.mxu0 0.0
        %900 = vmatpush1.msra.mxu0 %v353
        %901 = vmatprep.subr.mxu0 0.0
        %902 = vmatpush1.msra.mxu0 %v354
        %903 = vmatprep.subr.mxu0 0.0
        %904 = vmatpush1.msra.mxu0 0.0
        %905 = vmatprep.subr.mxu0 0.0
        %906 = vmatpush1.msra.mxu0 0.0
        %907 = vmatprep.subr.mxu0 0.0
        %908 = vmatpush1.msra.mxu0 0.0
        %909 = vmatprep.subr.mxu0 0.0
        %910 = vmatpush1.msra.mxu0 0.0
        %911 = vmatprep.subr.mxu0 0.0
        %912 = vmatpush1.msra.mxu0 0.0
        %913 = vmatprep.subr.mxu0 0.0
        %914 = vmatpush1.msra.mxu0 0.0
        %915 = vmatprep.subr.mxu0 0.0
        %916 = vmatpush1.msra.mxu0 0.0
        %917 = vmatprep.subr.mxu0 0.0
        %918 = vmatpush1.msra.mxu0 0.0
        %919 = vmatprep.subr.mxu0 0.0
        %920 = vmatpush1.msra.mxu0 0.0
        %921 = vmatprep.subr.mxu0 0.0
        %922 = vmatpush1.msra.mxu0 0.0
        %923 = vmatprep.subr.mxu0 0.0
        %924 = vmatpush1.msra.mxu0 0.0
        %925 = vmatprep.subr.mxu0 0.0
        %926 = vmatpush1.msra.mxu0 0.0
        %927 = vmatprep.subr.mxu0 0.0
        %928 = vmatpush1.msra.mxu0 0.0
        %929 = vmatprep.subr.mxu0 0.0
        %930 = vmatpush1.msra.mxu0 0.0
        %931 = vmatprep.subr.mxu0 0.0
        %932 = vmatpush1.msra.mxu0 0.0
        %933 = vmatprep.subr.mxu0 0.0
        %934 = vmatpush1.msra.mxu0 0.0
        %935 = vmatprep.subr.mxu0 0.0
        %936 = vmatpush1.msra.mxu0 0.0
        %937 = vmatprep.subr.mxu0 0.0
        %938 = vmatpush1.msra.mxu0 0.0
        %939 = vmatprep.subr.mxu0 0.0
        %940 = vmatpush1.msra.mxu0 0.0
        %941 = vmatprep.subr.mxu0 0.0
        %942 = vmatpush1.msra.mxu0 0.0
        %943 = vmatprep.subr.mxu0 0.0
        %944 = vmatpush1.msra.mxu0 0.0
        %945 = vmatprep.subr.mxu0 0.0
        %946 = vmatpush1.msra.mxu0 0.0
        %947 = vmatprep.subr.mxu0 0.0
        %948 = vmatpush1.msra.mxu0 0.0
        %949 = vmatprep.subr.mxu0 0.0
        %950 = vmatpush1.msra.mxu0 0.0
        %951 = vmatprep.subr.mxu0 0.0
        %952 = vmatpush1.msra.mxu0 0.0
        %953 = vmatprep.subr.mxu0 0.0
        %954 = vmatpush1.msra.mxu0 0.0
        %955 = vmatprep.subr.mxu0 0.0
        %956 = vmatpush1.msra.mxu0 0.0
        %957 = vmatprep.subr.mxu0 0.0
        %958 = vmatpush1.msra.mxu0 0.0
        %959 = vmatprep.subr.mxu0 0.0
        %960 = vmatpush1.msra.mxu0 0.0
        %961 = vmatprep.subr.mxu0 0.0
        %962 = vmatpush1.msra.mxu0 0.0
        %963 = vmatprep.mubr.f32.mxu0 0.0
        %964 = vmatmul.mubr.f32.gmra.mrb[0].mxu0 %v811
        %v965 = vpop.f32.mrb[0].mxu0
        %v966 = vadd.f32 0.0, %v965
        %v967 = vpop.f32.mrb[0].mxu0
        %968 = vmatprep.mubr.f32.mxu0 0.0
        %969 = vmatmul.mubr.f32.gmra.mrb[0].mxu0 %v814
        %v970 = vpop.f32.mrb[0].mxu0
        %v971 = vadd.f32 0.0, %v970
        %v972 = vpop.f32.mrb[0].mxu0
        %973 = vmatprep.mubr.f32.mxu0 0.0
        %974 = vmatmul.mubr.f32.gmra.mrb[0].mxu0 %v817
        %v975 = vpop.f32.mrb[0].mxu0
        %v976 = vadd.f32 0.0, %v975
        %v977 = vpop.f32.mrb[0].mxu0
        %978 = vdwg.mxu0
        %979 = vmatprep.subr.mxu0 0.0
        %980 = vmatpush1.msra.mxu0 %v355
        %981 = vmatprep.subr.mxu0 0.0
        %982 = vmatpush1.msra.mxu0 %v356
        %983 = vmatprep.subr.mxu0 0.0
        %984 = vmatpush1.msra.mxu0 0.0
        %985 = vmatprep.subr.mxu0 0.0
        %986 = vmatpush1.msra.mxu0 0.0
        %987 = vmatprep.subr.mxu0 0.0
        %988 = vmatpush1.msra.mxu0 0.0
        %989 = vmatprep.subr.mxu0 0.0
        %990 = vmatpush1.msra.mxu0 0.0
        %991 = vmatprep.subr.mxu0 0.0
        %992 = vmatpush1.msra.mxu0 0.0
        %993 = vmatprep.subr.mxu0 0.0
        %994 = vmatpush1.msra.mxu0 0.0
        %995 = vmatprep.subr.mxu0 0.0
        %996 = vmatpush1.msra.mxu0 0.0
        %997 = vmatprep.subr.mxu0 0.0
        %998 = vmatpush1.msra.mxu0 0.0
        %999 = vmatprep.subr.mxu0 0.0
        %1000 = vmatpush1.msra.mxu0 0.0
        %1001 = vmatprep.subr.mxu0 0.0
        %1002 = vmatpush1.msra.mxu0 0.0
        %1003 = vmatprep.subr.mxu0 0.0
        %1004 = vmatpush1.msra.mxu0 0.0
        %1005 = vmatprep.subr.mxu0 0.0
        %1006 = vmatpush1.msra.mxu0 0.0
        %1007 = vmatprep.subr.mxu0 0.0
        %1008 = vmatpush1.msra.mxu0 0.0
        %1009 = vmatprep.subr.mxu0 0.0
        %1010 = vmatpush1.msra.mxu0 0.0
        %1011 = vmatprep.subr.mxu0 0.0
        %1012 = vmatpush1.msra.mxu0 0.0
        %1013 = vmatprep.subr.mxu0 0.0
        %1014 = vmatpush1.msra.mxu0 0.0
        %1015 = vmatprep.subr.mxu0 0.0
        %1016 = vmatpush1.msra.mxu0 0.0
        %1017 = vmatprep.subr.mxu0 0.0
        %1018 = vmatpush1.msra.mxu0 0.0
        %1019 = vmatprep.subr.mxu0 0.0
        %1020 = vmatpush1.msra.mxu0 0.0
        %1021 = vmatprep.subr.mxu0 0.0
        %1022 = vmatpush1.msra.mxu0 0.0
        %1023 = vmatprep.subr.mxu0 0.0
        %1024 = vmatpush1.msra.mxu0 0.0
        %1025 = vmatprep.subr.mxu0 0.0
        %1026 = vmatpush1.msra.mxu0 0.0
        %1027 = vmatprep.subr.mxu0 0.0
        %1028 = vmatpush1.msra.mxu0 0.0
        %1029 = vmatprep.subr.mxu0 0.0
        %1030 = vmatpush1.msra.mxu0 0.0
        %1031 = vmatprep.subr.mxu0 0.0
        %1032 = vmatpush1.msra.mxu0 0.0
        %1033 = vmatprep.subr.mxu0 0.0
        %1034 = vmatpush1.msra.mxu0 0.0
        %1035 = vmatprep.subr.mxu0 0.0
        %1036 = vmatpush1.msra.mxu0 0.0
        %1037 = vmatprep.subr.mxu0 0.0
        %1038 = vmatpush1.msra.mxu0 0.0
        %1039 = vmatprep.subr.mxu0 0.0
        %1040 = vmatpush1.msra.mxu0 0.0
        %1041 = vmatprep.subr.mxu0 0.0
        %1042 = vmatpush1.msra.mxu0 0.0
        %1043 = vmatprep.mubr.f32.mxu0 0.0
        %1044 = vmatmul.mubr.f32.gmra.mrb[0].mxu0 %v811
        %v1045 = vpop.f32.mrb[0].mxu0
        %v1046 = vadd.f32 0.0, %v1045
        %v1047 = vpop.f32.mrb[0].mxu0
        %1048 = vmatprep.mubr.f32.mxu0 0.0
        %1049 = vmatmul.mubr.f32.gmra.mrb[0].mxu0 %v814
        %v1050 = vpop.f32.mrb[0].mxu0
        %v1051 = vadd.f32 0.0, %v1050
        %v1052 = vpop.f32.mrb[0].mxu0
        %1053 = vmatprep.mubr.f32.mxu0 0.0
        %1054 = vmatmul.mubr.f32.gmra.mrb[0].mxu0 %v817
        %v1055 = vpop.f32.mrb[0].mxu0
        %v1056 = vadd.f32 0.0, %v1055
        %v1057 = vpop.f32.mrb[0].mxu0
        %1058 = vdwg.mxu0
        %1059 = vmatprep.subr.mxu0 0.0
        %1060 = vmatpush1.msra.mxu0 %v357
        %1061 = vmatprep.subr.mxu0 0.0
        %1062 = vmatpush1.msra.mxu0 %v358
        %1063 = vmatprep.subr.mxu0 0.0
        %1064 = vmatpush1.msra.mxu0 0.0
        %1065 = vmatprep.subr.mxu0 0.0
        %1066 = vmatpush1.msra.mxu0 0.0
        %1067 = vmatprep.subr.mxu0 0.0
        %1068 = vmatpush1.msra.mxu0 0.0
        %1069 = vmatprep.subr.mxu0 0.0
        %1070 = vmatpush1.msra.mxu0 0.0
        %1071 = vmatprep.subr.mxu0 0.0
        %1072 = vmatpush1.msra.mxu0 0.0
        %1073 = vmatprep.subr.mxu0 0.0
        %1074 = vmatpush1.msra.mxu0 0.0
        %1075 = vmatprep.subr.mxu0 0.0
        %1076 = vmatpush1.msra.mxu0 0.0
        %1077 = vmatprep.subr.mxu0 0.0
        %1078 = vmatpush1.msra.mxu0 0.0
        %1079 = vmatprep.subr.mxu0 0.0
        %1080 = vmatpush1.msra.mxu0 0.0
        %1081 = vmatprep.subr.mxu0 0.0
        %1082 = vmatpush1.msra.mxu0 0.0
        %1083 = vmatprep.subr.mxu0 0.0
        %1084 = vmatpush1.msra.mxu0 0.0
        %1085 = vmatprep.subr.mxu0 0.0
        %1086 = vmatpush1.msra.mxu0 0.0
        %1087 = vmatprep.subr.mxu0 0.0
        %1088 = vmatpush1.msra.mxu0 0.0
        %1089 = vmatprep.subr.mxu0 0.0
        %1090 = vmatpush1.msra.mxu0 0.0
        %1091 = vmatprep.subr.mxu0 0.0
        %1092 = vmatpush1.msra.mxu0 0.0
        %1093 = vmatprep.subr.mxu0 0.0
        %1094 = vmatpush1.msra.mxu0 0.0
        %1095 = vmatprep.subr.mxu0 0.0
        %1096 = vmatpush1.msra.mxu0 0.0
        %1097 = vmatprep.subr.mxu0 0.0
        %1098 = vmatpush1.msra.mxu0 0.0
        %1099 = vmatprep.subr.mxu0 0.0
        %1100 = vmatpush1.msra.mxu0 0.0
        %1101 = vmatprep.subr.mxu0 0.0
        %1102 = vmatpush1.msra.mxu0 0.0
        %1103 = vmatprep.subr.mxu0 0.0
        %1104 = vmatpush1.msra.mxu0 0.0
        %1105 = vmatprep.subr.mxu0 0.0
        %1106 = vmatpush1.msra.mxu0 0.0
        %1107 = vmatprep.subr.mxu0 0.0
        %1108 = vmatpush1.msra.mxu0 0.0
        %1109 = vmatprep.subr.mxu0 0.0
        %1110 = vmatpush1.msra.mxu0 0.0
        %1111 = vmatprep.subr.mxu0 0.0
        %1112 = vmatpush1.msra.mxu0 0.0
        %1113 = vmatprep.subr.mxu0 0.0
        %1114 = vmatpush1.msra.mxu0 0.0
        %1115 = vmatprep.subr.mxu0 0.0
        %1116 = vmatpush1.msra.mxu0 0.0
        %1117 = vmatprep.subr.mxu0 0.0
        %1118 = vmatpush1.msra.mxu0 0.0
        %1119 = vmatprep.subr.mxu0 0.0
        %1120 = vmatpush1.msra.mxu0 0.0
        %1121 = vmatprep.subr.mxu0 0.0
        %1122 = vmatpush1.msra.mxu0 0.0
        %1123 = vmatprep.mubr.f32.mxu0 0.0
        %1124 = vmatmul.mubr.f32.gmra.mrb[0].mxu0 %v811
        %v1125 = vpop.f32.mrb[0].mxu0
        %v1126 = vadd.f32 0.0, %v1125
        %v1127 = vpop.f32.mrb[0].mxu0
        %1128 = vmatprep.mubr.f32.mxu0 0.0
        %1129 = vmatmul.mubr.f32.gmra.mrb[0].mxu0 %v814
        %v1130 = vpop.f32.mrb[0].mxu0
        %v1131 = vadd.f32 0.0, %v1130
        %v1132 = vpop.f32.mrb[0].mxu0
        %1133 = vmatprep.mubr.f32.mxu0 0.0
        %1134 = vmatmul.mubr.f32.gmra.mrb[0].mxu0 %v817
        %v1135 = vpop.f32.mrb[0].mxu0
        %v1136 = vadd.f32 0.0, %v1135
        %v1137 = vpop.f32.mrb[0].mxu0
        %1138 = vdwg.mxu0
        %v1140 = vsel %vm373, %v886, 0
        %v1143 = vsel %vm373, %v891, 0
        %v1146 = vsel %vm373, %v896, 0
        %v1149 = vsel %vm373, %v362, 0
        %v1152 = vsel %vm373, %v363, 0
        %v1155 = vsel %vm373, %v364, 0
        %1157 = vmatprep.subr.mxu0 0.0
        %1158 = vmatpush1.xpose.msra.mxu0 %v1149
        %1159 = vmatprep.subr.mxu0 0.0
        %1160 = vmatpush1.xpose.msra.mxu0 %v1152
        %1161 = vmatprep.subr.mxu0 0.0
        %1162 = vmatpush1.xpose.msra.mxu0 %v1155
        %1163 = vmatprep.subr.mxu0 0.0
        %1164 = vmatpush1.xpose.msra.mxu0 0.0
        %1165 = vmatprep.subr.mxu0 0.0
        %1166 = vmatpush1.xpose.msra.mxu0 0.0
        %1167 = vmatprep.subr.mxu0 0.0
        %1168 = vmatpush1.xpose.msra.mxu0 0.0
        %1169 = vmatprep.subr.mxu0 0.0
        %1170 = vmatpush1.xpose.msra.mxu0 0.0
        %1171 = vmatprep.subr.mxu0 0.0
        %1172 = vmatpush1.xpose.msra.mxu0 0.0
        %1173 = vmatprep.subr.mxu0 0.0
        %1174 = vmatpush1.xpose.msra.mxu0 0.0
        %1175 = vmatprep.subr.mxu0 0.0
        %1176 = vmatpush1.xpose.msra.mxu0 0.0
        %1177 = vmatprep.subr.mxu0 0.0
        %1178 = vmatpush1.xpose.msra.mxu0 0.0
        %1179 = vmatprep.subr.mxu0 0.0
        %1180 = vmatpush1.xpose.msra.mxu0 0.0
        %1181 = vmatprep.subr.mxu0 0.0
        %1182 = vmatpush1.xpose.msra.mxu0 0.0
        %1183 = vmatprep.subr.mxu0 0.0
        %1184 = vmatpush1.xpose.msra.mxu0 0.0
        %1185 = vmatprep.subr.mxu0 0.0
        %1186 = vmatpush1.xpose.msra.mxu0 0.0
        %1187 = vmatprep.subr.mxu0 0.0
        %1188 = vmatpush1.xpose.msra.mxu0 0.0
        %1189 = vmatprep.subr.mxu0 0.0
        %1190 = vmatpush1.xpose.msra.mxu0 0.0
        %1191 = vmatprep.subr.mxu0 0.0
        %1192 = vmatpush1.xpose.msra.mxu0 0.0
        %1193 = vmatprep.subr.mxu0 0.0
        %1194 = vmatpush1.xpose.msra.mxu0 0.0
        %1195 = vmatprep.subr.mxu0 0.0
        %1196 = vmatpush1.xpose.msra.mxu0 0.0
        %1197 = vmatprep.subr.mxu0 0.0
        %1198 = vmatpush1.xpose.msra.mxu0 0.0
        %1199 = vmatprep.subr.mxu0 0.0
        %1200 = vmatpush1.xpose.msra.mxu0 0.0
        %1201 = vmatprep.subr.mxu0 0.0
        %1202 = vmatpush1.xpose.msra.mxu0 0.0
        %1203 = vmatprep.subr.mxu0 0.0
        %1204 = vmatpush1.xpose.msra.mxu0 0.0
        %1205 = vmatprep.subr.mxu0 0.0
        %1206 = vmatpush1.xpose.msra.mxu0 0.0
        %1207 = vmatprep.subr.mxu0 0.0
        %1208 = vmatpush1.xpose.msra.mxu0 0.0
        %1209 = vmatprep.subr.mxu0 0.0
        %1210 = vmatpush1.xpose.msra.mxu0 0.0
        %1211 = vmatprep.subr.mxu0 0.0
        %1212 = vmatpush1.xpose.msra.mxu0 0.0
        %1213 = vmatprep.subr.mxu0 0.0
        %1214 = vmatpush1.xpose.msra.mxu0 0.0
        %1215 = vmatprep.subr.mxu0 0.0
        %1216 = vmatpush1.xpose.msra.mxu0 0.0
        %1217 = vmatprep.subr.mxu0 0.0
        %1218 = vmatpush1.xpose.msra.mxu0 0.0
        %1219 = vmatprep.subr.mxu0 0.0
        %1220 = vmatpush1.xpose.msra.mxu0 0.0
        %1221 = vmatprep.mubr.f32.mxu0 0.0
        %1222 = vmatmul.mubr.f32.gmra.mrb[0].mxu0 %v1140
        %v1223 = vpop.f32.mrb[0].mxu0
        %v1224 = vadd.f32 0.0, %v1223
        %v1225 = vpop.f32.mrb[0].mxu0
        %1226 = vmatprep.mubr.f32.mxu0 0.0
        %1227 = vmatmul.mubr.f32.gmra.mrb[0].mxu0 %v1143
        %v1228 = vpop.f32.mrb[0].mxu0
        %v1229 = vadd.f32 0.0, %v1228
        %v1230 = vpop.f32.mrb[0].mxu0
        %1231 = vmatprep.mubr.f32.mxu0 0.0
        %1232 = vmatmul.mubr.f32.gmra.mrb[0].mxu0 %v1146
        %v1233 = vpop.f32.mrb[0].mxu0
        %v1234 = vadd.f32 0.0, %v1233
        %v1235 = vpop.f32.mrb[0].mxu0
        %1236 = vdwg.mxu0
        %v1238 = vsel %vm373, %v966, 0
        %v1241 = vsel %vm373, %v971, 0
        %v1244 = vsel %vm373, %v976, 0
        %1246 = vmatprep.subr.mxu0 0.0
        %1247 = vmatpush1.xpose.msra.mxu0 %v1149
        %1248 = vmatprep.subr.mxu0 0.0
        %1249 = vmatpush1.xpose.msra.mxu0 %v1152
        %1250 = vmatprep.subr.mxu0 0.0
        %1251 = vmatpush1.xpose.msra.mxu0 %v1155
        %1252 = vmatprep.subr.mxu0 0.0
        %1253 = vmatpush1.xpose.msra.mxu0 0.0
        %1254 = vmatprep.subr.mxu0 0.0
        %1255 = vmatpush1.xpose.msra.mxu0 0.0
        %1256 = vmatprep.subr.mxu0 0.0
        %1257 = vmatpush1.xpose.msra.mxu0 0.0
        %1258 = vmatprep.subr.mxu0 0.0
        %1259 = vmatpush1.xpose.msra.mxu0 0.0
        %1260 = vmatprep.subr.mxu0 0.0
        %1261 = vmatpush1.xpose.msra.mxu0 0.0
        %1262 = vmatprep.subr.mxu0 0.0
        %1263 = vmatpush1.xpose.msra.mxu0 0.0
        %1264 = vmatprep.subr.mxu0 0.0
        %1265 = vmatpush1.xpose.msra.mxu0 0.0
        %1266 = vmatprep.subr.mxu0 0.0
        %1267 = vmatpush1.xpose.msra.mxu0 0.0
        %1268 = vmatprep.subr.mxu0 0.0
        %1269 = vmatpush1.xpose.msra.mxu0 0.0
        %1270 = vmatprep.subr.mxu0 0.0
        %1271 = vmatpush1.xpose.msra.mxu0 0.0
        %1272 = vmatprep.subr.mxu0 0.0
        %1273 = vmatpush1.xpose.msra.mxu0 0.0
        %1274 = vmatprep.subr.mxu0 0.0
        %1275 = vmatpush1.xpose.msra.mxu0 0.0
        %1276 = vmatprep.subr.mxu0 0.0
        %1277 = vmatpush1.xpose.msra.mxu0 0.0
        %1278 = vmatprep.subr.mxu0 0.0
        %1279 = vmatpush1.xpose.msra.mxu0 0.0
        %1280 = vmatprep.subr.mxu0 0.0
        %1281 = vmatpush1.xpose.msra.mxu0 0.0
        %1282 = vmatprep.subr.mxu0 0.0
        %1283 = vmatpush1.xpose.msra.mxu0 0.0
        %1284 = vmatprep.subr.mxu0 0.0
        %1285 = vmatpush1.xpose.msra.mxu0 0.0
        %1286 = vmatprep.subr.mxu0 0.0
        %1287 = vmatpush1.xpose.msra.mxu0 0.0
        %1288 = vmatprep.subr.mxu0 0.0
        %1289 = vmatpush1.xpose.msra.mxu0 0.0
        %1290 = vmatprep.subr.mxu0 0.0
        %1291 = vmatpush1.xpose.msra.mxu0 0.0
        %1292 = vmatprep.subr.mxu0 0.0
        %1293 = vmatpush1.xpose.msra.mxu0 0.0
        %1294 = vmatprep.subr.mxu0 0.0
        %1295 = vmatpush1.xpose.msra.mxu0 0.0
        %1296 = vmatprep.subr.mxu0 0.0
        %1297 = vmatpush1.xpose.msra.mxu0 0.0
        %1298 = vmatprep.subr.mxu0 0.0
        %1299 = vmatpush1.xpose.msra.mxu0 0.0
        %1300 = vmatprep.subr.mxu0 0.0
        %1301 = vmatpush1.xpose.msra.mxu0 0.0
        %1302 = vmatprep.subr.mxu0 0.0
        %1303 = vmatpush1.xpose.msra.mxu0 0.0
        %1304 = vmatprep.subr.mxu0 0.0
        %1305 = vmatpush1.xpose.msra.mxu0 0.0
        %1306 = vmatprep.subr.mxu0 0.0
        %1307 = vmatpush1.xpose.msra.mxu0 0.0
        %1308 = vmatprep.subr.mxu0 0.0
        %1309 = vmatpush1.xpose.msra.mxu0 0.0
        %1310 = vmatprep.mubr.f32.mxu0 0.0
        %1311 = vmatmul.mubr.f32.gmra.mrb[0].mxu0 %v1238
        %v1312 = vpop.f32.mrb[0].mxu0
        %v1313 = vadd.f32 0.0, %v1312
        %v1314 = vpop.f32.mrb[0].mxu0
        %1315 = vmatprep.mubr.f32.mxu0 0.0
        %1316 = vmatmul.mubr.f32.gmra.mrb[0].mxu0 %v1241
        %v1317 = vpop.f32.mrb[0].mxu0
        %v1318 = vadd.f32 0.0, %v1317
        %v1319 = vpop.f32.mrb[0].mxu0
        %1320 = vmatprep.mubr.f32.mxu0 0.0
        %1321 = vmatmul.mubr.f32.gmra.mrb[0].mxu0 %v1244
        %v1322 = vpop.f32.mrb[0].mxu0
        %v1323 = vadd.f32 0.0, %v1322
        %v1324 = vpop.f32.mrb[0].mxu0
        %1325 = vdwg.mxu0
        %v1327 = vsel %vm373, %v1046, 0
        %v1330 = vsel %vm373, %v1051, 0
        %v1333 = vsel %vm373, %v1056, 0
        %1335 = vmatprep.subr.mxu0 0.0
        %1336 = vmatpush1.xpose.msra.mxu0 %v1149
        %1337 = vmatprep.subr.mxu0 0.0
        %1338 = vmatpush1.xpose.msra.mxu0 %v1152
        %1339 = vmatprep.subr.mxu0 0.0
        %1340 = vmatpush1.xpose.msra.mxu0 %v1155
        %1341 = vmatprep.subr.mxu0 0.0
        %1342 = vmatpush1.xpose.msra.mxu0 0.0
        %1343 = vmatprep.subr.mxu0 0.0
        %1344 = vmatpush1.xpose.msra.mxu0 0.0
        %1345 = vmatprep.subr.mxu0 0.0
        %1346 = vmatpush1.xpose.msra.mxu0 0.0
        %1347 = vmatprep.subr.mxu0 0.0
        %1348 = vmatpush1.xpose.msra.mxu0 0.0
        %1349 = vmatprep.subr.mxu0 0.0
        %1350 = vmatpush1.xpose.msra.mxu0 0.0
        %1351 = vmatprep.subr.mxu0 0.0
        %1352 = vmatpush1.xpose.msra.mxu0 0.0
        %1353 = vmatprep.subr.mxu0 0.0
        %1354 = vmatpush1.xpose.msra.mxu0 0.0
        %1355 = vmatprep.subr.mxu0 0.0
        %1356 = vmatpush1.xpose.msra.mxu0 0.0
        %1357 = vmatprep.subr.mxu0 0.0
        %1358 = vmatpush1.xpose.msra.mxu0 0.0
        %1359 = vmatprep.subr.mxu0 0.0
        %1360 = vmatpush1.xpose.msra.mxu0 0.0
        %1361 = vmatprep.subr.mxu0 0.0
        %1362 = vmatpush1.xpose.msra.mxu0 0.0
        %1363 = vmatprep.subr.mxu0 0.0
        %1364 = vmatpush1.xpose.msra.mxu0 0.0
        %1365 = vmatprep.subr.mxu0 0.0
        %1366 = vmatpush1.xpose.msra.mxu0 0.0
        %1367 = vmatprep.subr.mxu0 0.0
        %1368 = vmatpush1.xpose.msra.mxu0 0.0
        %1369 = vmatprep.subr.mxu0 0.0
        %1370 = vmatpush1.xpose.msra.mxu0 0.0
        %1371 = vmatprep.subr.mxu0 0.0
        %1372 = vmatpush1.xpose.msra.mxu0 0.0
        %1373 = vmatprep.subr.mxu0 0.0
        %1374 = vmatpush1.xpose.msra.mxu0 0.0
        %1375 = vmatprep.subr.mxu0 0.0
        %1376 = vmatpush1.xpose.msra.mxu0 0.0
        %1377 = vmatprep.subr.mxu0 0.0
        %1378 = vmatpush1.xpose.msra.mxu0 0.0
        %1379 = vmatprep.subr.mxu0 0.0
        %1380 = vmatpush1.xpose.msra.mxu0 0.0
        %1381 = vmatprep.subr.mxu0 0.0
        %1382 = vmatpush1.xpose.msra.mxu0 0.0
        %1383 = vmatprep.subr.mxu0 0.0
        %1384 = vmatpush1.xpose.msra.mxu0 0.0
        %1385 = vmatprep.subr.mxu0 0.0
        %1386 = vmatpush1.xpose.msra.mxu0 0.0
        %1387 = vmatprep.subr.mxu0 0.0
        %1388 = vmatpush1.xpose.msra.mxu0 0.0
        %1389 = vmatprep.subr.mxu0 0.0
        %1390 = vmatpush1.xpose.msra.mxu0 0.0
        %1391 = vmatprep.subr.mxu0 0.0
        %1392 = vmatpush1.xpose.msra.mxu0 0.0
        %1393 = vmatprep.subr.mxu0 0.0
        %1394 = vmatpush1.xpose.msra.mxu0 0.0
        %1395 = vmatprep.subr.mxu0 0.0
        %1396 = vmatpush1.xpose.msra.mxu0 0.0
        %1397 = vmatprep.subr.mxu0 0.0
        %1398 = vmatpush1.xpose.msra.mxu0 0.0
        %1399 = vmatprep.mubr.f32.mxu0 0.0
        %1400 = vmatmul.mubr.f32.gmra.mrb[0].mxu0 %v1327
        %v1401 = vpop.f32.mrb[0].mxu0
        %v1402 = vadd.f32 0.0, %v1401
        %v1403 = vpop.f32.mrb[0].mxu0
        %1404 = vmatprep.mubr.f32.mxu0 0.0
        %1405 = vmatmul.mubr.f32.gmra.mrb[0].mxu0 %v1330
        %v1406 = vpop.f32.mrb[0].mxu0
        %v1407 = vadd.f32 0.0, %v1406
        %v1408 = vpop.f32.mrb[0].mxu0
        %1409 = vmatprep.mubr.f32.mxu0 0.0
        %1410 = vmatmul.mubr.f32.gmra.mrb[0].mxu0 %v1333
        %v1411 = vpop.f32.mrb[0].mxu0
        %v1412 = vadd.f32 0.0, %v1411
        %v1413 = vpop.f32.mrb[0].mxu0
        %1414 = vdwg.mxu0
        %v1416 = vsel %vm373, %v1126, 0
        %v1419 = vsel %vm373, %v1131, 0
        %v1422 = vsel %vm373, %v1136, 0
        %1424 = vmatprep.subr.mxu0 0.0
        %1425 = vmatpush1.xpose.msra.mxu0 %v1149
        %1426 = vmatprep.subr.mxu0 0.0
        %1427 = vmatpush1.xpose.msra.mxu0 %v1152
        %1428 = vmatprep.subr.mxu0 0.0
        %1429 = vmatpush1.xpose.msra.mxu0 %v1155
        %1430 = vmatprep.subr.mxu0 0.0
        %1431 = vmatpush1.xpose.msra.mxu0 0.0
        %1432 = vmatprep.subr.mxu0 0.0
        %1433 = vmatpush1.xpose.msra.mxu0 0.0
        %1434 = vmatprep.subr.mxu0 0.0
        %1435 = vmatpush1.xpose.msra.mxu0 0.0
        %1436 = vmatprep.subr.mxu0 0.0
        %1437 = vmatpush1.xpose.msra.mxu0 0.0
        %1438 = vmatprep.subr.mxu0 0.0
        %1439 = vmatpush1.xpose.msra.mxu0 0.0
        %1440 = vmatprep.subr.mxu0 0.0
        %1441 = vmatpush1.xpose.msra.mxu0 0.0
        %1442 = vmatprep.subr.mxu0 0.0
        %1443 = vmatpush1.xpose.msra.mxu0 0.0
        %1444 = vmatprep.subr.mxu0 0.0
        %1445 = vmatpush1.xpose.msra.mxu0 0.0
        %1446 = vmatprep.subr.mxu0 0.0
        %1447 = vmatpush1.xpose.msra.mxu0 0.0
        %1448 = vmatprep.subr.mxu0 0.0
        %1449 = vmatpush1.xpose.msra.mxu0 0.0
        %1450 = vmatprep.subr.mxu0 0.0
        %1451 = vmatpush1.xpose.msra.mxu0 0.0
        %1452 = vmatprep.subr.mxu0 0.0
        %1453 = vmatpush1.xpose.msra.mxu0 0.0
        %1454 = vmatprep.subr.mxu0 0.0
        %1455 = vmatpush1.xpose.msra.mxu0 0.0
        %1456 = vmatprep.subr.mxu0 0.0
        %1457 = vmatpush1.xpose.msra.mxu0 0.0
        %1458 = vmatprep.subr.mxu0 0.0
        %1459 = vmatpush1.xpose.msra.mxu0 0.0
        %1460 = vmatprep.subr.mxu0 0.0
        %1461 = vmatpush1.xpose.msra.mxu0 0.0
        %1462 = vmatprep.subr.mxu0 0.0
        %1463 = vmatpush1.xpose.msra.mxu0 0.0
        %1464 = vmatprep.subr.mxu0 0.0
        %1465 = vmatpush1.xpose.msra.mxu0 0.0
        %1466 = vmatprep.subr.mxu0 0.0
        %1467 = vmatpush1.xpose.msra.mxu0 0.0
        %1468 = vmatprep.subr.mxu0 0.0
        %1469 = vmatpush1.xpose.msra.mxu0 0.0
        %1470 = vmatprep.subr.mxu0 0.0
        %1471 = vmatpush1.xpose.msra.mxu0 0.0
        %1472 = vmatprep.subr.mxu0 0.0
        %1473 = vmatpush1.xpose.msra.mxu0 0.0
        %1474 = vmatprep.subr.mxu0 0.0
        %1475 = vmatpush1.xpose.msra.mxu0 0.0
        %1476 = vmatprep.subr.mxu0 0.0
        %1477 = vmatpush1.xpose.msra.mxu0 0.0
        %1478 = vmatprep.subr.mxu0 0.0
        %1479 = vmatpush1.xpose.msra.mxu0 0.0
        %1480 = vmatprep.subr.mxu0 0.0
        %1481 = vmatpush1.xpose.msra.mxu0 0.0
        %1482 = vmatprep.subr.mxu0 0.0
        %1483 = vmatpush1.xpose.msra.mxu0 0.0
        %1484 = vmatprep.subr.mxu0 0.0
        %1485 = vmatpush1.xpose.msra.mxu0 0.0
        %1486 = vmatprep.subr.mxu0 0.0
        %1487 = vmatpush1.xpose.msra.mxu0 0.0
        %1488 = vmatprep.mubr.f32.mxu0 0.0
        %1489 = vmatmul.mubr.f32.gmra.mrb[0].mxu0 %v1416
        %v1490 = vpop.f32.mrb[0].mxu0
        %v1491 = vadd.f32 0.0, %v1490
        %v1492 = vpop.f32.mrb[0].mxu0
        %1493 = vmatprep.mubr.f32.mxu0 0.0
        %1494 = vmatmul.mubr.f32.gmra.mrb[0].mxu0 %v1419
        %v1495 = vpop.f32.mrb[0].mxu0
        %v1496 = vadd.f32 0.0, %v1495
        %v1497 = vpop.f32.mrb[0].mxu0
        %1498 = vmatprep.mubr.f32.mxu0 0.0
        %1499 = vmatmul.mubr.f32.gmra.mrb[0].mxu0 %v1422
        %v1500 = vpop.f32.mrb[0].mxu0
        %v1501 = vadd.f32 0.0, %v1500
        %v1502 = vpop.f32.mrb[0].mxu0
        %1503 = vdwg.mxu0
        %v1504 = vld [vmem:[%s1] sm:$0x1]
        %v1505 = vld [vmem:[%s1 + $0x1] sm:$0x1]
        %v1506 = vld [vmem:[%s1 + $0x2] sm:$0x1]
        %v1507 = vld [vmem:[%s1 + $0x3] sm:$0x1]
        %v1512 = vlaneseq
        %v1513 = vshrl.u32 %v1512, 7
        %v1514 = vsub.s32 0, %v1513
        %v1515 = vrot.slane %v1504, %v1514
        %v1516 = vlaneseq
        %v1517 = vshrl.u32 %v1516, 7
        %v1518 = vsub.s32 0, %v1517
        %v1519 = vrot.slane %v1505, %v1518
        %v1520 = vlaneseq
        %v1521 = vshrl.u32 %v1520, 7
        %v1522 = vsub.s32 0, %v1521
        %v1523 = vrot.slane %v1506, %v1522
        %v1524 = vlaneseq
        %v1525 = vshrl.u32 %v1524, 7
        %v1526 = vsub.s32 0, %v1525
        %v1527 = vrot.slane %v1507, %v1526
        %1528 = vset.pattern.permute.xlu0 0
        %1529 = vperm.xlu0 %1528, %v1515
        %v1530 = vpop.permute.xlu0 %1529
        %1532 = vset.pattern.permute.xlu0 0
        %1533 = vperm.xlu0 %1532, %v1519
        %v1534 = vpop.permute.xlu0 %1533
        %1536 = vset.pattern.permute.xlu0 0
        %1537 = vperm.xlu0 %1536, %v1523
        %v1538 = vpop.permute.xlu0 %1537
        %1540 = vset.pattern.permute.xlu0 0
        %1541 = vperm.xlu0 %1540, %v1527
        %v1542 = vpop.permute.xlu0 %1541
        %v1544 = vmul.f32 %v1224, %v1530
        %v1545 = vmul.f32 %v1229, %v1530
        %v1546 = vmul.f32 %v1313, %v1534
        %v1547 = vmul.f32 %v1318, %v1534
        %v1548 = vmul.f32 %v1402, %v1538
        %v1549 = vmul.f32 %v1407, %v1538
        %v1550 = vmul.f32 %v1491, %v1542
        %v1551 = vmul.f32 %v1496, %v1542
        %v1552 = vadd.f32 %v1544, 0.0
        %v1553 = vadd.f32 %v1545, 0.0
        %v1554 = vadd.f32 %v1546, 0.0
        %v1555 = vadd.f32 %v1547, 0.0
        %v1556 = vadd.f32 %v1548, 0.0
        %v1557 = vadd.f32 %v1549, 0.0
        %v1558 = vadd.f32 %v1550, 0.0
        %v1559 = vadd.f32 %v1551, 0.0
        %1560 = vset.pattern.permute.xlu0 1
        %1561 = vperm.xlu0 %1560, %v1515
        %v1562 = vpop.permute.xlu0 %1561
        %1564 = vset.pattern.permute.xlu0 1
        %1565 = vperm.xlu0 %1564, %v1519
        %v1566 = vpop.permute.xlu0 %1565
        %1568 = vset.pattern.permute.xlu0 1
        %1569 = vperm.xlu0 %1568, %v1523
        %v1570 = vpop.permute.xlu0 %1569
        %1572 = vset.pattern.permute.xlu0 1
        %1573 = vperm.xlu0 %1572, %v1527
        %v1574 = vpop.permute.xlu0 %1573
        %v1576 = vmul.f32 %v1224, %v1562
        %v1577 = vmul.f32 %v1229, %v1562
        %v1578 = vmul.f32 %v1313, %v1566
        %v1579 = vmul.f32 %v1318, %v1566
        %v1580 = vmul.f32 %v1402, %v1570
        %v1581 = vmul.f32 %v1407, %v1570
        %v1582 = vmul.f32 %v1491, %v1574
        %v1583 = vmul.f32 %v1496, %v1574
        %1592 = vrot.lane.b32.xlu0 %v1576, 127
        %v1593 = vpop.permute.xlu0 %1592
        %1594 = vrot.lane.b32.xlu0 %v1577, 127
        %v1595 = vpop.permute.xlu0 %1594
        %1596 = vrot.lane.b32.xlu0 %v1578, 127
        %v1597 = vpop.permute.xlu0 %1596
        %1598 = vrot.lane.b32.xlu0 %v1579, 127
        %v1599 = vpop.permute.xlu0 %1598
        %1600 = vrot.lane.b32.xlu0 %v1580, 127
        %v1601 = vpop.permute.xlu0 %1600
        %1602 = vrot.lane.b32.xlu0 %v1581, 127
        %v1603 = vpop.permute.xlu0 %1602
        %1604 = vrot.lane.b32.xlu0 %v1582, 127
        %v1605 = vpop.permute.xlu0 %1604
        %1606 = vrot.lane.b32.xlu0 %v1583, 127
        %v1607 = vpop.permute.xlu0 %1606
        %v1616 = vadd.f32 %v1552, %v1593
        %v1617 = vadd.f32 %v1553, %v1595
        %v1618 = vadd.f32 %v1554, %v1597
        %v1619 = vadd.f32 %v1555, %v1599
        %v1620 = vadd.f32 %v1556, %v1601
        %v1621 = vadd.f32 %v1557, %v1603
        %v1622 = vadd.f32 %v1558, %v1605
        %v1623 = vadd.f32 %v1559, %v1607
        %1624 = vset.pattern.permute.xlu0 2
        %1625 = vperm.xlu0 %1624, %v1515
        %v1626 = vpop.permute.xlu0 %1625
        %1628 = vset.pattern.permute.xlu0 2
        %1629 = vperm.xlu0 %1628, %v1519
        %v1630 = vpop.permute.xlu0 %1629
        %1632 = vset.pattern.permute.xlu0 2
        %1633 = vperm.xlu0 %1632, %v1523
        %v1634 = vpop.permute.xlu0 %1633
        %1636 = vset.pattern.permute.xlu0 2
        %1637 = vperm.xlu0 %1636, %v1527
        %v1638 = vpop.permute.xlu0 %1637
        %v1640 = vmul.f32 %v1224, %v1626
        %v1641 = vmul.f32 %v1229, %v1626
        %v1642 = vmul.f32 %v1313, %v1630
        %v1643 = vmul.f32 %v1318, %v1630
        %v1644 = vmul.f32 %v1402, %v1634
        %v1645 = vmul.f32 %v1407, %v1634
        %v1646 = vmul.f32 %v1491, %v1638
        %v1647 = vmul.f32 %v1496, %v1638
        %1656 = vrot.lane.b32.xlu0 %v1640, 126
        %v1657 = vpop.permute.xlu0 %1656
        %1658 = vrot.lane.b32.xlu0 %v1641, 126
        %v1659 = vpop.permute.xlu0 %1658
        %1660 = vrot.lane.b32.xlu0 %v1642, 126
        %v1661 = vpop.permute.xlu0 %1660
        %1662 = vrot.lane.b32.xlu0 %v1643, 126
        %v1663 = vpop.permute.xlu0 %1662
        %1664 = vrot.lane.b32.xlu0 %v1644, 126
        %v1665 = vpop.permute.xlu0 %1664
        %1666 = vrot.lane.b32.xlu0 %v1645, 126
        %v1667 = vpop.permute.xlu0 %1666
        %1668 = vrot.lane.b32.xlu0 %v1646, 126
        %v1669 = vpop.permute.xlu0 %1668
        %1670 = vrot.lane.b32.xlu0 %v1647, 126
        %v1671 = vpop.permute.xlu0 %1670
        %v1680 = vadd.f32 %v1616, %v1657
        %v1681 = vadd.f32 %v1617, %v1659
        %v1682 = vadd.f32 %v1618, %v1661
        %v1683 = vadd.f32 %v1619, %v1663
        %v1684 = vadd.f32 %v1620, %v1665
        %v1685 = vadd.f32 %v1621, %v1667
        %v1686 = vadd.f32 %v1622, %v1669
        %v1687 = vadd.f32 %v1623, %v1671
        %1688 = vset.pattern.permute.xlu0 3
        %1689 = vperm.xlu0 %1688, %v1515
        %v1690 = vpop.permute.xlu0 %1689
        %1692 = vset.pattern.permute.xlu0 3
        %1693 = vperm.xlu0 %1692, %v1519
        %v1694 = vpop.permute.xlu0 %1693
        %1696 = vset.pattern.permute.xlu0 3
        %1697 = vperm.xlu0 %1696, %v1523
        %v1698 = vpop.permute.xlu0 %1697
        %1700 = vset.pattern.permute.xlu0 3
        %1701 = vperm.xlu0 %1700, %v1527
        %v1702 = vpop.permute.xlu0 %1701
        %v1704 = vmul.f32 %v1224, %v1690
        %v1705 = vmul.f32 %v1229, %v1690
        %v1706 = vmul.f32 %v1234, %v1690
        %v1707 = vmul.f32 %v1313, %v1694
        %v1708 = vmul.f32 %v1318, %v1694
        %v1709 = vmul.f32 %v1323, %v1694
        %v1710 = vmul.f32 %v1402, %v1698
        %v1711 = vmul.f32 %v1407, %v1698
        %v1712 = vmul.f32 %v1412, %v1698
        %v1713 = vmul.f32 %v1491, %v1702
        %v1714 = vmul.f32 %v1496, %v1702
        %v1715 = vmul.f32 %v1501, %v1702
        %vm1728 = vcmask 1046528
        %v1729 = vrot.slane %v1704, 1
        %v1730 = vrot.slane %v1705, 1
        %v1731 = vsel %vm1728, %v1729, %v1730
        %v1732 = vrot.slane %v1706, 1
        %v1733 = vsel %vm1728, %v1730, %v1732
        %v1734 = vrot.slane %v1707, 1
        %v1735 = vrot.slane %v1708, 1
        %v1736 = vsel %vm1728, %v1734, %v1735
        %v1737 = vrot.slane %v1709, 1
        %v1738 = vsel %vm1728, %v1735, %v1737
        %v1739 = vrot.slane %v1710, 1
        %v1740 = vrot.slane %v1711, 1
        %v1741 = vsel %vm1728, %v1739, %v1740
        %v1742 = vrot.slane %v1712, 1
        %v1743 = vsel %vm1728, %v1740, %v1742
        %v1744 = vrot.slane %v1713, 1
        %v1745 = vrot.slane %v1714, 1
        %v1746 = vsel %vm1728, %v1744, %v1745
        %v1747 = vrot.slane %v1715, 1
        %v1748 = vsel %vm1728, %v1745, %v1747
        %v1757 = vadd.f32 %v1680, %v1731
        %v1758 = vadd.f32 %v1681, %v1733
        %v1759 = vadd.f32 %v1682, %v1736
        %v1760 = vadd.f32 %v1683, %v1738
        %v1761 = vadd.f32 %v1684, %v1741
        %v1762 = vadd.f32 %v1685, %v1743
        %v1763 = vadd.f32 %v1686, %v1746
        %v1764 = vadd.f32 %v1687, %v1748
        %1765 = vset.pattern.permute.xlu0 4
        %1766 = vperm.xlu0 %1765, %v1515
        %v1767 = vpop.permute.xlu0 %1766
        %1769 = vset.pattern.permute.xlu0 4
        %1770 = vperm.xlu0 %1769, %v1519
        %v1771 = vpop.permute.xlu0 %1770
        %1773 = vset.pattern.permute.xlu0 4
        %1774 = vperm.xlu0 %1773, %v1523
        %v1775 = vpop.permute.xlu0 %1774
        %1777 = vset.pattern.permute.xlu0 4
        %1778 = vperm.xlu0 %1777, %v1527
        %v1779 = vpop.permute.xlu0 %1778
        %v1781 = vmul.f32 %v1224, %v1767
        %v1782 = vmul.f32 %v1229, %v1767
        %v1783 = vmul.f32 %v1234, %v1767
        %v1784 = vmul.f32 %v1313, %v1771
        %v1785 = vmul.f32 %v1318, %v1771
        %v1786 = vmul.f32 %v1323, %v1771
        %v1787 = vmul.f32 %v1402, %v1775
        %v1788 = vmul.f32 %v1407, %v1775
        %v1789 = vmul.f32 %v1412, %v1775
        %v1790 = vmul.f32 %v1491, %v1779
        %v1791 = vmul.f32 %v1496, %v1779
        %v1792 = vmul.f32 %v1501, %v1779
        %v1805 = vrot.slane %v1781, 1
        %v1806 = vrot.slane %v1782, 1
        %v1807 = vsel %vm1728, %v1805, %v1806
        %v1808 = vrot.slane %v1783, 1
        %v1809 = vsel %vm1728, %v1806, %v1808
        %v1810 = vrot.slane %v1784, 1
        %v1811 = vrot.slane %v1785, 1
        %v1812 = vsel %vm1728, %v1810, %v1811
        %v1813 = vrot.slane %v1786, 1
        %v1814 = vsel %vm1728, %v1811, %v1813
        %v1815 = vrot.slane %v1787, 1
        %v1816 = vrot.slane %v1788, 1
        %v1817 = vsel %vm1728, %v1815, %v1816
        %v1818 = vrot.slane %v1789, 1
        %v1819 = vsel %vm1728, %v1816, %v1818
        %v1820 = vrot.slane %v1790, 1
        %v1821 = vrot.slane %v1791, 1
        %v1822 = vsel %vm1728, %v1820, %v1821
        %v1823 = vrot.slane %v1792, 1
        %v1824 = vsel %vm1728, %v1821, %v1823
        %1825 = vrot.lane.b32.xlu0 %v1807, 127
        %v1826 = vpop.permute.xlu0 %1825
        %1827 = vrot.lane.b32.xlu0 %v1809, 127
        %v1828 = vpop.permute.xlu0 %1827
        %1829 = vrot.lane.b32.xlu0 %v1812, 127
        %v1830 = vpop.permute.xlu0 %1829
        %1831 = vrot.lane.b32.xlu0 %v1814, 127
        %v1832 = vpop.permute.xlu0 %1831
        %1833 = vrot.lane.b32.xlu0 %v1817, 127
        %v1834 = vpop.permute.xlu0 %1833
        %1835 = vrot.lane.b32.xlu0 %v1819, 127
        %v1836 = vpop.permute.xlu0 %1835
        %1837 = vrot.lane.b32.xlu0 %v1822, 127
        %v1838 = vpop.permute.xlu0 %1837
        %1839 = vrot.lane.b32.xlu0 %v1824, 127
        %v1840 = vpop.permute.xlu0 %1839
        %v1849 = vadd.f32 %v1757, %v1826
        %v1850 = vadd.f32 %v1758, %v1828
        %v1851 = vadd.f32 %v1759, %v1830
        %v1852 = vadd.f32 %v1760, %v1832
        %v1853 = vadd.f32 %v1761, %v1834
        %v1854 = vadd.f32 %v1762, %v1836
        %v1855 = vadd.f32 %v1763, %v1838
        %v1856 = vadd.f32 %v1764, %v1840
        %1857 = vset.pattern.permute.xlu0 5
        %1858 = vperm.xlu0 %1857, %v1515
        %v1859 = vpop.permute.xlu0 %1858
        %1861 = vset.pattern.permute.xlu0 5
        %1862 = vperm.xlu0 %1861, %v1519
        %v1863 = vpop.permute.xlu0 %1862
        %1865 = vset.pattern.permute.xlu0 5
        %1866 = vperm.xlu0 %1865, %v1523
        %v1867 = vpop.permute.xlu0 %1866
        %1869 = vset.pattern.permute.xlu0 5
        %1870 = vperm.xlu0 %1869, %v1527
        %v1871 = vpop.permute.xlu0 %1870
        %v1873 = vmul.f32 %v1224, %v1859
        %v1874 = vmul.f32 %v1229, %v1859
        %v1875 = vmul.f32 %v1234, %v1859
        %v1876 = vmul.f32 %v1313, %v1863
        %v1877 = vmul.f32 %v1318, %v1863
        %v1878 = vmul.f32 %v1323, %v1863
        %v1879 = vmul.f32 %v1402, %v1867
        %v1880 = vmul.f32 %v1407, %v1867
        %v1881 = vmul.f32 %v1412, %v1867
        %v1882 = vmul.f32 %v1491, %v1871
        %v1883 = vmul.f32 %v1496, %v1871
        %v1884 = vmul.f32 %v1501, %v1871
        %v1897 = vrot.slane %v1873, 1
        %v1898 = vrot.slane %v1874, 1
        %v1899 = vsel %vm1728, %v1897, %v1898
        %v1900 = vrot.slane %v1875, 1
        %v1901 = vsel %vm1728, %v1898, %v1900
        %v1902 = vrot.slane %v1876, 1
        %v1903 = vrot.slane %v1877, 1
        %v1904 = vsel %vm1728, %v1902, %v1903
        %v1905 = vrot.slane %v1878, 1
        %v1906 = vsel %vm1728, %v1903, %v1905
        %v1907 = vrot.slane %v1879, 1
        %v1908 = vrot.slane %v1880, 1
        %v1909 = vsel %vm1728, %v1907, %v1908
        %v1910 = vrot.slane %v1881, 1
        %v1911 = vsel %vm1728, %v1908, %v1910
        %v1912 = vrot.slane %v1882, 1
        %v1913 = vrot.slane %v1883, 1
        %v1914 = vsel %vm1728, %v1912, %v1913
        %v1915 = vrot.slane %v1884, 1
        %v1916 = vsel %vm1728, %v1913, %v1915
        %1917 = vrot.lane.b32.xlu0 %v1899, 126
        %v1918 = vpop.permute.xlu0 %1917
        %1919 = vrot.lane.b32.xlu0 %v1901, 126
        %v1920 = vpop.permute.xlu0 %1919
        %1921 = vrot.lane.b32.xlu0 %v1904, 126
        %v1922 = vpop.permute.xlu0 %1921
        %1923 = vrot.lane.b32.xlu0 %v1906, 126
        %v1924 = vpop.permute.xlu0 %1923
        %1925 = vrot.lane.b32.xlu0 %v1909, 126
        %v1926 = vpop.permute.xlu0 %1925
        %1927 = vrot.lane.b32.xlu0 %v1911, 126
        %v1928 = vpop.permute.xlu0 %1927
        %1929 = vrot.lane.b32.xlu0 %v1914, 126
        %v1930 = vpop.permute.xlu0 %1929
        %1931 = vrot.lane.b32.xlu0 %v1916, 126
        %v1932 = vpop.permute.xlu0 %1931
        %v1941 = vadd.f32 %v1849, %v1918
        %v1942 = vadd.f32 %v1850, %v1920
        %v1943 = vadd.f32 %v1851, %v1922
        %v1944 = vadd.f32 %v1852, %v1924
        %v1945 = vadd.f32 %v1853, %v1926
        %v1946 = vadd.f32 %v1854, %v1928
        %v1947 = vadd.f32 %v1855, %v1930
        %v1948 = vadd.f32 %v1856, %v1932
        %1949 = vset.pattern.permute.xlu0 6
        %1950 = vperm.xlu0 %1949, %v1515
        %v1951 = vpop.permute.xlu0 %1950
        %1953 = vset.pattern.permute.xlu0 6
        %1954 = vperm.xlu0 %1953, %v1519
        %v1955 = vpop.permute.xlu0 %1954
        %1957 = vset.pattern.permute.xlu0 6
        %1958 = vperm.xlu0 %1957, %v1523
        %v1959 = vpop.permute.xlu0 %1958
        %1961 = vset.pattern.permute.xlu0 6
        %1962 = vperm.xlu0 %1961, %v1527
        %v1963 = vpop.permute.xlu0 %1962
        %v1965 = vmul.f32 %v1224, %v1951
        %v1966 = vmul.f32 %v1229, %v1951
        %v1967 = vmul.f32 %v1234, %v1951
        %v1968 = vmul.f32 %v1313, %v1955
        %v1969 = vmul.f32 %v1318, %v1955
        %v1970 = vmul.f32 %v1323, %v1955
        %v1971 = vmul.f32 %v1402, %v1959
        %v1972 = vmul.f32 %v1407, %v1959
        %v1973 = vmul.f32 %v1412, %v1959
        %v1974 = vmul.f32 %v1491, %v1963
        %v1975 = vmul.f32 %v1496, %v1963
        %v1976 = vmul.f32 %v1501, %v1963
        %vm1989 = vcmask 1045504
        %v1990 = vrot.slane %v1965, 2
        %v1991 = vrot.slane %v1966, 2
        %v1992 = vsel %vm1989, %v1990, %v1991
        %v1993 = vrot.slane %v1967, 2
        %v1994 = vsel %vm1989, %v1991, %v1993
        %v1995 = vrot.slane %v1968, 2
        %v1996 = vrot.slane %v1969, 2
        %v1997 = vsel %vm1989, %v1995, %v1996
        %v1998 = vrot.slane %v1970, 2
        %v1999 = vsel %vm1989, %v1996, %v1998
        %v2000 = vrot.slane %v1971, 2
        %v2001 = vrot.slane %v1972, 2
        %v2002 = vsel %vm1989, %v2000, %v2001
        %v2003 = vrot.slane %v1973, 2
        %v2004 = vsel %vm1989, %v2001, %v2003
        %v2005 = vrot.slane %v1974, 2
        %v2006 = vrot.slane %v1975, 2
        %v2007 = vsel %vm1989, %v2005, %v2006
        %v2008 = vrot.slane %v1976, 2
        %v2009 = vsel %vm1989, %v2006, %v2008
        %v2018 = vadd.f32 %v1941, %v1992
        %v2019 = vadd.f32 %v1942, %v1994
        %v2020 = vadd.f32 %v1943, %v1997
        %v2021 = vadd.f32 %v1944, %v1999
        %v2022 = vadd.f32 %v1945, %v2002
        %v2023 = vadd.f32 %v1946, %v2004
        %v2024 = vadd.f32 %v1947, %v2007
        %v2025 = vadd.f32 %v1948, %v2009
        %2026 = vset.pattern.permute.xlu0 7
        %2027 = vperm.xlu0 %2026, %v1515
        %v2028 = vpop.permute.xlu0 %2027
        %2030 = vset.pattern.permute.xlu0 7
        %2031 = vperm.xlu0 %2030, %v1519
        %v2032 = vpop.permute.xlu0 %2031
        %2034 = vset.pattern.permute.xlu0 7
        %2035 = vperm.xlu0 %2034, %v1523
        %v2036 = vpop.permute.xlu0 %2035
        %2038 = vset.pattern.permute.xlu0 7
        %2039 = vperm.xlu0 %2038, %v1527
        %v2040 = vpop.permute.xlu0 %2039
        %v2042 = vmul.f32 %v1224, %v2028
        %v2043 = vmul.f32 %v1229, %v2028
        %v2044 = vmul.f32 %v1234, %v2028
        %v2045 = vmul.f32 %v1313, %v2032
        %v2046 = vmul.f32 %v1318, %v2032
        %v2047 = vmul.f32 %v1323, %v2032
        %v2048 = vmul.f32 %v1402, %v2036
        %v2049 = vmul.f32 %v1407, %v2036
        %v2050 = vmul.f32 %v1412, %v2036
        %v2051 = vmul.f32 %v1491, %v2040
        %v2052 = vmul.f32 %v1496, %v2040
        %v2053 = vmul.f32 %v1501, %v2040
        %v2066 = vrot.slane %v2042, 2
        %v2067 = vrot.slane %v2043, 2
        %v2068 = vsel %vm1989, %v2066, %v2067
        %v2069 = vrot.slane %v2044, 2
        %v2070 = vsel %vm1989, %v2067, %v2069
        %v2071 = vrot.slane %v2045, 2
        %v2072 = vrot.slane %v2046, 2
        %v2073 = vsel %vm1989, %v2071, %v2072
        %v2074 = vrot.slane %v2047, 2
        %v2075 = vsel %vm1989, %v2072, %v2074
        %v2076 = vrot.slane %v2048, 2
        %v2077 = vrot.slane %v2049, 2
        %v2078 = vsel %vm1989, %v2076, %v2077
        %v2079 = vrot.slane %v2050, 2
        %v2080 = vsel %vm1989, %v2077, %v2079
        %v2081 = vrot.slane %v2051, 2
        %v2082 = vrot.slane %v2052, 2
        %v2083 = vsel %vm1989, %v2081, %v2082
        %v2084 = vrot.slane %v2053, 2
        %v2085 = vsel %vm1989, %v2082, %v2084
        %2086 = vrot.lane.b32.xlu0 %v2068, 127
        %v2087 = vpop.permute.xlu0 %2086
        %2088 = vrot.lane.b32.xlu0 %v2070, 127
        %v2089 = vpop.permute.xlu0 %2088
        %2090 = vrot.lane.b32.xlu0 %v2073, 127
        %v2091 = vpop.permute.xlu0 %2090
        %2092 = vrot.lane.b32.xlu0 %v2075, 127
        %v2093 = vpop.permute.xlu0 %2092
        %2094 = vrot.lane.b32.xlu0 %v2078, 127
        %v2095 = vpop.permute.xlu0 %2094
        %2096 = vrot.lane.b32.xlu0 %v2080, 127
        %v2097 = vpop.permute.xlu0 %2096
        %2098 = vrot.lane.b32.xlu0 %v2083, 127
        %v2099 = vpop.permute.xlu0 %2098
        %2100 = vrot.lane.b32.xlu0 %v2085, 127
        %v2101 = vpop.permute.xlu0 %2100
        %v2110 = vadd.f32 %v2018, %v2087
        %v2111 = vadd.f32 %v2019, %v2089
        %v2112 = vadd.f32 %v2020, %v2091
        %v2113 = vadd.f32 %v2021, %v2093
        %v2114 = vadd.f32 %v2022, %v2095
        %v2115 = vadd.f32 %v2023, %v2097
        %v2116 = vadd.f32 %v2024, %v2099
        %v2117 = vadd.f32 %v2025, %v2101
        %2118 = vset.pattern.permute.xlu0 8
        %2119 = vperm.xlu0 %2118, %v1515
        %v2120 = vpop.permute.xlu0 %2119
        %2122 = vset.pattern.permute.xlu0 8
        %2123 = vperm.xlu0 %2122, %v1519
        %v2124 = vpop.permute.xlu0 %2123
        %2126 = vset.pattern.permute.xlu0 8
        %2127 = vperm.xlu0 %2126, %v1523
        %v2128 = vpop.permute.xlu0 %2127
        %2130 = vset.pattern.permute.xlu0 8
        %2131 = vperm.xlu0 %2130, %v1527
        %v2132 = vpop.permute.xlu0 %2131
        %v2134 = vmul.f32 %v1224, %v2120
        %v2135 = vmul.f32 %v1229, %v2120
        %v2136 = vmul.f32 %v1234, %v2120
        %v2137 = vmul.f32 %v1313, %v2124
        %v2138 = vmul.f32 %v1318, %v2124
        %v2139 = vmul.f32 %v1323, %v2124
        %v2140 = vmul.f32 %v1402, %v2128
        %v2141 = vmul.f32 %v1407, %v2128
        %v2142 = vmul.f32 %v1412, %v2128
        %v2143 = vmul.f32 %v1491, %v2132
        %v2144 = vmul.f32 %v1496, %v2132
        %v2145 = vmul.f32 %v1501, %v2132
        %v2158 = vrot.slane %v2134, 2
        %v2159 = vrot.slane %v2135, 2
        %v2160 = vsel %vm1989, %v2158, %v2159
        %v2161 = vrot.slane %v2136, 2
        %v2162 = vsel %vm1989, %v2159, %v2161
        %v2163 = vrot.slane %v2137, 2
        %v2164 = vrot.slane %v2138, 2
        %v2165 = vsel %vm1989, %v2163, %v2164
        %v2166 = vrot.slane %v2139, 2
        %v2167 = vsel %vm1989, %v2164, %v2166
        %v2168 = vrot.slane %v2140, 2
        %v2169 = vrot.slane %v2141, 2
        %v2170 = vsel %vm1989, %v2168, %v2169
        %v2171 = vrot.slane %v2142, 2
        %v2172 = vsel %vm1989, %v2169, %v2171
        %v2173 = vrot.slane %v2143, 2
        %v2174 = vrot.slane %v2144, 2
        %v2175 = vsel %vm1989, %v2173, %v2174
        %v2176 = vrot.slane %v2145, 2
        %v2177 = vsel %vm1989, %v2174, %v2176
        %2178 = vrot.lane.b32.xlu0 %v2160, 126
        %v2179 = vpop.permute.xlu0 %2178
        %2180 = vrot.lane.b32.xlu0 %v2162, 126
        %v2181 = vpop.permute.xlu0 %2180
        %2182 = vrot.lane.b32.xlu0 %v2165, 126
        %v2183 = vpop.permute.xlu0 %2182
        %2184 = vrot.lane.b32.xlu0 %v2167, 126
        %v2185 = vpop.permute.xlu0 %2184
        %2186 = vrot.lane.b32.xlu0 %v2170, 126
        %v2187 = vpop.permute.xlu0 %2186
        %2188 = vrot.lane.b32.xlu0 %v2172, 126
        %v2189 = vpop.permute.xlu0 %2188
        %2190 = vrot.lane.b32.xlu0 %v2175, 126
        %v2191 = vpop.permute.xlu0 %2190
        %2192 = vrot.lane.b32.xlu0 %v2177, 126
        %v2193 = vpop.permute.xlu0 %2192
        %v2202 = vadd.f32 %v2110, %v2179
        %v2203 = vadd.f32 %v2111, %v2181
        %v2204 = vadd.f32 %v2112, %v2183
        %v2205 = vadd.f32 %v2113, %v2185
        %v2206 = vadd.f32 %v2114, %v2187
        %v2207 = vadd.f32 %v2115, %v2189
        %v2208 = vadd.f32 %v2116, %v2191
        %v2209 = vadd.f32 %v2117, %v2193
        %v2211 = vsel %vm373, %v802, 0
        %v2214 = vsel %vm373, %v803, 0
        %2216 = vmatprep.subr.mxu0 0.0
        %2217 = vmatpush1.msra.mxu0 %v351
        %2218 = vmatprep.subr.mxu0 0.0
        %2219 = vmatpush1.msra.mxu0 %v352
        %2220 = vmatprep.subr.mxu0 0.0
        %2221 = vmatpush1.msra.mxu0 0.0
        %2222 = vmatprep.subr.mxu0 0.0
        %2223 = vmatpush1.msra.mxu0 0.0
        %2224 = vmatprep.subr.mxu0 0.0
        %2225 = vmatpush1.msra.mxu0 0.0
        %2226 = vmatprep.subr.mxu0 0.0
        %2227 = vmatpush1.msra.mxu0 0.0
        %2228 = vmatprep.subr.mxu0 0.0
        %2229 = vmatpush1.msra.mxu0 0.0
        %2230 = vmatprep.subr.mxu0 0.0
        %2231 = vmatpush1.msra.mxu0 0.0
        %2232 = vmatprep.subr.mxu0 0.0
        %2233 = vmatpush1.msra.mxu0 0.0
        %2234 = vmatprep.subr.mxu0 0.0
        %2235 = vmatpush1.msra.mxu0 0.0
        %2236 = vmatprep.subr.mxu0 0.0
        %2237 = vmatpush1.msra.mxu0 0.0
        %2238 = vmatprep.subr.mxu0 0.0
        %2239 = vmatpush1.msra.mxu0 0.0
        %2240 = vmatprep.subr.mxu0 0.0
        %2241 = vmatpush1.msra.mxu0 0.0
        %2242 = vmatprep.subr.mxu0 0.0
        %2243 = vmatpush1.msra.mxu0 0.0
        %2244 = vmatprep.subr.mxu0 0.0
        %2245 = vmatpush1.msra.mxu0 0.0
        %2246 = vmatprep.subr.mxu0 0.0
        %2247 = vmatpush1.msra.mxu0 0.0
        %2248 = vmatprep.subr.mxu0 0.0
        %2249 = vmatpush1.msra.mxu0 0.0
        %2250 = vmatprep.subr.mxu0 0.0
        %2251 = vmatpush1.msra.mxu0 0.0
        %2252 = vmatprep.subr.mxu0 0.0
        %2253 = vmatpush1.msra.mxu0 0.0
        %2254 = vmatprep.subr.mxu0 0.0
        %2255 = vmatpush1.msra.mxu0 0.0
        %2256 = vmatprep.subr.mxu0 0.0
        %2257 = vmatpush1.msra.mxu0 0.0
        %2258 = vmatprep.subr.mxu0 0.0
        %2259 = vmatpush1.msra.mxu0 0.0
        %2260 = vmatprep.subr.mxu0 0.0
        %2261 = vmatpush1.msra.mxu0 0.0
        %2262 = vmatprep.subr.mxu0 0.0
        %2263 = vmatpush1.msra.mxu0 0.0
        %2264 = vmatprep.subr.mxu0 0.0
        %2265 = vmatpush1.msra.mxu0 0.0
        %2266 = vmatprep.subr.mxu0 0.0
        %2267 = vmatpush1.msra.mxu0 0.0
        %2268 = vmatprep.subr.mxu0 0.0
        %2269 = vmatpush1.msra.mxu0 0.0
        %2270 = vmatprep.subr.mxu0 0.0
        %2271 = vmatpush1.msra.mxu0 0.0
        %2272 = vmatprep.subr.mxu0 0.0
        %2273 = vmatpush1.msra.mxu0 0.0
        %2274 = vmatprep.subr.mxu0 0.0
        %2275 = vmatpush1.msra.mxu0 0.0
        %2276 = vmatprep.subr.mxu0 0.0
        %2277 = vmatpush1.msra.mxu0 0.0
        %2278 = vmatprep.subr.mxu0 0.0
        %2279 = vmatpush1.msra.mxu0 0.0
        %2280 = vmatprep.mubr.f32.mxu0 0.0
        %2281 = vmatmul.mubr.f32.gmra.mrb[0].mxu0 %v2211
        %v2282 = vpop.f32.mrb[0].mxu0
        %v2283 = vadd.f32 %v2202, %v2282
        %v2284 = vpop.f32.mrb[0].mxu0
        %2285 = vmatprep.mubr.f32.mxu0 0.0
        %2286 = vmatmul.mubr.f32.gmra.mrb[0].mxu0 %v2214
        %v2287 = vpop.f32.mrb[0].mxu0
        %v2288 = vadd.f32 %v2203, %v2287
        %v2289 = vpop.f32.mrb[0].mxu0
        %2290 = vdwg.mxu0
        %v2292 = vsel %vm373, %v804, 0
        %v2295 = vsel %vm373, %v805, 0
        %2297 = vmatprep.subr.mxu0 0.0
        %2298 = vmatpush1.msra.mxu0 %v353
        %2299 = vmatprep.subr.mxu0 0.0
        %2300 = vmatpush1.msra.mxu0 %v354
        %2301 = vmatprep.subr.mxu0 0.0
        %2302 = vmatpush1.msra.mxu0 0.0
        %2303 = vmatprep.subr.mxu0 0.0
        %2304 = vmatpush1.msra.mxu0 0.0
        %2305 = vmatprep.subr.mxu0 0.0
        %2306 = vmatpush1.msra.mxu0 0.0
        %2307 = vmatprep.subr.mxu0 0.0
        %2308 = vmatpush1.msra.mxu0 0.0
        %2309 = vmatprep.subr.mxu0 0.0
        %2310 = vmatpush1.msra.mxu0 0.0
        %2311 = vmatprep.subr.mxu0 0.0
        %2312 = vmatpush1.msra.mxu0 0.0
        %2313 = vmatprep.subr.mxu0 0.0
        %2314 = vmatpush1.msra.mxu0 0.0
        %2315 = vmatprep.subr.mxu0 0.0
        %2316 = vmatpush1.msra.mxu0 0.0
        %2317 = vmatprep.subr.mxu0 0.0
        %2318 = vmatpush1.msra.mxu0 0.0
        %2319 = vmatprep.subr.mxu0 0.0
        %2320 = vmatpush1.msra.mxu0 0.0
        %2321 = vmatprep.subr.mxu0 0.0
        %2322 = vmatpush1.msra.mxu0 0.0
        %2323 = vmatprep.subr.mxu0 0.0
        %2324 = vmatpush1.msra.mxu0 0.0
        %2325 = vmatprep.subr.mxu0 0.0
        %2326 = vmatpush1.msra.mxu0 0.0
        %2327 = vmatprep.subr.mxu0 0.0
        %2328 = vmatpush1.msra.mxu0 0.0
        %2329 = vmatprep.subr.mxu0 0.0
        %2330 = vmatpush1.msra.mxu0 0.0
        %2331 = vmatprep.subr.mxu0 0.0
        %2332 = vmatpush1.msra.mxu0 0.0
        %2333 = vmatprep.subr.mxu0 0.0
        %2334 = vmatpush1.msra.mxu0 0.0
        %2335 = vmatprep.subr.mxu0 0.0
        %2336 = vmatpush1.msra.mxu0 0.0
        %2337 = vmatprep.subr.mxu0 0.0
        %2338 = vmatpush1.msra.mxu0 0.0
        %2339 = vmatprep.subr.mxu0 0.0
        %2340 = vmatpush1.msra.mxu0 0.0
        %2341 = vmatprep.subr.mxu0 0.0
        %2342 = vmatpush1.msra.mxu0 0.0
        %2343 = vmatprep.subr.mxu0 0.0
        %2344 = vmatpush1.msra.mxu0 0.0
        %2345 = vmatprep.subr.mxu0 0.0
        %2346 = vmatpush1.msra.mxu0 0.0
        %2347 = vmatprep.subr.mxu0 0.0
        %2348 = vmatpush1.msra.mxu0 0.0
        %2349 = vmatprep.subr.mxu0 0.0
        %2350 = vmatpush1.msra.mxu0 0.0
        %2351 = vmatprep.subr.mxu0 0.0
        %2352 = vmatpush1.msra.mxu0 0.0
        %2353 = vmatprep.subr.mxu0 0.0
        %2354 = vmatpush1.msra.mxu0 0.0
        %2355 = vmatprep.subr.mxu0 0.0
        %2356 = vmatpush1.msra.mxu0 0.0
        %2357 = vmatprep.subr.mxu0 0.0
        %2358 = vmatpush1.msra.mxu0 0.0
        %2359 = vmatprep.subr.mxu0 0.0
        %2360 = vmatpush1.msra.mxu0 0.0
        %2361 = vmatprep.mubr.f32.mxu0 0.0
        %2362 = vmatmul.mubr.f32.gmra.mrb[0].mxu0 %v2292
        %v2363 = vpop.f32.mrb[0].mxu0
        %v2364 = vadd.f32 %v2204, %v2363
        %v2365 = vpop.f32.mrb[0].mxu0
        %2366 = vmatprep.mubr.f32.mxu0 0.0
        %2367 = vmatmul.mubr.f32.gmra.mrb[0].mxu0 %v2295
        %v2368 = vpop.f32.mrb[0].mxu0
        %v2369 = vadd.f32 %v2205, %v2368
        %v2370 = vpop.f32.mrb[0].mxu0
        %2371 = vdwg.mxu0
        %v2373 = vsel %vm373, %v806, 0
        %v2376 = vsel %vm373, %v807, 0
        %2378 = vmatprep.subr.mxu0 0.0
        %2379 = vmatpush1.msra.mxu0 %v355
        %2380 = vmatprep.subr.mxu0 0.0
        %2381 = vmatpush1.msra.mxu0 %v356
        %2382 = vmatprep.subr.mxu0 0.0
        %2383 = vmatpush1.msra.mxu0 0.0
        %2384 = vmatprep.subr.mxu0 0.0
        %2385 = vmatpush1.msra.mxu0 0.0
        %2386 = vmatprep.subr.mxu0 0.0
        %2387 = vmatpush1.msra.mxu0 0.0
        %2388 = vmatprep.subr.mxu0 0.0
        %2389 = vmatpush1.msra.mxu0 0.0
        %2390 = vmatprep.subr.mxu0 0.0
        %2391 = vmatpush1.msra.mxu0 0.0
        %2392 = vmatprep.subr.mxu0 0.0
        %2393 = vmatpush1.msra.mxu0 0.0
        %2394 = vmatprep.subr.mxu0 0.0
        %2395 = vmatpush1.msra.mxu0 0.0
        %2396 = vmatprep.subr.mxu0 0.0
        %2397 = vmatpush1.msra.mxu0 0.0
        %2398 = vmatprep.subr.mxu0 0.0
        %2399 = vmatpush1.msra.mxu0 0.0
        %2400 = vmatprep.subr.mxu0 0.0
        %2401 = vmatpush1.msra.mxu0 0.0
        %2402 = vmatprep.subr.mxu0 0.0
        %2403 = vmatpush1.msra.mxu0 0.0
        %2404 = vmatprep.subr.mxu0 0.0
        %2405 = vmatpush1.msra.mxu0 0.0
        %2406 = vmatprep.subr.mxu0 0.0
        %2407 = vmatpush1.msra.mxu0 0.0
        %2408 = vmatprep.subr.mxu0 0.0
        %2409 = vmatpush1.msra.mxu0 0.0
        %2410 = vmatprep.subr.mxu0 0.0
        %2411 = vmatpush1.msra.mxu0 0.0
        %2412 = vmatprep.subr.mxu0 0.0
        %2413 = vmatpush1.msra.mxu0 0.0
        %2414 = vmatprep.subr.mxu0 0.0
        %2415 = vmatpush1.msra.mxu0 0.0
        %2416 = vmatprep.subr.mxu0 0.0
        %2417 = vmatpush1.msra.mxu0 0.0
        %2418 = vmatprep.subr.mxu0 0.0
        %2419 = vmatpush1.msra.mxu0 0.0
        %2420 = vmatprep.subr.mxu0 0.0
        %2421 = vmatpush1.msra.mxu0 0.0
        %2422 = vmatprep.subr.mxu0 0.0
        %2423 = vmatpush1.msra.mxu0 0.0
        %2424 = vmatprep.subr.mxu0 0.0
        %2425 = vmatpush1.msra.mxu0 0.0
        %2426 = vmatprep.subr.mxu0 0.0
        %2427 = vmatpush1.msra.mxu0 0.0
        %2428 = vmatprep.subr.mxu0 0.0
        %2429 = vmatpush1.msra.mxu0 0.0
        %2430 = vmatprep.subr.mxu0 0.0
        %2431 = vmatpush1.msra.mxu0 0.0
        %2432 = vmatprep.subr.mxu0 0.0
        %2433 = vmatpush1.msra.mxu0 0.0
        %2434 = vmatprep.subr.mxu0 0.0
        %2435 = vmatpush1.msra.mxu0 0.0
        %2436 = vmatprep.subr.mxu0 0.0
        %2437 = vmatpush1.msra.mxu0 0.0
        %2438 = vmatprep.subr.mxu0 0.0
        %2439 = vmatpush1.msra.mxu0 0.0
        %2440 = vmatprep.subr.mxu0 0.0
        %2441 = vmatpush1.msra.mxu0 0.0
        %2442 = vmatprep.mubr.f32.mxu0 0.0
        %2443 = vmatmul.mubr.f32.gmra.mrb[0].mxu0 %v2373
        %v2444 = vpop.f32.mrb[0].mxu0
        %v2445 = vadd.f32 %v2206, %v2444
        %v2446 = vpop.f32.mrb[0].mxu0
        %2447 = vmatprep.mubr.f32.mxu0 0.0
        %2448 = vmatmul.mubr.f32.gmra.mrb[0].mxu0 %v2376
        %v2449 = vpop.f32.mrb[0].mxu0
        %v2450 = vadd.f32 %v2207, %v2449
        %v2451 = vpop.f32.mrb[0].mxu0
        %2452 = vdwg.mxu0
        %v2454 = vsel %vm373, %v808, 0
        %v2457 = vsel %vm373, %v809, 0
        %2459 = vmatprep.subr.mxu0 0.0
        %2460 = vmatpush1.msra.mxu0 %v357
        %2461 = vmatprep.subr.mxu0 0.0
        %2462 = vmatpush1.msra.mxu0 %v358
        %2463 = vmatprep.subr.mxu0 0.0
        %2464 = vmatpush1.msra.mxu0 0.0
        %2465 = vmatprep.subr.mxu0 0.0
        %2466 = vmatpush1.msra.mxu0 0.0
        %2467 = vmatprep.subr.mxu0 0.0
        %2468 = vmatpush1.msra.mxu0 0.0
        %2469 = vmatprep.subr.mxu0 0.0
        %2470 = vmatpush1.msra.mxu0 0.0
        %2471 = vmatprep.subr.mxu0 0.0
        %2472 = vmatpush1.msra.mxu0 0.0
        %2473 = vmatprep.subr.mxu0 0.0
        %2474 = vmatpush1.msra.mxu0 0.0
        %2475 = vmatprep.subr.mxu0 0.0
        %2476 = vmatpush1.msra.mxu0 0.0
        %2477 = vmatprep.subr.mxu0 0.0
        %2478 = vmatpush1.msra.mxu0 0.0
        %2479 = vmatprep.subr.mxu0 0.0
        %2480 = vmatpush1.msra.mxu0 0.0
        %2481 = vmatprep.subr.mxu0 0.0
        %2482 = vmatpush1.msra.mxu0 0.0
        %2483 = vmatprep.subr.mxu0 0.0
        %2484 = vmatpush1.msra.mxu0 0.0
        %2485 = vmatprep.subr.mxu0 0.0
        %2486 = vmatpush1.msra.mxu0 0.0
        %2487 = vmatprep.subr.mxu0 0.0
        %2488 = vmatpush1.msra.mxu0 0.0
        %2489 = vmatprep.subr.mxu0 0.0
        %2490 = vmatpush1.msra.mxu0 0.0
        %2491 = vmatprep.subr.mxu0 0.0
        %2492 = vmatpush1.msra.mxu0 0.0
        %2493 = vmatprep.subr.mxu0 0.0
        %2494 = vmatpush1.msra.mxu0 0.0
        %2495 = vmatprep.subr.mxu0 0.0
        %2496 = vmatpush1.msra.mxu0 0.0
        %2497 = vmatprep.subr.mxu0 0.0
        %2498 = vmatpush1.msra.mxu0 0.0
        %2499 = vmatprep.subr.mxu0 0.0
        %2500 = vmatpush1.msra.mxu0 0.0
        %2501 = vmatprep.subr.mxu0 0.0
        %2502 = vmatpush1.msra.mxu0 0.0
        %2503 = vmatprep.subr.mxu0 0.0
        %2504 = vmatpush1.msra.mxu0 0.0
        %2505 = vmatprep.subr.mxu0 0.0
        %2506 = vmatpush1.msra.mxu0 0.0
        %2507 = vmatprep.subr.mxu0 0.0
        %2508 = vmatpush1.msra.mxu0 0.0
        %2509 = vmatprep.subr.mxu0 0.0
        %2510 = vmatpush1.msra.mxu0 0.0
        %2511 = vmatprep.subr.mxu0 0.0
        %2512 = vmatpush1.msra.mxu0 0.0
        %2513 = vmatprep.subr.mxu0 0.0
        %2514 = vmatpush1.msra.mxu0 0.0
        %2515 = vmatprep.subr.mxu0 0.0
        %2516 = vmatpush1.msra.mxu0 0.0
        %2517 = vmatprep.subr.mxu0 0.0
        %2518 = vmatpush1.msra.mxu0 0.0
        %2519 = vmatprep.subr.mxu0 0.0
        %2520 = vmatpush1.msra.mxu0 0.0
        %2521 = vmatprep.subr.mxu0 0.0
        %2522 = vmatpush1.msra.mxu0 0.0
        %2523 = vmatprep.mubr.f32.mxu0 0.0
        %2524 = vmatmul.mubr.f32.gmra.mrb[0].mxu0 %v2454
        %v2525 = vpop.f32.mrb[0].mxu0
        %v2526 = vadd.f32 %v2208, %v2525
        %v2527 = vpop.f32.mrb[0].mxu0
        %2528 = vmatprep.mubr.f32.mxu0 0.0
        %2529 = vmatmul.mubr.f32.gmra.mrb[0].mxu0 %v2457
        %v2530 = vpop.f32.mrb[0].mxu0
        %v2531 = vadd.f32 %v2209, %v2530
        %v2532 = vpop.f32.mrb[0].mxu0
        %2533 = vdwg.mxu0
        %v2534 = vld [vmem:[%s2] sm:$0x1]
        %v2535 = vld [vmem:[%s2 + $0x1] sm:$0x1]
        %v2536 = vld [vmem:[%s2 + $0x2] sm:$0x1]
        %v2537 = vld [vmem:[%s2 + $0x3] sm:$0x1]
        %v2542 = vlaneseq
        %v2543 = vshrl.u32 %v2542, 7
        %v2544 = vsub.s32 0, %v2543
        %v2545 = vrot.slane %v2534, %v2544
        %v2546 = vlaneseq
        %v2547 = vshrl.u32 %v2546, 7
        %v2548 = vsub.s32 0, %v2547
        %v2549 = vrot.slane %v2535, %v2548
        %v2550 = vlaneseq
        %v2551 = vshrl.u32 %v2550, 7
        %v2552 = vsub.s32 0, %v2551
        %v2553 = vrot.slane %v2536, %v2552
        %v2554 = vlaneseq
        %v2555 = vshrl.u32 %v2554, 7
        %v2556 = vsub.s32 0, %v2555
        %v2557 = vrot.slane %v2537, %v2556
        %2558 = vset.pattern.permute.xlu0 0
        %2559 = vperm.xlu0 %2558, %v2545
        %v2560 = vpop.permute.xlu0 %2559
        %2562 = vset.pattern.permute.xlu0 0
        %2563 = vperm.xlu0 %2562, %v2549
        %v2564 = vpop.permute.xlu0 %2563
        %2566 = vset.pattern.permute.xlu0 0
        %2567 = vperm.xlu0 %2566, %v2553
        %v2568 = vpop.permute.xlu0 %2567
        %2570 = vset.pattern.permute.xlu0 0
        %2571 = vperm.xlu0 %2570, %v2557
        %v2572 = vpop.permute.xlu0 %2571
        %v2574 = vadd.f32 %v2283, %v2560
        %v2575 = vadd.f32 %v2288, %v2560
        %v2576 = vadd.f32 %v2364, %v2564
        %v2577 = vadd.f32 %v2369, %v2564
        %v2578 = vadd.f32 %v2445, %v2568
        %v2579 = vadd.f32 %v2450, %v2568
        %v2580 = vadd.f32 %v2526, %v2572
        %v2581 = vadd.f32 %v2531, %v2572
        %v2582 = vld [vmem:[%s3] sm:$0x1]
        %v2583 = vld [vmem:[%s3 + $0x1] sm:$0x1]
        %v2584 = vld [vmem:[%s3 + $0x2] sm:$0x1]
        %v2585 = vld [vmem:[%s3 + $0x3] sm:$0x1]
        %v2590 = vlaneseq
        %v2591 = vshrl.u32 %v2590, 7
        %v2592 = vsub.s32 0, %v2591
        %v2593 = vrot.slane %v2582, %v2592
        %v2594 = vlaneseq
        %v2595 = vshrl.u32 %v2594, 7
        %v2596 = vsub.s32 0, %v2595
        %v2597 = vrot.slane %v2583, %v2596
        %v2598 = vlaneseq
        %v2599 = vshrl.u32 %v2598, 7
        %v2600 = vsub.s32 0, %v2599
        %v2601 = vrot.slane %v2584, %v2600
        %v2602 = vlaneseq
        %v2603 = vshrl.u32 %v2602, 7
        %v2604 = vsub.s32 0, %v2603
        %v2605 = vrot.slane %v2585, %v2604
        %2606 = vset.pattern.permute.xlu0 0
        %2607 = vperm.xlu0 %2606, %v2593
        %v2608 = vpop.permute.xlu0 %2607
        %2610 = vset.pattern.permute.xlu0 0
        %2611 = vperm.xlu0 %2610, %v2597
        %v2612 = vpop.permute.xlu0 %2611
        %2614 = vset.pattern.permute.xlu0 0
        %2615 = vperm.xlu0 %2614, %v2601
        %v2616 = vpop.permute.xlu0 %2615
        %2618 = vset.pattern.permute.xlu0 0
        %2619 = vperm.xlu0 %2618, %v2605
        %v2620 = vpop.permute.xlu0 %2619
        %v2622 = vmul.f32 %v2574, %v2608
        %v2623 = vmul.f32 %v2575, %v2608
        %v2624 = vmul.f32 %v2574, %v2612
        %v2625 = vmul.f32 %v2575, %v2612
        %v2626 = vmul.f32 %v2574, %v2616
        %v2627 = vmul.f32 %v2575, %v2616
        %v2628 = vmul.f32 %v2574, %v2620
        %v2629 = vmul.f32 %v2575, %v2620
        %v2630 = vadd.f32 %v2622, 0.0
        %v2631 = vadd.f32 %v2623, 0.0
        %v2632 = vadd.f32 %v2624, 0.0
        %v2633 = vadd.f32 %v2625, 0.0
        %v2634 = vadd.f32 %v2626, 0.0
        %v2635 = vadd.f32 %v2627, 0.0
        %v2636 = vadd.f32 %v2628, 0.0
        %v2637 = vadd.f32 %v2629, 0.0
        %2638 = vset.pattern.permute.xlu0 1
        %2639 = vperm.xlu0 %2638, %v2593
        %v2640 = vpop.permute.xlu0 %2639
        %2642 = vset.pattern.permute.xlu0 1
        %2643 = vperm.xlu0 %2642, %v2597
        %v2644 = vpop.permute.xlu0 %2643
        %2646 = vset.pattern.permute.xlu0 1
        %2647 = vperm.xlu0 %2646, %v2601
        %v2648 = vpop.permute.xlu0 %2647
        %2650 = vset.pattern.permute.xlu0 1
        %2651 = vperm.xlu0 %2650, %v2605
        %v2652 = vpop.permute.xlu0 %2651
        %v2654 = vmul.f32 %v2576, %v2640
        %v2655 = vmul.f32 %v2577, %v2640
        %v2656 = vmul.f32 %v2576, %v2644
        %v2657 = vmul.f32 %v2577, %v2644
        %v2658 = vmul.f32 %v2576, %v2648
        %v2659 = vmul.f32 %v2577, %v2648
        %v2660 = vmul.f32 %v2576, %v2652
        %v2661 = vmul.f32 %v2577, %v2652
        %v2662 = vadd.f32 %v2630, %v2654
        %v2663 = vadd.f32 %v2631, %v2655
        %v2664 = vadd.f32 %v2632, %v2656
        %v2665 = vadd.f32 %v2633, %v2657
        %v2666 = vadd.f32 %v2634, %v2658
        %v2667 = vadd.f32 %v2635, %v2659
        %v2668 = vadd.f32 %v2636, %v2660
        %v2669 = vadd.f32 %v2637, %v2661
        %2670 = vset.pattern.permute.xlu0 2
        %2671 = vperm.xlu0 %2670, %v2593
        %v2672 = vpop.permute.xlu0 %2671
        %2674 = vset.pattern.permute.xlu0 2
        %2675 = vperm.xlu0 %2674, %v2597
        %v2676 = vpop.permute.xlu0 %2675
        %2678 = vset.pattern.permute.xlu0 2
        %2679 = vperm.xlu0 %2678, %v2601
        %v2680 = vpop.permute.xlu0 %2679
        %2682 = vset.pattern.permute.xlu0 2
        %2683 = vperm.xlu0 %2682, %v2605
        %v2684 = vpop.permute.xlu0 %2683
        %v2686 = vmul.f32 %v2578, %v2672
        %v2687 = vmul.f32 %v2579, %v2672
        %v2688 = vmul.f32 %v2578, %v2676
        %v2689 = vmul.f32 %v2579, %v2676
        %v2690 = vmul.f32 %v2578, %v2680
        %v2691 = vmul.f32 %v2579, %v2680
        %v2692 = vmul.f32 %v2578, %v2684
        %v2693 = vmul.f32 %v2579, %v2684
        %v2694 = vadd.f32 %v2662, %v2686
        %v2695 = vadd.f32 %v2663, %v2687
        %v2696 = vadd.f32 %v2664, %v2688
        %v2697 = vadd.f32 %v2665, %v2689
        %v2698 = vadd.f32 %v2666, %v2690
        %v2699 = vadd.f32 %v2667, %v2691
        %v2700 = vadd.f32 %v2668, %v2692
        %v2701 = vadd.f32 %v2669, %v2693
        %2702 = vset.pattern.permute.xlu0 3
        %2703 = vperm.xlu0 %2702, %v2593
        %v2704 = vpop.permute.xlu0 %2703
        %2706 = vset.pattern.permute.xlu0 3
        %2707 = vperm.xlu0 %2706, %v2597
        %v2708 = vpop.permute.xlu0 %2707
        %2710 = vset.pattern.permute.xlu0 3
        %2711 = vperm.xlu0 %2710, %v2601
        %v2712 = vpop.permute.xlu0 %2711
        %2714 = vset.pattern.permute.xlu0 3
        %2715 = vperm.xlu0 %2714, %v2605
        %v2716 = vpop.permute.xlu0 %2715
        %v2718 = vmul.f32 %v2580, %v2704
        %v2719 = vmul.f32 %v2581, %v2704
        %v2720 = vmul.f32 %v2580, %v2708
        %v2721 = vmul.f32 %v2581, %v2708
        %v2722 = vmul.f32 %v2580, %v2712
        %v2723 = vmul.f32 %v2581, %v2712
        %v2724 = vmul.f32 %v2580, %v2716
        %v2725 = vmul.f32 %v2581, %v2716
        %v2726 = vadd.f32 %v2694, %v2718
        %v2727 = vadd.f32 %v2695, %v2719
        %v2728 = vadd.f32 %v2696, %v2720
        %v2729 = vadd.f32 %v2697, %v2721
        %v2730 = vadd.f32 %v2698, %v2722
        %v2731 = vadd.f32 %v2699, %v2723
        %v2732 = vadd.f32 %v2700, %v2724
        %v2733 = vadd.f32 %v2701, %v2725
        %v2734 = vld [vmem:[%s4] sm:$0x1]
        %v2735 = vld [vmem:[%s4 + $0x1] sm:$0x1]
        %v2736 = vld [vmem:[%s4 + $0x2] sm:$0x1]
        %v2737 = vld [vmem:[%s4 + $0x3] sm:$0x1]
        %v2742 = vlaneseq
        %v2743 = vshrl.u32 %v2742, 7
        %v2744 = vsub.s32 0, %v2743
        %v2745 = vrot.slane %v2734, %v2744
        %v2746 = vlaneseq
        %v2747 = vshrl.u32 %v2746, 7
        %v2748 = vsub.s32 0, %v2747
        %v2749 = vrot.slane %v2735, %v2748
        %v2750 = vlaneseq
        %v2751 = vshrl.u32 %v2750, 7
        %v2752 = vsub.s32 0, %v2751
        %v2753 = vrot.slane %v2736, %v2752
        %v2754 = vlaneseq
        %v2755 = vshrl.u32 %v2754, 7
        %v2756 = vsub.s32 0, %v2755
        %v2757 = vrot.slane %v2737, %v2756
        %2758 = vset.pattern.permute.xlu0 0
        %2759 = vperm.xlu0 %2758, %v2745
        %v2760 = vpop.permute.xlu0 %2759
        %2762 = vset.pattern.permute.xlu0 0
        %2763 = vperm.xlu0 %2762, %v2749
        %v2764 = vpop.permute.xlu0 %2763
        %2766 = vset.pattern.permute.xlu0 0
        %2767 = vperm.xlu0 %2766, %v2753
        %v2768 = vpop.permute.xlu0 %2767
        %2770 = vset.pattern.permute.xlu0 0
        %2771 = vperm.xlu0 %2770, %v2757
        %v2772 = vpop.permute.xlu0 %2771
        %v2774 = vadd.f32 %v2726, %v2760
        %v2775 = vadd.f32 %v2727, %v2760
        %v2776 = vadd.f32 %v2728, %v2764
        %v2777 = vadd.f32 %v2729, %v2764
        %v2778 = vadd.f32 %v2730, %v2768
        %v2779 = vadd.f32 %v2731, %v2768
        %v2780 = vadd.f32 %v2732, %v2772
        %v2781 = vadd.f32 %v2733, %v2772
        %v2782 = vmax.f32 %v2774, 0.0
        %v2783 = vmax.f32 %v2775, 0.0
        %v2784 = vmax.f32 %v2776, 0.0
        %v2785 = vmax.f32 %v2777, 0.0
        %v2786 = vmax.f32 %v2778, 0.0
        %v2787 = vmax.f32 %v2779, 0.0
        %v2788 = vmax.f32 %v2780, 0.0
        %v2789 = vmax.f32 %v2781, 0.0
        %2790 = vmatprep.subr.mxu0 0.0
        %2791 = vmatpush1.msra.mxu0 %v2782
        %2792 = vmatprep.subr.mxu0 0.0
        %2793 = vmatpush1.msra.mxu0 %v2783
        %2794 = vmatprep.subr.mxu0 0.0
        %2795 = vmatpush1.msra.mxu0 0.0
        %2796 = vmatprep.subr.mxu0 0.0
        %2797 = vmatpush1.msra.mxu0 0.0
        %2798 = vmatprep.subr.mxu0 0.0
        %2799 = vmatpush1.msra.mxu0 0.0
        %2800 = vmatprep.subr.mxu0 0.0
        %2801 = vmatpush1.msra.mxu0 0.0
        %2802 = vmatprep.subr.mxu0 0.0
        %2803 = vmatpush1.msra.mxu0 0.0
        %2804 = vmatprep.subr.mxu0 0.0
        %2805 = vmatpush1.msra.mxu0 0.0
        %2806 = vmatprep.subr.mxu0 0.0
        %2807 = vmatpush1.msra.mxu0 0.0
        %2808 = vmatprep.subr.mxu0 0.0
        %2809 = vmatpush1.msra.mxu0 0.0
        %2810 = vmatprep.subr.mxu0 0.0
        %2811 = vmatpush1.msra.mxu0 0.0
        %2812 = vmatprep.subr.mxu0 0.0
        %2813 = vmatpush1.msra.mxu0 0.0
        %2814 = vmatprep.subr.mxu0 0.0
        %2815 = vmatpush1.msra.mxu0 0.0
        %2816 = vmatprep.subr.mxu0 0.0
        %2817 = vmatpush1.msra.mxu0 0.0
        %2818 = vmatprep.subr.mxu0 0.0
        %2819 = vmatpush1.msra.mxu0 0.0
        %2820 = vmatprep.subr.mxu0 0.0
        %2821 = vmatpush1.msra.mxu0 0.0
        %2822 = vmatprep.subr.mxu0 0.0
        %2823 = vmatpush1.msra.mxu0 0.0
        %2824 = vmatprep.subr.mxu0 0.0
        %2825 = vmatpush1.msra.mxu0 0.0
        %2826 = vmatprep.subr.mxu0 0.0
        %2827 = vmatpush1.msra.mxu0 0.0
        %2828 = vmatprep.subr.mxu0 0.0
        %2829 = vmatpush1.msra.mxu0 0.0
        %2830 = vmatprep.subr.mxu0 0.0
        %2831 = vmatpush1.msra.mxu0 0.0
        %2832 = vmatprep.subr.mxu0 0.0
        %2833 = vmatpush1.msra.mxu0 0.0
        %2834 = vmatprep.subr.mxu0 0.0
        %2835 = vmatpush1.msra.mxu0 0.0
        %2836 = vmatprep.subr.mxu0 0.0
        %2837 = vmatpush1.msra.mxu0 0.0
        %2838 = vmatprep.subr.mxu0 0.0
        %2839 = vmatpush1.msra.mxu0 0.0
        %2840 = vmatprep.subr.mxu0 0.0
        %2841 = vmatpush1.msra.mxu0 0.0
        %2842 = vmatprep.subr.mxu0 0.0
        %2843 = vmatpush1.msra.mxu0 0.0
        %2844 = vmatprep.subr.mxu0 0.0
        %2845 = vmatpush1.msra.mxu0 0.0
        %2846 = vmatprep.subr.mxu0 0.0
        %2847 = vmatpush1.msra.mxu0 0.0
        %2848 = vmatprep.subr.mxu0 0.0
        %2849 = vmatpush1.msra.mxu0 0.0
        %2850 = vmatprep.subr.mxu0 0.0
        %2851 = vmatpush1.msra.mxu0 0.0
        %2852 = vmatprep.subr.mxu0 0.0
        %2853 = vmatpush1.msra.mxu0 0.0
        %2854 = vmatprep.mubr.f32.mxu0 0.0
        %2855 = vmatmul.mubr.f32.gmra.mrb[0].mxu0 %v811
        %v2856 = vpop.f32.mrb[0].mxu0
        %v2857 = vadd.f32 0.0, %v2856
        %v2858 = vpop.f32.mrb[0].mxu0
        %2859 = vmatprep.mubr.f32.mxu0 0.0
        %2860 = vmatmul.mubr.f32.gmra.mrb[0].mxu0 %v814
        %v2861 = vpop.f32.mrb[0].mxu0
        %v2862 = vadd.f32 0.0, %v2861
        %v2863 = vpop.f32.mrb[0].mxu0
        %2864 = vmatprep.mubr.f32.mxu0 0.0
        %2865 = vmatmul.mubr.f32.gmra.mrb[0].mxu0 %v817
        %v2866 = vpop.f32.mrb[0].mxu0
        %v2867 = vadd.f32 0.0, %v2866
        %v2868 = vpop.f32.mrb[0].mxu0
        %2869 = vdwg.mxu0
        %2870 = vmatprep.subr.mxu0 0.0
        %2871 = vmatpush1.msra.mxu0 %v2784
        %2872 = vmatprep.subr.mxu0 0.0
        %2873 = vmatpush1.msra.mxu0 %v2785
        %2874 = vmatprep.subr.mxu0 0.0
        %2875 = vmatpush1.msra.mxu0 0.0
        %2876 = vmatprep.subr.mxu0 0.0
        %2877 = vmatpush1.msra.mxu0 0.0
        %2878 = vmatprep.subr.mxu0 0.0
        %2879 = vmatpush1.msra.mxu0 0.0
        %2880 = vmatprep.subr.mxu0 0.0
        %2881 = vmatpush1.msra.mxu0 0.0
        %2882 = vmatprep.subr.mxu0 0.0
        %2883 = vmatpush1.msra.mxu0 0.0
        %2884 = vmatprep.subr.mxu0 0.0
        %2885 = vmatpush1.msra.mxu0 0.0
        %2886 = vmatprep.subr.mxu0 0.0
        %2887 = vmatpush1.msra.mxu0 0.0
        %2888 = vmatprep.subr.mxu0 0.0
        %2889 = vmatpush1.msra.mxu0 0.0
        %2890 = vmatprep.subr.mxu0 0.0
        %2891 = vmatpush1.msra.mxu0 0.0
        %2892 = vmatprep.subr.mxu0 0.0
        %2893 = vmatpush1.msra.mxu0 0.0
        %2894 = vmatprep.subr.mxu0 0.0
        %2895 = vmatpush1.msra.mxu0 0.0
        %2896 = vmatprep.subr.mxu0 0.0
        %2897 = vmatpush1.msra.mxu0 0.0
        %2898 = vmatprep.subr.mxu0 0.0
        %2899 = vmatpush1.msra.mxu0 0.0
        %2900 = vmatprep.subr.mxu0 0.0
        %2901 = vmatpush1.msra.mxu0 0.0
        %2902 = vmatprep.subr.mxu0 0.0
        %2903 = vmatpush1.msra.mxu0 0.0
        %2904 = vmatprep.subr.mxu0 0.0
        %2905 = vmatpush1.msra.mxu0 0.0
        %2906 = vmatprep.subr.mxu0 0.0
        %2907 = vmatpush1.msra.mxu0 0.0
        %2908 = vmatprep.subr.mxu0 0.0
        %2909 = vmatpush1.msra.mxu0 0.0
        %2910 = vmatprep.subr.mxu0 0.0
        %2911 = vmatpush1.msra.mxu0 0.0
        %2912 = vmatprep.subr.mxu0 0.0
        %2913 = vmatpush1.msra.mxu0 0.0
        %2914 = vmatprep.subr.mxu0 0.0
        %2915 = vmatpush1.msra.mxu0 0.0
        %2916 = vmatprep.subr.mxu0 0.0
        %2917 = vmatpush1.msra.mxu0 0.0
        %2918 = vmatprep.subr.mxu0 0.0
        %2919 = vmatpush1.msra.mxu0 0.0
        %2920 = vmatprep.subr.mxu0 0.0
        %2921 = vmatpush1.msra.mxu0 0.0
        %2922 = vmatprep.subr.mxu0 0.0
        %2923 = vmatpush1.msra.mxu0 0.0
        %2924 = vmatprep.subr.mxu0 0.0
        %2925 = vmatpush1.msra.mxu0 0.0
        %2926 = vmatprep.subr.mxu0 0.0
        %2927 = vmatpush1.msra.mxu0 0.0
        %2928 = vmatprep.subr.mxu0 0.0
        %2929 = vmatpush1.msra.mxu0 0.0
        %2930 = vmatprep.subr.mxu0 0.0
        %2931 = vmatpush1.msra.mxu0 0.0
        %2932 = vmatprep.subr.mxu0 0.0
        %2933 = vmatpush1.msra.mxu0 0.0
        %2934 = vmatprep.mubr.f32.mxu0 0.0
        %2935 = vmatmul.mubr.f32.gmra.mrb[0].mxu0 %v811
        %v2936 = vpop.f32.mrb[0].mxu0
        %v2937 = vadd.f32 0.0, %v2936
        %v2938 = vpop.f32.mrb[0].mxu0
        %2939 = vmatprep.mubr.f32.mxu0 0.0
        %2940 = vmatmul.mubr.f32.gmra.mrb[0].mxu0 %v814
        %v2941 = vpop.f32.mrb[0].mxu0
        %v2942 = vadd.f32 0.0, %v2941
        %v2943 = vpop.f32.mrb[0].mxu0
        %2944 = vmatprep.mubr.f32.mxu0 0.0
        %2945 = vmatmul.mubr.f32.gmra.mrb[0].mxu0 %v817
        %v2946 = vpop.f32.mrb[0].mxu0
        %v2947 = vadd.f32 0.0, %v2946
        %v2948 = vpop.f32.mrb[0].mxu0
        %2949 = vdwg.mxu0
        %2950 = vmatprep.subr.mxu0 0.0
        %2951 = vmatpush1.msra.mxu0 %v2786
        %2952 = vmatprep.subr.mxu0 0.0
        %2953 = vmatpush1.msra.mxu0 %v2787
        %2954 = vmatprep.subr.mxu0 0.0
        %2955 = vmatpush1.msra.mxu0 0.0
        %2956 = vmatprep.subr.mxu0 0.0
        %2957 = vmatpush1.msra.mxu0 0.0
        %2958 = vmatprep.subr.mxu0 0.0
        %2959 = vmatpush1.msra.mxu0 0.0
        %2960 = vmatprep.subr.mxu0 0.0
        %2961 = vmatpush1.msra.mxu0 0.0
        %2962 = vmatprep.subr.mxu0 0.0
        %2963 = vmatpush1.msra.mxu0 0.0
        %2964 = vmatprep.subr.mxu0 0.0
        %2965 = vmatpush1.msra.mxu0 0.0
        %2966 = vmatprep.subr.mxu0 0.0
        %2967 = vmatpush1.msra.mxu0 0.0
        %2968 = vmatprep.subr.mxu0 0.0
        %2969 = vmatpush1.msra.mxu0 0.0
        %2970 = vmatprep.subr.mxu0 0.0
        %2971 = vmatpush1.msra.mxu0 0.0
        %2972 = vmatprep.subr.mxu0 0.0
        %2973 = vmatpush1.msra.mxu0 0.0
        %2974 = vmatprep.subr.mxu0 0.0
        %2975 = vmatpush1.msra.mxu0 0.0
        %2976 = vmatprep.subr.mxu0 0.0
        %2977 = vmatpush1.msra.mxu0 0.0
        %2978 = vmatprep.subr.mxu0 0.0
        %2979 = vmatpush1.msra.mxu0 0.0
        %2980 = vmatprep.subr.mxu0 0.0
        %2981 = vmatpush1.msra.mxu0 0.0
        %2982 = vmatprep.subr.mxu0 0.0
        %2983 = vmatpush1.msra.mxu0 0.0
        %2984 = vmatprep.subr.mxu0 0.0
        %2985 = vmatpush1.msra.mxu0 0.0
        %2986 = vmatprep.subr.mxu0 0.0
        %2987 = vmatpush1.msra.mxu0 0.0
        %2988 = vmatprep.subr.mxu0 0.0
        %2989 = vmatpush1.msra.mxu0 0.0
        %2990 = vmatprep.subr.mxu0 0.0
        %2991 = vmatpush1.msra.mxu0 0.0
        %2992 = vmatprep.subr.mxu0 0.0
        %2993 = vmatpush1.msra.mxu0 0.0
        %2994 = vmatprep.subr.mxu0 0.0
        %2995 = vmatpush1.msra.mxu0 0.0
        %2996 = vmatprep.subr.mxu0 0.0
        %2997 = vmatpush1.msra.mxu0 0.0
        %2998 = vmatprep.subr.mxu0 0.0
        %2999 = vmatpush1.msra.mxu0 0.0
        %3000 = vmatprep.subr.mxu0 0.0
        %3001 = vmatpush1.msra.mxu0 0.0
        %3002 = vmatprep.subr.mxu0 0.0
        %3003 = vmatpush1.msra.mxu0 0.0
        %3004 = vmatprep.subr.mxu0 0.0
        %3005 = vmatpush1.msra.mxu0 0.0
        %3006 = vmatprep.subr.mxu0 0.0
        %3007 = vmatpush1.msra.mxu0 0.0
        %3008 = vmatprep.subr.mxu0 0.0
        %3009 = vmatpush1.msra.mxu0 0.0
        %3010 = vmatprep.subr.mxu0 0.0
        %3011 = vmatpush1.msra.mxu0 0.0
        %3012 = vmatprep.subr.mxu0 0.0
        %3013 = vmatpush1.msra.mxu0 0.0
        %3014 = vmatprep.mubr.f32.mxu0 0.0
        %3015 = vmatmul.mubr.f32.gmra.mrb[0].mxu0 %v811
        %v3016 = vpop.f32.mrb[0].mxu0
        %v3017 = vadd.f32 0.0, %v3016
        %v3018 = vpop.f32.mrb[0].mxu0
        %3019 = vmatprep.mubr.f32.mxu0 0.0
        %3020 = vmatmul.mubr.f32.gmra.mrb[0].mxu0 %v814
        %v3021 = vpop.f32.mrb[0].mxu0
        %v3022 = vadd.f32 0.0, %v3021
        %v3023 = vpop.f32.mrb[0].mxu0
        %3024 = vmatprep.mubr.f32.mxu0 0.0
        %3025 = vmatmul.mubr.f32.gmra.mrb[0].mxu0 %v817
        %v3026 = vpop.f32.mrb[0].mxu0
        %v3027 = vadd.f32 0.0, %v3026
        %v3028 = vpop.f32.mrb[0].mxu0
        %3029 = vdwg.mxu0
        %3030 = vmatprep.subr.mxu0 0.0
        %3031 = vmatpush1.msra.mxu0 %v2788
        %3032 = vmatprep.subr.mxu0 0.0
        %3033 = vmatpush1.msra.mxu0 %v2789
        %3034 = vmatprep.subr.mxu0 0.0
        %3035 = vmatpush1.msra.mxu0 0.0
        %3036 = vmatprep.subr.mxu0 0.0
        %3037 = vmatpush1.msra.mxu0 0.0
        %3038 = vmatprep.subr.mxu0 0.0
        %3039 = vmatpush1.msra.mxu0 0.0
        %3040 = vmatprep.subr.mxu0 0.0
        %3041 = vmatpush1.msra.mxu0 0.0
        %3042 = vmatprep.subr.mxu0 0.0
        %3043 = vmatpush1.msra.mxu0 0.0
        %3044 = vmatprep.subr.mxu0 0.0
        %3045 = vmatpush1.msra.mxu0 0.0
        %3046 = vmatprep.subr.mxu0 0.0
        %3047 = vmatpush1.msra.mxu0 0.0
        %3048 = vmatprep.subr.mxu0 0.0
        %3049 = vmatpush1.msra.mxu0 0.0
        %3050 = vmatprep.subr.mxu0 0.0
        %3051 = vmatpush1.msra.mxu0 0.0
        %3052 = vmatprep.subr.mxu0 0.0
        %3053 = vmatpush1.msra.mxu0 0.0
        %3054 = vmatprep.subr.mxu0 0.0
        %3055 = vmatpush1.msra.mxu0 0.0
        %3056 = vmatprep.subr.mxu0 0.0
        %3057 = vmatpush1.msra.mxu0 0.0
        %3058 = vmatprep.subr.mxu0 0.0
        %3059 = vmatpush1.msra.mxu0 0.0
        %3060 = vmatprep.subr.mxu0 0.0
        %3061 = vmatpush1.msra.mxu0 0.0
        %3062 = vmatprep.subr.mxu0 0.0
        %3063 = vmatpush1.msra.mxu0 0.0
        %3064 = vmatprep.subr.mxu0 0.0
        %3065 = vmatpush1.msra.mxu0 0.0
        %3066 = vmatprep.subr.mxu0 0.0
        %3067 = vmatpush1.msra.mxu0 0.0
        %3068 = vmatprep.subr.mxu0 0.0
        %3069 = vmatpush1.msra.mxu0 0.0
        %3070 = vmatprep.subr.mxu0 0.0
        %3071 = vmatpush1.msra.mxu0 0.0
        %3072 = vmatprep.subr.mxu0 0.0
        %3073 = vmatpush1.msra.mxu0 0.0
        %3074 = vmatprep.subr.mxu0 0.0
        %3075 = vmatpush1.msra.mxu0 0.0
        %3076 = vmatprep.subr.mxu0 0.0
        %3077 = vmatpush1.msra.mxu0 0.0
        %3078 = vmatprep.subr.mxu0 0.0
        %3079 = vmatpush1.msra.mxu0 0.0
        %3080 = vmatprep.subr.mxu0 0.0
        %3081 = vmatpush1.msra.mxu0 0.0
        %3082 = vmatprep.subr.mxu0 0.0
        %3083 = vmatpush1.msra.mxu0 0.0
        %3084 = vmatprep.subr.mxu0 0.0
        %3085 = vmatpush1.msra.mxu0 0.0
        %3086 = vmatprep.subr.mxu0 0.0
        %3087 = vmatpush1.msra.mxu0 0.0
        %3088 = vmatprep.subr.mxu0 0.0
        %3089 = vmatpush1.msra.mxu0 0.0
        %3090 = vmatprep.subr.mxu0 0.0
        %3091 = vmatpush1.msra.mxu0 0.0
        %3092 = vmatprep.subr.mxu0 0.0
        %3093 = vmatpush1.msra.mxu0 0.0
        %3094 = vmatprep.mubr.f32.mxu0 0.0
        %3095 = vmatmul.mubr.f32.gmra.mrb[0].mxu0 %v811
        %v3096 = vpop.f32.mrb[0].mxu0
        %v3097 = vadd.f32 0.0, %v3096
        %v3098 = vpop.f32.mrb[0].mxu0
        %3099 = vmatprep.mubr.f32.mxu0 0.0
        %3100 = vmatmul.mubr.f32.gmra.mrb[0].mxu0 %v814
        %v3101 = vpop.f32.mrb[0].mxu0
        %v3102 = vadd.f32 0.0, %v3101
        %v3103 = vpop.f32.mrb[0].mxu0
        %3104 = vmatprep.mubr.f32.mxu0 0.0
        %3105 = vmatmul.mubr.f32.gmra.mrb[0].mxu0 %v817
        %v3106 = vpop.f32.mrb[0].mxu0
        %v3107 = vadd.f32 0.0, %v3106
        %v3108 = vpop.f32.mrb[0].mxu0
        %3109 = vdwg.mxu0
        %v3111 = vsel %vm373, %v2857, 0
        %v3114 = vsel %vm373, %v2862, 0
        %v3117 = vsel %vm373, %v2867, 0
        %3119 = vmatprep.subr.mxu0 0.0
        %3120 = vmatpush1.xpose.msra.mxu0 %v1149
        %3121 = vmatprep.subr.mxu0 0.0
        %3122 = vmatpush1.xpose.msra.mxu0 %v1152
        %3123 = vmatprep.subr.mxu0 0.0
        %3124 = vmatpush1.xpose.msra.mxu0 %v1155
        %3125 = vmatprep.subr.mxu0 0.0
        %3126 = vmatpush1.xpose.msra.mxu0 0.0
        %3127 = vmatprep.subr.mxu0 0.0
        %3128 = vmatpush1.xpose.msra.mxu0 0.0
        %3129 = vmatprep.subr.mxu0 0.0
        %3130 = vmatpush1.xpose.msra.mxu0 0.0
        %3131 = vmatprep.subr.mxu0 0.0
        %3132 = vmatpush1.xpose.msra.mxu0 0.0
        %3133 = vmatprep.subr.mxu0 0.0
        %3134 = vmatpush1.xpose.msra.mxu0 0.0
        %3135 = vmatprep.subr.mxu0 0.0
        %3136 = vmatpush1.xpose.msra.mxu0 0.0
        %3137 = vmatprep.subr.mxu0 0.0
        %3138 = vmatpush1.xpose.msra.mxu0 0.0
        %3139 = vmatprep.subr.mxu0 0.0
        %3140 = vmatpush1.xpose.msra.mxu0 0.0
        %3141 = vmatprep.subr.mxu0 0.0
        %3142 = vmatpush1.xpose.msra.mxu0 0.0
        %3143 = vmatprep.subr.mxu0 0.0
        %3144 = vmatpush1.xpose.msra.mxu0 0.0
        %3145 = vmatprep.subr.mxu0 0.0
        %3146 = vmatpush1.xpose.msra.mxu0 0.0
        %3147 = vmatprep.subr.mxu0 0.0
        %3148 = vmatpush1.xpose.msra.mxu0 0.0
        %3149 = vmatprep.subr.mxu0 0.0
        %3150 = vmatpush1.xpose.msra.mxu0 0.0
        %3151 = vmatprep.subr.mxu0 0.0
        %3152 = vmatpush1.xpose.msra.mxu0 0.0
        %3153 = vmatprep.subr.mxu0 0.0
        %3154 = vmatpush1.xpose.msra.mxu0 0.0
        %3155 = vmatprep.subr.mxu0 0.0
        %3156 = vmatpush1.xpose.msra.mxu0 0.0
        %3157 = vmatprep.subr.mxu0 0.0
        %3158 = vmatpush1.xpose.msra.mxu0 0.0
        %3159 = vmatprep.subr.mxu0 0.0
        %3160 = vmatpush1.xpose.msra.mxu0 0.0
        %3161 = vmatprep.subr.mxu0 0.0
        %3162 = vmatpush1.xpose.msra.mxu0 0.0
        %3163 = vmatprep.subr.mxu0 0.0
        %3164 = vmatpush1.xpose.msra.mxu0 0.0
        %3165 = vmatprep.subr.mxu0 0.0
        %3166 = vmatpush1.xpose.msra.mxu0 0.0
        %3167 = vmatprep.subr.mxu0 0.0
        %3168 = vmatpush1.xpose.msra.mxu0 0.0
        %3169 = vmatprep.subr.mxu0 0.0
        %3170 = vmatpush1.xpose.msra.mxu0 0.0
        %3171 = vmatprep.subr.mxu0 0.0
        %3172 = vmatpush1.xpose.msra.mxu0 0.0
        %3173 = vmatprep.subr.mxu0 0.0
        %3174 = vmatpush1.xpose.msra.mxu0 0.0
        %3175 = vmatprep.subr.mxu0 0.0
        %3176 = vmatpush1.xpose.msra.mxu0 0.0
        %3177 = vmatprep.subr.mxu0 0.0
        %3178 = vmatpush1.xpose.msra.mxu0 0.0
        %3179 = vmatprep.subr.mxu0 0.0
        %3180 = vmatpush1.xpose.msra.mxu0 0.0
        %3181 = vmatprep.subr.mxu0 0.0
        %3182 = vmatpush1.xpose.msra.mxu0 0.0
        %3183 = vmatprep.mubr.f32.mxu0 0.0
        %3184 = vmatmul.mubr.f32.gmra.mrb[0].mxu0 %v3111
        %v3185 = vpop.f32.mrb[0].mxu0
        %v3186 = vadd.f32 0.0, %v3185
        %v3187 = vpop.f32.mrb[0].mxu0
        %3188 = vmatprep.mubr.f32.mxu0 0.0
        %3189 = vmatmul.mubr.f32.gmra.mrb[0].mxu0 %v3114
        %v3190 = vpop.f32.mrb[0].mxu0
        %v3191 = vadd.f32 0.0, %v3190
        %v3192 = vpop.f32.mrb[0].mxu0
        %3193 = vmatprep.mubr.f32.mxu0 0.0
        %3194 = vmatmul.mubr.f32.gmra.mrb[0].mxu0 %v3117
        %v3195 = vpop.f32.mrb[0].mxu0
        %v3196 = vadd.f32 0.0, %v3195
        %v3197 = vpop.f32.mrb[0].mxu0
        %3198 = vdwg.mxu0
        %v3200 = vsel %vm373, %v2937, 0
        %v3203 = vsel %vm373, %v2942, 0
        %v3206 = vsel %vm373, %v2947, 0
        %3208 = vmatprep.subr.mxu0 0.0
        %3209 = vmatpush1.xpose.msra.mxu0 %v1149
        %3210 = vmatprep.subr.mxu0 0.0
        %3211 = vmatpush1.xpose.msra.mxu0 %v1152
        %3212 = vmatprep.subr.mxu0 0.0
        %3213 = vmatpush1.xpose.msra.mxu0 %v1155
        %3214 = vmatprep.subr.mxu0 0.0
        %3215 = vmatpush1.xpose.msra.mxu0 0.0
        %3216 = vmatprep.subr.mxu0 0.0
        %3217 = vmatpush1.xpose.msra.mxu0 0.0
        %3218 = vmatprep.subr.mxu0 0.0
        %3219 = vmatpush1.xpose.msra.mxu0 0.0
        %3220 = vmatprep.subr.mxu0 0.0
        %3221 = vmatpush1.xpose.msra.mxu0 0.0
        %3222 = vmatprep.subr.mxu0 0.0
        %3223 = vmatpush1.xpose.msra.mxu0 0.0
        %3224 = vmatprep.subr.mxu0 0.0
        %3225 = vmatpush1.xpose.msra.mxu0 0.0
        %3226 = vmatprep.subr.mxu0 0.0
        %3227 = vmatpush1.xpose.msra.mxu0 0.0
        %3228 = vmatprep.subr.mxu0 0.0
        %3229 = vmatpush1.xpose.msra.mxu0 0.0
        %3230 = vmatprep.subr.mxu0 0.0
        %3231 = vmatpush1.xpose.msra.mxu0 0.0
        %3232 = vmatprep.subr.mxu0 0.0
        %3233 = vmatpush1.xpose.msra.mxu0 0.0
        %3234 = vmatprep.subr.mxu0 0.0
        %3235 = vmatpush1.xpose.msra.mxu0 0.0
        %3236 = vmatprep.subr.mxu0 0.0
        %3237 = vmatpush1.xpose.msra.mxu0 0.0
        %3238 = vmatprep.subr.mxu0 0.0
        %3239 = vmatpush1.xpose.msra.mxu0 0.0
        %3240 = vmatprep.subr.mxu0 0.0
        %3241 = vmatpush1.xpose.msra.mxu0 0.0
        %3242 = vmatprep.subr.mxu0 0.0
        %3243 = vmatpush1.xpose.msra.mxu0 0.0
        %3244 = vmatprep.subr.mxu0 0.0
        %3245 = vmatpush1.xpose.msra.mxu0 0.0
        %3246 = vmatprep.subr.mxu0 0.0
        %3247 = vmatpush1.xpose.msra.mxu0 0.0
        %3248 = vmatprep.subr.mxu0 0.0
        %3249 = vmatpush1.xpose.msra.mxu0 0.0
        %3250 = vmatprep.subr.mxu0 0.0
        %3251 = vmatpush1.xpose.msra.mxu0 0.0
        %3252 = vmatprep.subr.mxu0 0.0
        %3253 = vmatpush1.xpose.msra.mxu0 0.0
        %3254 = vmatprep.subr.mxu0 0.0
        %3255 = vmatpush1.xpose.msra.mxu0 0.0
        %3256 = vmatprep.subr.mxu0 0.0
        %3257 = vmatpush1.xpose.msra.mxu0 0.0
        %3258 = vmatprep.subr.mxu0 0.0
        %3259 = vmatpush1.xpose.msra.mxu0 0.0
        %3260 = vmatprep.subr.mxu0 0.0
        %3261 = vmatpush1.xpose.msra.mxu0 0.0
        %3262 = vmatprep.subr.mxu0 0.0
        %3263 = vmatpush1.xpose.msra.mxu0 0.0
        %3264 = vmatprep.subr.mxu0 0.0
        %3265 = vmatpush1.xpose.msra.mxu0 0.0
        %3266 = vmatprep.subr.mxu0 0.0
        %3267 = vmatpush1.xpose.msra.mxu0 0.0
        %3268 = vmatprep.subr.mxu0 0.0
        %3269 = vmatpush1.xpose.msra.mxu0 0.0
        %3270 = vmatprep.subr.mxu0 0.0
        %3271 = vmatpush1.xpose.msra.mxu0 0.0
        %3272 = vmatprep.mubr.f32.mxu0 0.0
        %3273 = vmatmul.mubr.f32.gmra.mrb[0].mxu0 %v3200
        %v3274 = vpop.f32.mrb[0].mxu0
        %v3275 = vadd.f32 0.0, %v3274
        %v3276 = vpop.f32.mrb[0].mxu0
        %3277 = vmatprep.mubr.f32.mxu0 0.0
        %3278 = vmatmul.mubr.f32.gmra.mrb[0].mxu0 %v3203
        %v3279 = vpop.f32.mrb[0].mxu0
        %v3280 = vadd.f32 0.0, %v3279
        %v3281 = vpop.f32.mrb[0].mxu0
        %3282 = vmatprep.mubr.f32.mxu0 0.0
        %3283 = vmatmul.mubr.f32.gmra.mrb[0].mxu0 %v3206
        %v3284 = vpop.f32.mrb[0].mxu0
        %v3285 = vadd.f32 0.0, %v3284
        %v3286 = vpop.f32.mrb[0].mxu0
        %3287 = vdwg.mxu0
        %v3289 = vsel %vm373, %v3017, 0
        %v3292 = vsel %vm373, %v3022, 0
        %v3295 = vsel %vm373, %v3027, 0
        %3297 = vmatprep.subr.mxu0 0.0
        %3298 = vmatpush1.xpose.msra.mxu0 %v1149
        %3299 = vmatprep.subr.mxu0 0.0
        %3300 = vmatpush1.xpose.msra.mxu0 %v1152
        %3301 = vmatprep.subr.mxu0 0.0
        %3302 = vmatpush1.xpose.msra.mxu0 %v1155
        %3303 = vmatprep.subr.mxu0 0.0
        %3304 = vmatpush1.xpose.msra.mxu0 0.0
        %3305 = vmatprep.subr.mxu0 0.0
        %3306 = vmatpush1.xpose.msra.mxu0 0.0
        %3307 = vmatprep.subr.mxu0 0.0
        %3308 = vmatpush1.xpose.msra.mxu0 0.0
        %3309 = vmatprep.subr.mxu0 0.0
        %3310 = vmatpush1.xpose.msra.mxu0 0.0
        %3311 = vmatprep.subr.mxu0 0.0
        %3312 = vmatpush1.xpose.msra.mxu0 0.0
        %3313 = vmatprep.subr.mxu0 0.0
        %3314 = vmatpush1.xpose.msra.mxu0 0.0
        %3315 = vmatprep.subr.mxu0 0.0
        %3316 = vmatpush1.xpose.msra.mxu0 0.0
        %3317 = vmatprep.subr.mxu0 0.0
        %3318 = vmatpush1.xpose.msra.mxu0 0.0
        %3319 = vmatprep.subr.mxu0 0.0
        %3320 = vmatpush1.xpose.msra.mxu0 0.0
        %3321 = vmatprep.subr.mxu0 0.0
        %3322 = vmatpush1.xpose.msra.mxu0 0.0
        %3323 = vmatprep.subr.mxu0 0.0
        %3324 = vmatpush1.xpose.msra.mxu0 0.0
        %3325 = vmatprep.subr.mxu0 0.0
        %3326 = vmatpush1.xpose.msra.mxu0 0.0
        %3327 = vmatprep.subr.mxu0 0.0
        %3328 = vmatpush1.xpose.msra.mxu0 0.0
        %3329 = vmatprep.subr.mxu0 0.0
        %3330 = vmatpush1.xpose.msra.mxu0 0.0
        %3331 = vmatprep.subr.mxu0 0.0
        %3332 = vmatpush1.xpose.msra.mxu0 0.0
        %3333 = vmatprep.subr.mxu0 0.0
        %3334 = vmatpush1.xpose.msra.mxu0 0.0
        %3335 = vmatprep.subr.mxu0 0.0
        %3336 = vmatpush1.xpose.msra.mxu0 0.0
        %3337 = vmatprep.subr.mxu0 0.0
        %3338 = vmatpush1.xpose.msra.mxu0 0.0
        %3339 = vmatprep.subr.mxu0 0.0
        %3340 = vmatpush1.xpose.msra.mxu0 0.0
        %3341 = vmatprep.subr.mxu0 0.0
        %3342 = vmatpush1.xpose.msra.mxu0 0.0
        %3343 = vmatprep.subr.mxu0 0.0
        %3344 = vmatpush1.xpose.msra.mxu0 0.0
        %3345 = vmatprep.subr.mxu0 0.0
        %3346 = vmatpush1.xpose.msra.mxu0 0.0
        %3347 = vmatprep.subr.mxu0 0.0
        %3348 = vmatpush1.xpose.msra.mxu0 0.0
        %3349 = vmatprep.subr.mxu0 0.0
        %3350 = vmatpush1.xpose.msra.mxu0 0.0
        %3351 = vmatprep.subr.mxu0 0.0
        %3352 = vmatpush1.xpose.msra.mxu0 0.0
        %3353 = vmatprep.subr.mxu0 0.0
        %3354 = vmatpush1.xpose.msra.mxu0 0.0
        %3355 = vmatprep.subr.mxu0 0.0
        %3356 = vmatpush1.xpose.msra.mxu0 0.0
        %3357 = vmatprep.subr.mxu0 0.0
        %3358 = vmatpush1.xpose.msra.mxu0 0.0
        %3359 = vmatprep.subr.mxu0 0.0
        %3360 = vmatpush1.xpose.msra.mxu0 0.0
        %3361 = vmatprep.mubr.f32.mxu0 0.0
        %3362 = vmatmul.mubr.f32.gmra.mrb[0].mxu0 %v3289
        %v3363 = vpop.f32.mrb[0].mxu0
        %v3364 = vadd.f32 0.0, %v3363
        %v3365 = vpop.f32.mrb[0].mxu0
        %3366 = vmatprep.mubr.f32.mxu0 0.0
        %3367 = vmatmul.mubr.f32.gmra.mrb[0].mxu0 %v3292
        %v3368 = vpop.f32.mrb[0].mxu0
        %v3369 = vadd.f32 0.0, %v3368
        %v3370 = vpop.f32.mrb[0].mxu0
        %3371 = vmatprep.mubr.f32.mxu0 0.0
        %3372 = vmatmul.mubr.f32.gmra.mrb[0].mxu0 %v3295
        %v3373 = vpop.f32.mrb[0].mxu0
        %v3374 = vadd.f32 0.0, %v3373
        %v3375 = vpop.f32.mrb[0].mxu0
        %3376 = vdwg.mxu0
        %v3378 = vsel %vm373, %v3097, 0
        %v3381 = vsel %vm373, %v3102, 0
        %v3384 = vsel %vm373, %v3107, 0
        %3386 = vmatprep.subr.mxu0 0.0
        %3387 = vmatpush1.xpose.msra.mxu0 %v1149
        %3388 = vmatprep.subr.mxu0 0.0
        %3389 = vmatpush1.xpose.msra.mxu0 %v1152
        %3390 = vmatprep.subr.mxu0 0.0
        %3391 = vmatpush1.xpose.msra.mxu0 %v1155
        %3392 = vmatprep.subr.mxu0 0.0
        %3393 = vmatpush1.xpose.msra.mxu0 0.0
        %3394 = vmatprep.subr.mxu0 0.0
        %3395 = vmatpush1.xpose.msra.mxu0 0.0
        %3396 = vmatprep.subr.mxu0 0.0
        %3397 = vmatpush1.xpose.msra.mxu0 0.0
        %3398 = vmatprep.subr.mxu0 0.0
        %3399 = vmatpush1.xpose.msra.mxu0 0.0
        %3400 = vmatprep.subr.mxu0 0.0
        %3401 = vmatpush1.xpose.msra.mxu0 0.0
        %3402 = vmatprep.subr.mxu0 0.0
        %3403 = vmatpush1.xpose.msra.mxu0 0.0
        %3404 = vmatprep.subr.mxu0 0.0
        %3405 = vmatpush1.xpose.msra.mxu0 0.0
        %3406 = vmatprep.subr.mxu0 0.0
        %3407 = vmatpush1.xpose.msra.mxu0 0.0
        %3408 = vmatprep.subr.mxu0 0.0
        %3409 = vmatpush1.xpose.msra.mxu0 0.0
        %3410 = vmatprep.subr.mxu0 0.0
        %3411 = vmatpush1.xpose.msra.mxu0 0.0
        %3412 = vmatprep.subr.mxu0 0.0
        %3413 = vmatpush1.xpose.msra.mxu0 0.0
        %3414 = vmatprep.subr.mxu0 0.0
        %3415 = vmatpush1.xpose.msra.mxu0 0.0
        %3416 = vmatprep.subr.mxu0 0.0
        %3417 = vmatpush1.xpose.msra.mxu0 0.0
        %3418 = vmatprep.subr.mxu0 0.0
        %3419 = vmatpush1.xpose.msra.mxu0 0.0
        %3420 = vmatprep.subr.mxu0 0.0
        %3421 = vmatpush1.xpose.msra.mxu0 0.0
        %3422 = vmatprep.subr.mxu0 0.0
        %3423 = vmatpush1.xpose.msra.mxu0 0.0
        %3424 = vmatprep.subr.mxu0 0.0
        %3425 = vmatpush1.xpose.msra.mxu0 0.0
        %3426 = vmatprep.subr.mxu0 0.0
        %3427 = vmatpush1.xpose.msra.mxu0 0.0
        %3428 = vmatprep.subr.mxu0 0.0
        %3429 = vmatpush1.xpose.msra.mxu0 0.0
        %3430 = vmatprep.subr.mxu0 0.0
        %3431 = vmatpush1.xpose.msra.mxu0 0.0
        %3432 = vmatprep.subr.mxu0 0.0
        %3433 = vmatpush1.xpose.msra.mxu0 0.0
        %3434 = vmatprep.subr.mxu0 0.0
        %3435 = vmatpush1.xpose.msra.mxu0 0.0
        %3436 = vmatprep.subr.mxu0 0.0
        %3437 = vmatpush1.xpose.msra.mxu0 0.0
        %3438 = vmatprep.subr.mxu0 0.0
        %3439 = vmatpush1.xpose.msra.mxu0 0.0
        %3440 = vmatprep.subr.mxu0 0.0
        %3441 = vmatpush1.xpose.msra.mxu0 0.0
        %3442 = vmatprep.subr.mxu0 0.0
        %3443 = vmatpush1.xpose.msra.mxu0 0.0
        %3444 = vmatprep.subr.mxu0 0.0
        %3445 = vmatpush1.xpose.msra.mxu0 0.0
        %3446 = vmatprep.subr.mxu0 0.0
        %3447 = vmatpush1.xpose.msra.mxu0 0.0
        %3448 = vmatprep.subr.mxu0 0.0
        %3449 = vmatpush1.xpose.msra.mxu0 0.0
        %3450 = vmatprep.mubr.f32.mxu0 0.0
        %3451 = vmatmul.mubr.f32.gmra.mrb[0].mxu0 %v3378
        %v3452 = vpop.f32.mrb[0].mxu0
        %v3453 = vadd.f32 0.0, %v3452
        %v3454 = vpop.f32.mrb[0].mxu0
        %3455 = vmatprep.mubr.f32.mxu0 0.0
        %3456 = vmatmul.mubr.f32.gmra.mrb[0].mxu0 %v3381
        %v3457 = vpop.f32.mrb[0].mxu0
        %v3458 = vadd.f32 0.0, %v3457
        %v3459 = vpop.f32.mrb[0].mxu0
        %3460 = vmatprep.mubr.f32.mxu0 0.0
        %3461 = vmatmul.mubr.f32.gmra.mrb[0].mxu0 %v3384
        %v3462 = vpop.f32.mrb[0].mxu0
        %v3463 = vadd.f32 0.0, %v3462
        %v3464 = vpop.f32.mrb[0].mxu0
        %3465 = vdwg.mxu0
        %v3466 = vld [vmem:[%s5] sm:$0x1]
        %v3467 = vld [vmem:[%s5 + $0x1] sm:$0x1]
        %v3468 = vld [vmem:[%s5 + $0x2] sm:$0x1]
        %v3469 = vld [vmem:[%s5 + $0x3] sm:$0x1]
        %v3474 = vlaneseq
        %v3475 = vshrl.u32 %v3474, 7
        %v3476 = vsub.s32 0, %v3475
        %v3477 = vrot.slane %v3466, %v3476
        %v3478 = vlaneseq
        %v3479 = vshrl.u32 %v3478, 7
        %v3480 = vsub.s32 0, %v3479
        %v3481 = vrot.slane %v3467, %v3480
        %v3482 = vlaneseq
        %v3483 = vshrl.u32 %v3482, 7
        %v3484 = vsub.s32 0, %v3483
        %v3485 = vrot.slane %v3468, %v3484
        %v3486 = vlaneseq
        %v3487 = vshrl.u32 %v3486, 7
        %v3488 = vsub.s32 0, %v3487
        %v3489 = vrot.slane %v3469, %v3488
        %3490 = vset.pattern.permute.xlu0 0
        %3491 = vperm.xlu0 %3490, %v3477
        %v3492 = vpop.permute.xlu0 %3491
        %3494 = vset.pattern.permute.xlu0 0
        %3495 = vperm.xlu0 %3494, %v3481
        %v3496 = vpop.permute.xlu0 %3495
        %3498 = vset.pattern.permute.xlu0 0
        %3499 = vperm.xlu0 %3498, %v3485
        %v3500 = vpop.permute.xlu0 %3499
        %3502 = vset.pattern.permute.xlu0 0
        %3503 = vperm.xlu0 %3502, %v3489
        %v3504 = vpop.permute.xlu0 %3503
        %v3506 = vmul.f32 %v3186, %v3492
        %v3507 = vmul.f32 %v3191, %v3492
        %v3508 = vmul.f32 %v3275, %v3496
        %v3509 = vmul.f32 %v3280, %v3496
        %v3510 = vmul.f32 %v3364, %v3500
        %v3511 = vmul.f32 %v3369, %v3500
        %v3512 = vmul.f32 %v3453, %v3504
        %v3513 = vmul.f32 %v3458, %v3504
        %v3514 = vadd.f32 %v3506, 0.0
        %v3515 = vadd.f32 %v3507, 0.0
        %v3516 = vadd.f32 %v3508, 0.0
        %v3517 = vadd.f32 %v3509, 0.0
        %v3518 = vadd.f32 %v3510, 0.0
        %v3519 = vadd.f32 %v3511, 0.0
        %v3520 = vadd.f32 %v3512, 0.0
        %v3521 = vadd.f32 %v3513, 0.0
        %3522 = vset.pattern.permute.xlu0 1
        %3523 = vperm.xlu0 %3522, %v3477
        %v3524 = vpop.permute.xlu0 %3523
        %3526 = vset.pattern.permute.xlu0 1
        %3527 = vperm.xlu0 %3526, %v3481
        %v3528 = vpop.permute.xlu0 %3527
        %3530 = vset.pattern.permute.xlu0 1
        %3531 = vperm.xlu0 %3530, %v3485
        %v3532 = vpop.permute.xlu0 %3531
        %3534 = vset.pattern.permute.xlu0 1
        %3535 = vperm.xlu0 %3534, %v3489
        %v3536 = vpop.permute.xlu0 %3535
        %v3538 = vmul.f32 %v3186, %v3524
        %v3539 = vmul.f32 %v3191, %v3524
        %v3540 = vmul.f32 %v3275, %v3528
        %v3541 = vmul.f32 %v3280, %v3528
        %v3542 = vmul.f32 %v3364, %v3532
        %v3543 = vmul.f32 %v3369, %v3532
        %v3544 = vmul.f32 %v3453, %v3536
        %v3545 = vmul.f32 %v3458, %v3536
        %3554 = vrot.lane.b32.xlu0 %v3538, 127
        %v3555 = vpop.permute.xlu0 %3554
        %3556 = vrot.lane.b32.xlu0 %v3539, 127
        %v3557 = vpop.permute.xlu0 %3556
        %3558 = vrot.lane.b32.xlu0 %v3540, 127
        %v3559 = vpop.permute.xlu0 %3558
        %3560 = vrot.lane.b32.xlu0 %v3541, 127
        %v3561 = vpop.permute.xlu0 %3560
        %3562 = vrot.lane.b32.xlu0 %v3542, 127
        %v3563 = vpop.permute.xlu0 %3562
        %3564 = vrot.lane.b32.xlu0 %v3543, 127
        %v3565 = vpop.permute.xlu0 %3564
        %3566 = vrot.lane.b32.xlu0 %v3544, 127
        %v3567 = vpop.permute.xlu0 %3566
        %3568 = vrot.lane.b32.xlu0 %v3545, 127
        %v3569 = vpop.permute.xlu0 %3568
        %v3578 = vadd.f32 %v3514, %v3555
        %v3579 = vadd.f32 %v3515, %v3557
        %v3580 = vadd.f32 %v3516, %v3559
        %v3581 = vadd.f32 %v3517, %v3561
        %v3582 = vadd.f32 %v3518, %v3563
        %v3583 = vadd.f32 %v3519, %v3565
        %v3584 = vadd.f32 %v3520, %v3567
        %v3585 = vadd.f32 %v3521, %v3569
        %3586 = vset.pattern.permute.xlu0 2
        %3587 = vperm.xlu0 %3586, %v3477
        %v3588 = vpop.permute.xlu0 %3587
        %3590 = vset.pattern.permute.xlu0 2
        %3591 = vperm.xlu0 %3590, %v3481
        %v3592 = vpop.permute.xlu0 %3591
        %3594 = vset.pattern.permute.xlu0 2
        %3595 = vperm.xlu0 %3594, %v3485
        %v3596 = vpop.permute.xlu0 %3595
        %3598 = vset.pattern.permute.xlu0 2
        %3599 = vperm.xlu0 %3598, %v3489
        %v3600 = vpop.permute.xlu0 %3599
        %v3602 = vmul.f32 %v3186, %v3588
        %v3603 = vmul.f32 %v3191, %v3588
        %v3604 = vmul.f32 %v3275, %v3592
        %v3605 = vmul.f32 %v3280, %v3592
        %v3606 = vmul.f32 %v3364, %v3596
        %v3607 = vmul.f32 %v3369, %v3596
        %v3608 = vmul.f32 %v3453, %v3600
        %v3609 = vmul.f32 %v3458, %v3600
        %3618 = vrot.lane.b32.xlu0 %v3602, 126
        %v3619 = vpop.permute.xlu0 %3618
        %3620 = vrot.lane.b32.xlu0 %v3603, 126
        %v3621 = vpop.permute.xlu0 %3620
        %3622 = vrot.lane.b32.xlu0 %v3604, 126
        %v3623 = vpop.permute.xlu0 %3622
        %3624 = vrot.lane.b32.xlu0 %v3605, 126
        %v3625 = vpop.permute.xlu0 %3624
        %3626 = vrot.lane.b32.xlu0 %v3606, 126
        %v3627 = vpop.permute.xlu0 %3626
        %3628 = vrot.lane.b32.xlu0 %v3607, 126
        %v3629 = vpop.permute.xlu0 %3628
        %3630 = vrot.lane.b32.xlu0 %v3608, 126
        %v3631 = vpop.permute.xlu0 %3630
        %3632 = vrot.lane.b32.xlu0 %v3609, 126
        %v3633 = vpop.permute.xlu0 %3632
        %v3642 = vadd.f32 %v3578, %v3619
        %v3643 = vadd.f32 %v3579, %v3621
        %v3644 = vadd.f32 %v3580, %v3623
        %v3645 = vadd.f32 %v3581, %v3625
        %v3646 = vadd.f32 %v3582, %v3627
        %v3647 = vadd.f32 %v3583, %v3629
        %v3648 = vadd.f32 %v3584, %v3631
        %v3649 = vadd.f32 %v3585, %v3633
        %3650 = vset.pattern.permute.xlu0 3
        %3651 = vperm.xlu0 %3650, %v3477
        %v3652 = vpop.permute.xlu0 %3651
        %3654 = vset.pattern.permute.xlu0 3
        %3655 = vperm.xlu0 %3654, %v3481
        %v3656 = vpop.permute.xlu0 %3655
        %3658 = vset.pattern.permute.xlu0 3
        %3659 = vperm.xlu0 %3658, %v3485
        %v3660 = vpop.permute.xlu0 %3659
        %3662 = vset.pattern.permute.xlu0 3
        %3663 = vperm.xlu0 %3662, %v3489
        %v3664 = vpop.permute.xlu0 %3663
        %v3666 = vmul.f32 %v3186, %v3652
        %v3667 = vmul.f32 %v3191, %v3652
        %v3668 = vmul.f32 %v3196, %v3652
        %v3669 = vmul.f32 %v3275, %v3656
        %v3670 = vmul.f32 %v3280, %v3656
        %v3671 = vmul.f32 %v3285, %v3656
        %v3672 = vmul.f32 %v3364, %v3660
        %v3673 = vmul.f32 %v3369, %v3660
        %v3674 = vmul.f32 %v3374, %v3660
        %v3675 = vmul.f32 %v3453, %v3664
        %v3676 = vmul.f32 %v3458, %v3664
        %v3677 = vmul.f32 %v3463, %v3664
        %v3690 = vrot.slane %v3666, 1
        %v3691 = vrot.slane %v3667, 1
        %v3692 = vsel %vm1728, %v3690, %v3691
        %v3693 = vrot.slane %v3668, 1
        %v3694 = vsel %vm1728, %v3691, %v3693
        %v3695 = vrot.slane %v3669, 1
        %v3696 = vrot.slane %v3670, 1
        %v3697 = vsel %vm1728, %v3695, %v3696
        %v3698 = vrot.slane %v3671, 1
        %v3699 = vsel %vm1728, %v3696, %v3698
        %v3700 = vrot.slane %v3672, 1
        %v3701 = vrot.slane %v3673, 1
        %v3702 = vsel %vm1728, %v3700, %v3701
        %v3703 = vrot.slane %v3674, 1
        %v3704 = vsel %vm1728, %v3701, %v3703
        %v3705 = vrot.slane %v3675, 1
        %v3706 = vrot.slane %v3676, 1
        %v3707 = vsel %vm1728, %v3705, %v3706
        %v3708 = vrot.slane %v3677, 1
        %v3709 = vsel %vm1728, %v3706, %v3708
        %v3718 = vadd.f32 %v3642, %v3692
        %v3719 = vadd.f32 %v3643, %v3694
        %v3720 = vadd.f32 %v3644, %v3697
        %v3721 = vadd.f32 %v3645, %v3699
        %v3722 = vadd.f32 %v3646, %v3702
        %v3723 = vadd.f32 %v3647, %v3704
        %v3724 = vadd.f32 %v3648, %v3707
        %v3725 = vadd.f32 %v3649, %v3709
        %3726 = vset.pattern.permute.xlu0 4
        %3727 = vperm.xlu0 %3726, %v3477
        %v3728 = vpop.permute.xlu0 %3727
        %3730 = vset.pattern.permute.xlu0 4
        %3731 = vperm.xlu0 %3730, %v3481
        %v3732 = vpop.permute.xlu0 %3731
        %3734 = vset.pattern.permute.xlu0 4
        %3735 = vperm.xlu0 %3734, %v3485
        %v3736 = vpop.permute.xlu0 %3735
        %3738 = vset.pattern.permute.xlu0 4
        %3739 = vperm.xlu0 %3738, %v3489
        %v3740 = vpop.permute.xlu0 %3739
        %v3742 = vmul.f32 %v3186, %v3728
        %v3743 = vmul.f32 %v3191, %v3728
        %v3744 = vmul.f32 %v3196, %v3728
        %v3745 = vmul.f32 %v3275, %v3732
        %v3746 = vmul.f32 %v3280, %v3732
        %v3747 = vmul.f32 %v3285, %v3732
        %v3748 = vmul.f32 %v3364, %v3736
        %v3749 = vmul.f32 %v3369, %v3736
        %v3750 = vmul.f32 %v3374, %v3736
        %v3751 = vmul.f32 %v3453, %v3740
        %v3752 = vmul.f32 %v3458, %v3740
        %v3753 = vmul.f32 %v3463, %v3740
        %v3766 = vrot.slane %v3742, 1
        %v3767 = vrot.slane %v3743, 1
        %v3768 = vsel %vm1728, %v3766, %v3767
        %v3769 = vrot.slane %v3744, 1
        %v3770 = vsel %vm1728, %v3767, %v3769
        %v3771 = vrot.slane %v3745, 1
        %v3772 = vrot.slane %v3746, 1
        %v3773 = vsel %vm1728, %v3771, %v3772
        %v3774 = vrot.slane %v3747, 1
        %v3775 = vsel %vm1728, %v3772, %v3774
        %v3776 = vrot.slane %v3748, 1
        %v3777 = vrot.slane %v3749, 1
        %v3778 = vsel %vm1728, %v3776, %v3777
        %v3779 = vrot.slane %v3750, 1
        %v3780 = vsel %vm1728, %v3777, %v3779
        %v3781 = vrot.slane %v3751, 1
        %v3782 = vrot.slane %v3752, 1
        %v3783 = vsel %vm1728, %v3781, %v3782
        %v3784 = vrot.slane %v3753, 1
        %v3785 = vsel %vm1728, %v3782, %v3784
        %3786 = vrot.lane.b32.xlu0 %v3768, 127
        %v3787 = vpop.permute.xlu0 %3786
        %3788 = vrot.lane.b32.xlu0 %v3770, 127
        %v3789 = vpop.permute.xlu0 %3788
        %3790 = vrot.lane.b32.xlu0 %v3773, 127
        %v3791 = vpop.permute.xlu0 %3790
        %3792 = vrot.lane.b32.xlu0 %v3775, 127
        %v3793 = vpop.permute.xlu0 %3792
        %3794 = vrot.lane.b32.xlu0 %v3778, 127
        %v3795 = vpop.permute.xlu0 %3794
        %3796 = vrot.lane.b32.xlu0 %v3780, 127
        %v3797 = vpop.permute.xlu0 %3796
        %3798 = vrot.lane.b32.xlu0 %v3783, 127
        %v3799 = vpop.permute.xlu0 %3798
        %3800 = vrot.lane.b32.xlu0 %v3785, 127
        %v3801 = vpop.permute.xlu0 %3800
        %v3810 = vadd.f32 %v3718, %v3787
        %v3811 = vadd.f32 %v3719, %v3789
        %v3812 = vadd.f32 %v3720, %v3791
        %v3813 = vadd.f32 %v3721, %v3793
        %v3814 = vadd.f32 %v3722, %v3795
        %v3815 = vadd.f32 %v3723, %v3797
        %v3816 = vadd.f32 %v3724, %v3799
        %v3817 = vadd.f32 %v3725, %v3801
        %3818 = vset.pattern.permute.xlu0 5
        %3819 = vperm.xlu0 %3818, %v3477
        %v3820 = vpop.permute.xlu0 %3819
        %3822 = vset.pattern.permute.xlu0 5
        %3823 = vperm.xlu0 %3822, %v3481
        %v3824 = vpop.permute.xlu0 %3823
        %3826 = vset.pattern.permute.xlu0 5
        %3827 = vperm.xlu0 %3826, %v3485
        %v3828 = vpop.permute.xlu0 %3827
        %3830 = vset.pattern.permute.xlu0 5
        %3831 = vperm.xlu0 %3830, %v3489
        %v3832 = vpop.permute.xlu0 %3831
        %v3834 = vmul.f32 %v3186, %v3820
        %v3835 = vmul.f32 %v3191, %v3820
        %v3836 = vmul.f32 %v3196, %v3820
        %v3837 = vmul.f32 %v3275, %v3824
        %v3838 = vmul.f32 %v3280, %v3824
        %v3839 = vmul.f32 %v3285, %v3824
        %v3840 = vmul.f32 %v3364, %v3828
        %v3841 = vmul.f32 %v3369, %v3828
        %v3842 = vmul.f32 %v3374, %v3828
        %v3843 = vmul.f32 %v3453, %v3832
        %v3844 = vmul.f32 %v3458, %v3832
        %v3845 = vmul.f32 %v3463, %v3832
        %v3858 = vrot.slane %v3834, 1
        %v3859 = vrot.slane %v3835, 1
        %v3860 = vsel %vm1728, %v3858, %v3859
        %v3861 = vrot.slane %v3836, 1
        %v3862 = vsel %vm1728, %v3859, %v3861
        %v3863 = vrot.slane %v3837, 1
        %v3864 = vrot.slane %v3838, 1
        %v3865 = vsel %vm1728, %v3863, %v3864
        %v3866 = vrot.slane %v3839, 1
        %v3867 = vsel %vm1728, %v3864, %v3866
        %v3868 = vrot.slane %v3840, 1
        %v3869 = vrot.slane %v3841, 1
        %v3870 = vsel %vm1728, %v3868, %v3869
        %v3871 = vrot.slane %v3842, 1
        %v3872 = vsel %vm1728, %v3869, %v3871
        %v3873 = vrot.slane %v3843, 1
        %v3874 = vrot.slane %v3844, 1
        %v3875 = vsel %vm1728, %v3873, %v3874
        %v3876 = vrot.slane %v3845, 1
        %v3877 = vsel %vm1728, %v3874, %v3876
        %3878 = vrot.lane.b32.xlu0 %v3860, 126
        %v3879 = vpop.permute.xlu0 %3878
        %3880 = vrot.lane.b32.xlu0 %v3862, 126
        %v3881 = vpop.permute.xlu0 %3880
        %3882 = vrot.lane.b32.xlu0 %v3865, 126
        %v3883 = vpop.permute.xlu0 %3882
        %3884 = vrot.lane.b32.xlu0 %v3867, 126
        %v3885 = vpop.permute.xlu0 %3884
        %3886 = vrot.lane.b32.xlu0 %v3870, 126
        %v3887 = vpop.permute.xlu0 %3886
        %3888 = vrot.lane.b32.xlu0 %v3872, 126
        %v3889 = vpop.permute.xlu0 %3888
        %3890 = vrot.lane.b32.xlu0 %v3875, 126
        %v3891 = vpop.permute.xlu0 %3890
        %3892 = vrot.lane.b32.xlu0 %v3877, 126
        %v3893 = vpop.permute.xlu0 %3892
        %v3902 = vadd.f32 %v3810, %v3879
        %v3903 = vadd.f32 %v3811, %v3881
        %v3904 = vadd.f32 %v3812, %v3883
        %v3905 = vadd.f32 %v3813, %v3885
        %v3906 = vadd.f32 %v3814, %v3887
        %v3907 = vadd.f32 %v3815, %v3889
        %v3908 = vadd.f32 %v3816, %v3891
        %v3909 = vadd.f32 %v3817, %v3893
        %3910 = vset.pattern.permute.xlu0 6
        %3911 = vperm.xlu0 %3910, %v3477
        %v3912 = vpop.permute.xlu0 %3911
        %3914 = vset.pattern.permute.xlu0 6
        %3915 = vperm.xlu0 %3914, %v3481
        %v3916 = vpop.permute.xlu0 %3915
        %3918 = vset.pattern.permute.xlu0 6
        %3919 = vperm.xlu0 %3918, %v3485
        %v3920 = vpop.permute.xlu0 %3919
        %3922 = vset.pattern.permute.xlu0 6
        %3923 = vperm.xlu0 %3922, %v3489
        %v3924 = vpop.permute.xlu0 %3923
        %v3926 = vmul.f32 %v3186, %v3912
        %v3927 = vmul.f32 %v3191, %v3912
        %v3928 = vmul.f32 %v3196, %v3912
        %v3929 = vmul.f32 %v3275, %v3916
        %v3930 = vmul.f32 %v3280, %v3916
        %v3931 = vmul.f32 %v3285, %v3916
        %v3932 = vmul.f32 %v3364, %v3920
        %v3933 = vmul.f32 %v3369, %v3920
        %v3934 = vmul.f32 %v3374, %v3920
        %v3935 = vmul.f32 %v3453, %v3924
        %v3936 = vmul.f32 %v3458, %v3924
        %v3937 = vmul.f32 %v3463, %v3924
        %v3950 = vrot.slane %v3926, 2
        %v3951 = vrot.slane %v3927, 2
        %v3952 = vsel %vm1989, %v3950, %v3951
        %v3953 = vrot.slane %v3928, 2
        %v3954 = vsel %vm1989, %v3951, %v3953
        %v3955 = vrot.slane %v3929, 2
        %v3956 = vrot.slane %v3930, 2
        %v3957 = vsel %vm1989, %v3955, %v3956
        %v3958 = vrot.slane %v3931, 2
        %v3959 = vsel %vm1989, %v3956, %v3958
        %v3960 = vrot.slane %v3932, 2
        %v3961 = vrot.slane %v3933, 2
        %v3962 = vsel %vm1989, %v3960, %v3961
        %v3963 = vrot.slane %v3934, 2
        %v3964 = vsel %vm1989, %v3961, %v3963
        %v3965 = vrot.slane %v3935, 2
        %v3966 = vrot.slane %v3936, 2
        %v3967 = vsel %vm1989, %v3965, %v3966
        %v3968 = vrot.slane %v3937, 2
        %v3969 = vsel %vm1989, %v3966, %v3968
        %v3978 = vadd.f32 %v3902, %v3952
        %v3979 = vadd.f32 %v3903, %v3954
        %v3980 = vadd.f32 %v3904, %v3957
        %v3981 = vadd.f32 %v3905, %v3959
        %v3982 = vadd.f32 %v3906, %v3962
        %v3983 = vadd.f32 %v3907, %v3964
        %v3984 = vadd.f32 %v3908, %v3967
        %v3985 = vadd.f32 %v3909, %v3969
        %3986 = vset.pattern.permute.xlu0 7
        %3987 = vperm.xlu0 %3986, %v3477
        %v3988 = vpop.permute.xlu0 %3987
        %3990 = vset.pattern.permute.xlu0 7
        %3991 = vperm.xlu0 %3990, %v3481
        %v3992 = vpop.permute.xlu0 %3991
        %3994 = vset.pattern.permute.xlu0 7
        %3995 = vperm.xlu0 %3994, %v3485
        %v3996 = vpop.permute.xlu0 %3995
        %3998 = vset.pattern.permute.xlu0 7
        %3999 = vperm.xlu0 %3998, %v3489
        %v4000 = vpop.permute.xlu0 %3999
        %v4002 = vmul.f32 %v3186, %v3988
        %v4003 = vmul.f32 %v3191, %v3988
        %v4004 = vmul.f32 %v3196, %v3988
        %v4005 = vmul.f32 %v3275, %v3992
        %v4006 = vmul.f32 %v3280, %v3992
        %v4007 = vmul.f32 %v3285, %v3992
        %v4008 = vmul.f32 %v3364, %v3996
        %v4009 = vmul.f32 %v3369, %v3996
        %v4010 = vmul.f32 %v3374, %v3996
        %v4011 = vmul.f32 %v3453, %v4000
        %v4012 = vmul.f32 %v3458, %v4000
        %v4013 = vmul.f32 %v3463, %v4000
        %v4026 = vrot.slane %v4002, 2
        %v4027 = vrot.slane %v4003, 2
        %v4028 = vsel %vm1989, %v4026, %v4027
        %v4029 = vrot.slane %v4004, 2
        %v4030 = vsel %vm1989, %v4027, %v4029
        %v4031 = vrot.slane %v4005, 2
        %v4032 = vrot.slane %v4006, 2
        %v4033 = vsel %vm1989, %v4031, %v4032
        %v4034 = vrot.slane %v4007, 2
        %v4035 = vsel %vm1989, %v4032, %v4034
        %v4036 = vrot.slane %v4008, 2
        %v4037 = vrot.slane %v4009, 2
        %v4038 = vsel %vm1989, %v4036, %v4037
        %v4039 = vrot.slane %v4010, 2
        %v4040 = vsel %vm1989, %v4037, %v4039
        %v4041 = vrot.slane %v4011, 2
        %v4042 = vrot.slane %v4012, 2
        %v4043 = vsel %vm1989, %v4041, %v4042
        %v4044 = vrot.slane %v4013, 2
        %v4045 = vsel %vm1989, %v4042, %v4044
        %4046 = vrot.lane.b32.xlu0 %v4028, 127
        %v4047 = vpop.permute.xlu0 %4046
        %4048 = vrot.lane.b32.xlu0 %v4030, 127
        %v4049 = vpop.permute.xlu0 %4048
        %4050 = vrot.lane.b32.xlu0 %v4033, 127
        %v4051 = vpop.permute.xlu0 %4050
        %4052 = vrot.lane.b32.xlu0 %v4035, 127
        %v4053 = vpop.permute.xlu0 %4052
        %4054 = vrot.lane.b32.xlu0 %v4038, 127
        %v4055 = vpop.permute.xlu0 %4054
        %4056 = vrot.lane.b32.xlu0 %v4040, 127
        %v4057 = vpop.permute.xlu0 %4056
        %4058 = vrot.lane.b32.xlu0 %v4043, 127
        %v4059 = vpop.permute.xlu0 %4058
        %4060 = vrot.lane.b32.xlu0 %v4045, 127
        %v4061 = vpop.permute.xlu0 %4060
        %v4070 = vadd.f32 %v3978, %v4047
        %v4071 = vadd.f32 %v3979, %v4049
        %v4072 = vadd.f32 %v3980, %v4051
        %v4073 = vadd.f32 %v3981, %v4053
        %v4074 = vadd.f32 %v3982, %v4055
        %v4075 = vadd.f32 %v3983, %v4057
        %v4076 = vadd.f32 %v3984, %v4059
        %v4077 = vadd.f32 %v3985, %v4061
        %4078 = vset.pattern.permute.xlu0 8
        %4079 = vperm.xlu0 %4078, %v3477
        %v4080 = vpop.permute.xlu0 %4079
        %4082 = vset.pattern.permute.xlu0 8
        %4083 = vperm.xlu0 %4082, %v3481
        %v4084 = vpop.permute.xlu0 %4083
        %4086 = vset.pattern.permute.xlu0 8
        %4087 = vperm.xlu0 %4086, %v3485
        %v4088 = vpop.permute.xlu0 %4087
        %4090 = vset.pattern.permute.xlu0 8
        %4091 = vperm.xlu0 %4090, %v3489
        %v4092 = vpop.permute.xlu0 %4091
        %v4094 = vmul.f32 %v3186, %v4080
        %v4095 = vmul.f32 %v3191, %v4080
        %v4096 = vmul.f32 %v3196, %v4080
        %v4097 = vmul.f32 %v3275, %v4084
        %v4098 = vmul.f32 %v3280, %v4084
        %v4099 = vmul.f32 %v3285, %v4084
        %v4100 = vmul.f32 %v3364, %v4088
        %v4101 = vmul.f32 %v3369, %v4088
        %v4102 = vmul.f32 %v3374, %v4088
        %v4103 = vmul.f32 %v3453, %v4092
        %v4104 = vmul.f32 %v3458, %v4092
        %v4105 = vmul.f32 %v3463, %v4092
        %v4118 = vrot.slane %v4094, 2
        %v4119 = vrot.slane %v4095, 2
        %v4120 = vsel %vm1989, %v4118, %v4119
        %v4121 = vrot.slane %v4096, 2
        %v4122 = vsel %vm1989, %v4119, %v4121
        %v4123 = vrot.slane %v4097, 2
        %v4124 = vrot.slane %v4098, 2
        %v4125 = vsel %vm1989, %v4123, %v4124
        %v4126 = vrot.slane %v4099, 2
        %v4127 = vsel %vm1989, %v4124, %v4126
        %v4128 = vrot.slane %v4100, 2
        %v4129 = vrot.slane %v4101, 2
        %v4130 = vsel %vm1989, %v4128, %v4129
        %v4131 = vrot.slane %v4102, 2
        %v4132 = vsel %vm1989, %v4129, %v4131
        %v4133 = vrot.slane %v4103, 2
        %v4134 = vrot.slane %v4104, 2
        %v4135 = vsel %vm1989, %v4133, %v4134
        %v4136 = vrot.slane %v4105, 2
        %v4137 = vsel %vm1989, %v4134, %v4136
        %4138 = vrot.lane.b32.xlu0 %v4120, 126
        %v4139 = vpop.permute.xlu0 %4138
        %4140 = vrot.lane.b32.xlu0 %v4122, 126
        %v4141 = vpop.permute.xlu0 %4140
        %4142 = vrot.lane.b32.xlu0 %v4125, 126
        %v4143 = vpop.permute.xlu0 %4142
        %4144 = vrot.lane.b32.xlu0 %v4127, 126
        %v4145 = vpop.permute.xlu0 %4144
        %4146 = vrot.lane.b32.xlu0 %v4130, 126
        %v4147 = vpop.permute.xlu0 %4146
        %4148 = vrot.lane.b32.xlu0 %v4132, 126
        %v4149 = vpop.permute.xlu0 %4148
        %4150 = vrot.lane.b32.xlu0 %v4135, 126
        %v4151 = vpop.permute.xlu0 %4150
        %4152 = vrot.lane.b32.xlu0 %v4137, 126
        %v4153 = vpop.permute.xlu0 %4152
        %v4162 = vadd.f32 %v4070, %v4139
        %v4163 = vadd.f32 %v4071, %v4141
        %v4164 = vadd.f32 %v4072, %v4143
        %v4165 = vadd.f32 %v4073, %v4145
        %v4166 = vadd.f32 %v4074, %v4147
        %v4167 = vadd.f32 %v4075, %v4149
        %v4168 = vadd.f32 %v4076, %v4151
        %v4169 = vadd.f32 %v4077, %v4153
        %v4170 = vld [vmem:[%s6] sm:$0x1]
        %v4171 = vld [vmem:[%s6 + $0x1] sm:$0x1]
        %v4172 = vld [vmem:[%s6 + $0x2] sm:$0x1]
        %v4173 = vld [vmem:[%s6 + $0x3] sm:$0x1]
        %v4178 = vlaneseq
        %v4179 = vshrl.u32 %v4178, 7
        %v4180 = vsub.s32 0, %v4179
        %v4181 = vrot.slane %v4170, %v4180
        %v4182 = vlaneseq
        %v4183 = vshrl.u32 %v4182, 7
        %v4184 = vsub.s32 0, %v4183
        %v4185 = vrot.slane %v4171, %v4184
        %v4186 = vlaneseq
        %v4187 = vshrl.u32 %v4186, 7
        %v4188 = vsub.s32 0, %v4187
        %v4189 = vrot.slane %v4172, %v4188
        %v4190 = vlaneseq
        %v4191 = vshrl.u32 %v4190, 7
        %v4192 = vsub.s32 0, %v4191
        %v4193 = vrot.slane %v4173, %v4192
        %4194 = vset.pattern.permute.xlu0 0
        %4195 = vperm.xlu0 %4194, %v4181
        %v4196 = vpop.permute.xlu0 %4195
        %4198 = vset.pattern.permute.xlu0 0
        %4199 = vperm.xlu0 %4198, %v4185
        %v4200 = vpop.permute.xlu0 %4199
        %4202 = vset.pattern.permute.xlu0 0
        %4203 = vperm.xlu0 %4202, %v4189
        %v4204 = vpop.permute.xlu0 %4203
        %4206 = vset.pattern.permute.xlu0 0
        %4207 = vperm.xlu0 %4206, %v4193
        %v4208 = vpop.permute.xlu0 %4207
        %v4210 = vadd.f32 %v4162, %v4196
        %v4211 = vadd.f32 %v4163, %v4196
        %v4212 = vadd.f32 %v4164, %v4200
        %v4213 = vadd.f32 %v4165, %v4200
        %v4214 = vadd.f32 %v4166, %v4204
        %v4215 = vadd.f32 %v4167, %v4204
        %v4216 = vadd.f32 %v4168, %v4208
        %v4217 = vadd.f32 %v4169, %v4208
        %v4218 = vmax.f32 %v4210, 0.0
        %v4219 = vmax.f32 %v4211, 0.0
        %v4220 = vmax.f32 %v4212, 0.0
        %v4221 = vmax.f32 %v4213, 0.0
        %v4222 = vmax.f32 %v4214, 0.0
        %v4223 = vmax.f32 %v4215, 0.0
        %v4224 = vmax.f32 %v4216, 0.0
        %v4225 = vmax.f32 %v4217, 0.0
        %4226 = vst.msk [vmem:[%s350] sm:$0xff] %vm373, %v2782
        %4227 = vst.msk [vmem:[%s350 + $0x8] sm:$0xff] %vm373, %v2783
        %4228 = vst.msk [vmem:[%s350 + $0x10] sm:$0xff] %vm373, %v2784
        %4229 = vst.msk [vmem:[%s350 + $0x18] sm:$0xff] %vm373, %v2785
        %4230 = vst.msk [vmem:[%s350 + $0x20] sm:$0xff] %vm373, %v2786
        %4231 = vst.msk [vmem:[%s350 + $0x28] sm:$0xff] %vm373, %v2787
        %4232 = vst.msk [vmem:[%s350 + $0x30] sm:$0xff] %vm373, %v2788
        %4233 = vst.msk [vmem:[%s350 + $0x38] sm:$0xff] %vm373, %v2789
        %s4234 = scalar_lea.vmem %s350, 64 [#allocation5]
        %4235 = vst.msk [vmem:[%s4234] sm:$0xff] %vm373, %v4218
        %4236 = vst.msk [vmem:[%s4234 + $0x8] sm:$0xff] %vm373, %v4219
        %4237 = vst.msk [vmem:[%s4234 + $0x10] sm:$0xff] %vm373, %v4220
        %4238 = vst.msk [vmem:[%s4234 + $0x18] sm:$0xff] %vm373, %v4221
        %4239 = vst.msk [vmem:[%s4234 + $0x20] sm:$0xff] %vm373, %v4222
        %4240 = vst.msk [vmem:[%s4234 + $0x28] sm:$0xff] %vm373, %v4223
        %4241 = vst.msk [vmem:[%s4234 + $0x30] sm:$0xff] %vm373, %v4224
        %4242 = vst.msk [vmem:[%s4234 + $0x38] sm:$0xff] %vm373, %v4225
        %s4243 = sand.u32 %s228, 1
        %s4244 = scalar_lea.sflag [#allocation4], %s4243
        %s4245 = sand.u32 %s228, 1
        %s4246 = smul.addr %s4245, 128
        %s4247 = scalar_lea.vmem [#allocation5], %s4246
        // Predicated region
        $region61: #{tpu_custom_call.1} parent=55 // pred_check
          %p4248 = pneg %p238
        $region62: #{tpu_custom_call.1} parent=55 // pred_check_branch
          %4250 = sbr.rel (%p4248) target = $region64
        $region63: #{tpu_custom_call.1} parent=55 // pred_region
          %s4252 = ssub.s32 2048, 2048
          %4253 = vsyncadd %s4244, %s4252
          %s4254 = smul.addr %s26, 16
          %s4255 = smul.addr %s4254, 128
          %s4256 = scalar_lea.hbm %s9, %s4255
          %s4257 = sshll.u32 %s4247, 4
          %s4258 = int_to_ptr.vmem [resolvable:$true] %s4257
          %4263 = dma.vmem_to_hbm [thread:$0]  %s4258, 2048, %s4256, %s4244, 128, 128, 8
        $region64: #{tpu_custom_call.1} parent=55 // pred_fallthru
          _
      $region56: #{tpu_custom_call.1} parent=5 // pred_fallthru
        _
      %p4264 = scmp.le.s32.totalorder 2, %s21
      // Predicated region
      $region65: #{tpu_custom_call.1} parent=5 // pred_check
        %p4265 = pneg %p4264
      $region66: #{tpu_custom_call.1} parent=5 // pred_check_branch
        %4267 = sbr.rel (%p4265) target = $region68
      $region67: #{tpu_custom_call.1} parent=5 // pred_region
        %s4268 = ssub.s32 %s21, 2
        // Predicated region
        $region69: #{tpu_custom_call.1} parent=67 // pred_check
          %p4269 = pneg %p244
        $region70: #{tpu_custom_call.1} parent=67 // pred_check_branch
          %4271 = sbr.rel (%p4269) target = $region72
        $region71: #{tpu_custom_call.1} parent=67 // pred_region
          %s4272 = sand.u32 %s229, 1
          %s4273 = scalar_lea.sflag [#allocation4], %s4272
          %s4274 = sand.u32 %s229, 1
          %s4275 = smul.addr %s4274, 128
          %s4276 = scalar_lea.vmem [#allocation5], %s4275
          %4277 = dma.done %s4273, 2048
        $region72: #{tpu_custom_call.1} parent=67 // pred_fallthru
          _
      $region68: #{tpu_custom_call.1} parent=5 // pred_fallthru
        _
    $region6: #{tpu_custom_call.1} parent=1 // loop_footer
      %s25 = sadd.s32 1, %s21
    $region7: #{tpu_custom_call.1} parent=1 // loop_footer_branch
      %20 = sbr.rel target = $region3
    $region8: #{tpu_custom_call.1} parent=1 // loop_exit
      _
    %4278 = vsyncpa [#allocation3], 1
    %s4279 = scalar_lea.sflag [#allocation3], 1
    %4280 = vsyncpa %s4279, 1
    %4281 = vsyncpa [#allocation4], 1
    %s4282 = scalar_lea.sflag [#allocation4], 1
    %4283 = vsyncpa %s4282, 1

</llo_original>
